<compile_context>
chip_gen: v6e
topology: v6e:2x2x1
jax: 0.10.0
libtpu: 0.0.40
codegen_flags: <defaults>
</compile_context>

<pallas_src>
import jax
import jax.numpy as jnp
import numpy as np
from jax.experimental import pallas as pl
from jax.experimental.pallas import tpu as pltpu


def _round_up(x, m):
    return ((x + m - 1) // m) * m


def _pick_h_tile(H1, W1, target_rows=512):
    """Largest TH dividing H1 with TM = TH*W1 a multiple of 8 and <= target."""
    cands = [t for t in range(1, H1 + 1) if H1 % t == 0 and (t * W1) % 8 == 0]
    under = [t for t in cands if t * W1 <= target_rows]
    if under:
        return max(under)
    if cands:
        return min(cands)
    return H1  # TM == M1 (full dim) -> still a legal block shape


def _make_kernel(KH, KW, TH, W1, W_pad, C_in_p, stride):
    TM = TH * W1
    span_h = (TH - 1) * stride + KH  # padded-input rows needed by this tile

    def kernel(x_ref, w_ref, b_ref, out_ref):
        # Rows of the padded image needed by this output-row tile.
        r0 = pl.multiple_of(pl.program_id(1) * (TH * stride), TH * stride)
        xin = x_ref[0, pl.ds(r0, span_h), :]          # (span_h, W_pad*C_in_p)

        # One im2col pass: gather the KH*KW shifted windows into a single
        # (TM, KH*KW*C_in_p) LHS; column order (kh, kw, c) matches w_ref rows.
        parts = []
        for kh in range(KH):
            if stride == 1:
                rows = xin[kh:kh + TH, :]
            else:
                rows = xin[kh:kh + (TH - 1) * stride + 1:stride, :]
            rows = rows.reshape(TH, W_pad, C_in_p)
            for kw in range(KW):
                if stride == 1:
                    parts.append(rows[:, kw:kw + W1, :])
                else:
                    parts.append(rows[:, kw:kw + (W1 - 1) * stride + 1:stride, :])
        lhs = jnp.concatenate(parts, axis=-1).reshape(TM, KH * KW * C_in_p)

        # Single fused MXU matmul (f32 accumulation) + bias add.
        acc = jnp.dot(lhs, w_ref[...], preferred_element_type=jnp.float32)
        out_ref[0] = (acc + b_ref[...]).astype(out_ref.dtype)

    return kernel


def wn_conv2d(x, v, g, b, *, stride=1, padding=1):
    """x: (N, C_in, H, W) NCHW; v: (C_out, C_in, KH, KW); g: (C_out,1,1,1); b: (C_out,)."""
    N, C_in, H, W = x.shape
    C_out, _, KH, KW = v.shape
    H_pad, W_pad = H + 2 * padding, W + 2 * padding
    H1 = (H_pad - KH) // stride + 1
    W1 = (W_pad - KW) // stride + 1

    LANE, SUB = 128, 8
    C_out_p = _round_up(C_out, LANE)     # lane-dense output / MXU N dimension
    C_in_p = _round_up(C_in, SUB)        # per-tap contraction granule
    K = KH * KW * C_in_p                 # fused contraction depth

    TH = _pick_h_tile(H1, W1)
    TM = TH * W1
    num_h = H1 // TH

    # ---- weight norm hoisted out of the kernel (exact sqrt-then-divide) ----
    v32 = v.astype(jnp.float32)
    norm = jnp.sqrt(jnp.sum(v32 * v32, axis=(1, 2, 3), keepdims=True))
    w = g.astype(jnp.float32) * v32 / norm                       # (C_out, C_in, KH, KW)

    # OIHW -> (KH*KW, C_in_p, C_out_p) -> (K, C_out_p): one ready (K, N) RHS.
    w_t = jnp.transpose(w, (2, 3, 1, 0)).reshape(KH * KW, C_in, C_out)
    w_t = jnp.pad(w_t, ((0, 0), (0, C_in_p - C_in), (0, C_out_p - C_out)))
    w_mat = w_t.reshape(K, C_out_p).astype(x.dtype)
    b_mat = jnp.pad(b.reshape(1, C_out).astype(jnp.float32),
                    ((0, 0), (0, C_out_p - C_out)))

    # ---- lane-dense padded input slab: (N, H_pad, W_pad*C_in_p) ----
    x_nhwc = jnp.transpose(x, (0, 2, 3, 1))
    x_nhwc = jnp.pad(x_nhwc, ((0, 0), (padding, padding),
                              (padding, padding), (0, C_in_p - C_in)))
    WC = W_pad * C_in_p
    x_flat = x_nhwc.reshape(N, H_pad, WC)

    # ---- explicit scoped-VMEM budget (tiles are double-buffered) ----
    def tile_bytes(r, c, itemsize=4):
        return _round_up(max(r, 1), SUB) * _round_up(max(c, 1), LANE) * itemsize

    ws = 2 * (tile_bytes(H_pad, WC) + tile_bytes(K, C_out_p)
              + tile_bytes(1, C_out_p) + tile_bytes(TM, C_out_p))
    ws += 4 * tile_bytes(TM, K)          # im2col LHS + relayout temporaries
    vmem_limit = int(min(max(ws + (8 << 20), 32 << 20), 64 << 20))

    kernel = _make_kernel(KH, KW, TH, W1, W_pad, C_in_p, stride)

    out = pl.pallas_call(
        kernel,
        out_shape=jax.ShapeDtypeStruct((N, H1 * W1, C_out_p), x.dtype),
        grid_spec=pltpu.PrefetchScalarGridSpec(
            num_scalar_prefetch=0,
            grid=(N, num_h),
            in_specs=[
                # whole lane-dense padded image; block index fixed across h, so
                # Pallas keeps it resident instead of re-DMAing per H-tile.
                pl.BlockSpec((1, H_pad, WC), lambda n, h: (n, 0, 0)),
                # fused-weight RHS and bias, constant across the grid
                pl.BlockSpec((K, C_out_p), lambda n, h: (0, 0)),
                pl.BlockSpec((1, C_out_p), lambda n, h: (0, 0)),
            ],
            out_specs=pl.BlockSpec((1, TM, C_out_p), lambda n, h: (n, h, 0)),
        ),
        compiler_params=pltpu.CompilerParams(
            dimension_semantics=("parallel", "parallel"),
            vmem_limit_bytes=vmem_limit),
    )(x_flat, w_mat, b_mat)

    # Drop channel padding and transpose once to NCHW (module contract).
    out = out.reshape(N, H1, W1, C_out_p)[..., :C_out]
    return jnp.transpose(out, (0, 3, 1, 2))


def _reference(x, v, g, b, stride, padding):
    # Pure-JAX reference: weight_norm + conv2d (NCHW / OIHW).
    norm = jnp.sqrt(jnp.sum(v * v, axis=(1, 2, 3), keepdims=True))
    w = g * v / norm
    out = jax.lax.conv_general_dilated(
        x, w, window_strides=(stride, stride),
        padding=((padding, padding), (padding, padding)),
        dimension_numbers=("NCHW", "OIHW", "NCHW"))
    return out + b.reshape(1, -1, 1, 1)


if __name__ == "__main__":
    # WNConv2d(in_channels=4, out_channels=8, kernel_size=3, stride=1, padding=1)
    N, C_in, H, W = 2, 4, 16, 16
    C_out, KH, KW = 8, 3, 3
    stride, padding = 1, 1

    key = jax.random.PRNGKey(0)
    kx, kv, kg, kb = jax.random.split(key, 4)
    x = jax.random.normal(kx, (N, C_in, H, W), dtype=jnp.float32)
    v = jax.random.normal(kv, (C_out, C_in, KH, KW), dtype=jnp.float32) * 0.1  # weight_v
    g = jax.random.uniform(kg, (C_out, 1, 1, 1), dtype=jnp.float32,
                           minval=0.5, maxval=1.5)                             # weight_g
    b = jax.random.normal(kb, (C_out,), dtype=jnp.float32) * 0.1               # bias

    out = jax.block_until_ready(wn_conv2d(x, v, g, b, stride=stride, padding=padding))
    ref = jax.block_until_ready(_reference(x, v, g, b, stride, padding))
    np.testing.assert_allclose(np.asarray(out), np.asarray(ref), rtol=1e-4, atol=1e-4)

    print("KERNEL_OK")
</pallas_src>

<mosaic_0001>
module attributes {stable_mosaic.version = 11 : i64} {
  func.func @kernel(%arg0: i32, %arg1: i32, %arg2: memref<1x18x144xf32, #tpu.memory_space<vmem>>, %arg3: memref<72x128xf32, #tpu.memory_space<vmem>>, %arg4: memref<1x128xf32, #tpu.memory_space<vmem>>, %arg5: memref<1x256x128xf32, #tpu.memory_space<vmem>>) attributes {dimension_semantics = [#tpu.dimension_semantics<parallel>, #tpu.dimension_semantics<parallel>], iteration_bounds = array<i64: 2, 1>, scalar_prefetch = 0 : i64, scratch_operands = 0 : i64, tpu.core_type = #tpu.core_type<tc>, window_params = [{transform_indices = @transform_0, window_bounds = array<i64: 1, 18, 144>}, {pipeline_mode = #tpu.pipeline_mode<synchronous>, transform_indices = @transform_1, window_bounds = array<i64: 72, 128>}, {pipeline_mode = #tpu.pipeline_mode<synchronous>, transform_indices = @transform_2, window_bounds = array<i64: 1, 128>}, {transform_indices = @transform_3, window_bounds = array<i64: 1, 256, 128>}]} {
    %c16_i32 = arith.constant 16 : i32
    %0 = arith.muli %arg1, %c16_i32 : i32
    %1 = tpu.assume_multiple %0, 16 : i32
    %c0 = arith.constant 0 : index
    %2 = arith.index_cast %1 : i32 to index
    %c0_0 = arith.constant 0 : index
    %3 = vector.load %arg2[%c0, %2, %c0_0] : memref<1x18x144xf32, #tpu.memory_space<vmem>>, vector<1x18x144xf32>
    %4 = vector.shape_cast %3 : vector<1x18x144xf32> to vector<18x144xf32>
    %5 = vector.extract_strided_slice %4 {offsets = [0, 0], sizes = [16, 144], strides = [1, 1]} : vector<18x144xf32> to vector<16x144xf32>
    %6 = vector.shape_cast %5 : vector<16x144xf32> to vector<16x18x8xf32>
    %7 = vector.extract_strided_slice %6 {offsets = [0, 0, 0], sizes = [16, 16, 8], strides = [1, 1, 1]} : vector<16x18x8xf32> to vector<16x16x8xf32>
    %8 = vector.extract_strided_slice %6 {offsets = [0, 1, 0], sizes = [16, 16, 8], strides = [1, 1, 1]} : vector<16x18x8xf32> to vector<16x16x8xf32>
    %9 = vector.extract_strided_slice %6 {offsets = [0, 2, 0], sizes = [16, 16, 8], strides = [1, 1, 1]} : vector<16x18x8xf32> to vector<16x16x8xf32>
    %10 = vector.extract_strided_slice %4 {offsets = [1, 0], sizes = [16, 144], strides = [1, 1]} : vector<18x144xf32> to vector<16x144xf32>
    %11 = vector.shape_cast %10 : vector<16x144xf32> to vector<16x18x8xf32>
    %12 = vector.extract_strided_slice %11 {offsets = [0, 0, 0], sizes = [16, 16, 8], strides = [1, 1, 1]} : vector<16x18x8xf32> to vector<16x16x8xf32>
    %13 = vector.extract_strided_slice %11 {offsets = [0, 1, 0], sizes = [16, 16, 8], strides = [1, 1, 1]} : vector<16x18x8xf32> to vector<16x16x8xf32>
    %14 = vector.extract_strided_slice %11 {offsets = [0, 2, 0], sizes = [16, 16, 8], strides = [1, 1, 1]} : vector<16x18x8xf32> to vector<16x16x8xf32>
    %15 = vector.extract_strided_slice %4 {offsets = [2, 0], sizes = [16, 144], strides = [1, 1]} : vector<18x144xf32> to vector<16x144xf32>
    %16 = vector.shape_cast %15 : vector<16x144xf32> to vector<16x18x8xf32>
    %17 = vector.extract_strided_slice %16 {offsets = [0, 0, 0], sizes = [16, 16, 8], strides = [1, 1, 1]} : vector<16x18x8xf32> to vector<16x16x8xf32>
    %18 = vector.extract_strided_slice %16 {offsets = [0, 1, 0], sizes = [16, 16, 8], strides = [1, 1, 1]} : vector<16x18x8xf32> to vector<16x16x8xf32>
    %19 = vector.extract_strided_slice %16 {offsets = [0, 2, 0], sizes = [16, 16, 8], strides = [1, 1, 1]} : vector<16x18x8xf32> to vector<16x16x8xf32>
    %20 = tpu.concatenate %7, %8, %9, %12, %13, %14, %17, %18, %19 in 2 : vector<16x16x8xf32>, vector<16x16x8xf32>, vector<16x16x8xf32>, vector<16x16x8xf32>, vector<16x16x8xf32>, vector<16x16x8xf32>, vector<16x16x8xf32>, vector<16x16x8xf32>, vector<16x16x8xf32> -> vector<16x16x72xf32>
    %21 = vector.shape_cast %20 : vector<16x16x72xf32> to vector<256x72xf32>
    %c0_1 = arith.constant 0 : index
    %c0_2 = arith.constant 0 : index
    %22 = vector.load %arg3[%c0_1, %c0_2] : memref<72x128xf32, #tpu.memory_space<vmem>>, vector<72x128xf32>
    %cst = arith.constant dense<0.000000e+00> : vector<256x128xf32>
    %23 = tpu.matmul %21, %22, %cst {dimension_numbers = #tpu.dot_dimension_numbers<[1], [0], [0], [1], [0, 0, 1, 1], [], []>} : vector<256x72xf32>, vector<72x128xf32>, vector<256x128xf32> -> vector<256x128xf32>
    %c0_3 = arith.constant 0 : index
    %c0_4 = arith.constant 0 : index
    %24 = vector.load %arg4[%c0_3, %c0_4] : memref<1x128xf32, #tpu.memory_space<vmem>>, vector<1x128xf32>
    %25 = vector.broadcast %24 : vector<1x128xf32> to vector<256x128xf32>
    %26 = arith.addf %23, %25 : vector<256x128xf32>
    %c0_5 = arith.constant 0 : index
    %c0_6 = arith.constant 0 : index
    %c0_7 = arith.constant 0 : index
    %27 = vector.load %arg5[%c0_5, %c0_6, %c0_7] : memref<1x256x128xf32, #tpu.memory_space<vmem>>, vector<1x256x128xf32>
    %28 = vector.shape_cast %27 : vector<1x256x128xf32> to vector<256x128xf32>
    %29 = vector.shape_cast %26 : vector<256x128xf32> to vector<1x256x128xf32>
    tpu.vector_store %arg5[%c0_5, %c0_6, %c0_7], %29 {strides = array<i32>} : memref<1x256x128xf32, #tpu.memory_space<vmem>>, vector<1x256x128xf32>,
    return
  }
  func.func @transform_0(%arg0: i32, %arg1: i32) -> (i32, i32, i32) {
    %c0_i32 = arith.constant 0 : i32
    %c0_i32_0 = arith.constant 0 : i32
    %c0_i32_1 = arith.constant 0 : i32
    return %arg0, %c0_i32, %c0_i32_0 : i32, i32, i32
  }
  func.func @transform_1(%arg0: i32, %arg1: i32) -> (i32, i32) {
    %c0_i32 = arith.constant 0 : i32
    %c0_i32_0 = arith.constant 0 : i32
    %c0_i32_1 = arith.constant 0 : i32
    return %c0_i32, %c0_i32_0 : i32, i32
  }
  func.func @transform_2(%arg0: i32, %arg1: i32) -> (i32, i32) {
    %c0_i32 = arith.constant 0 : i32
    %c0_i32_0 = arith.constant 0 : i32
    %c0_i32_1 = arith.constant 0 : i32
    return %c0_i32, %c0_i32_0 : i32, i32
  }
  func.func @transform_3(%arg0: i32, %arg1: i32) -> (i32, i32, i32) {
    %c0_i32 = arith.constant 0 : i32
    %c0_i32_0 = arith.constant 0 : i32
    return %arg0, %arg1, %c0_i32 : i32, i32, i32
  }
}

</mosaic_0001>

<llo_original>
// kernel: tpu_custom_call.1
$region0: #{tpu_custom_call.1}
  #allocation0 [shape = 'u32[]', space=smem, size = 0x4, offset = 0x4, fixed_abs, tag = 'smem constant byte address 0x4 - core index']
  #allocation1 [shape = 'u32[144,128]{1,0:T(1,128)}', space=vmem, size = 0x12000, scoped, tag = 'internal scratch']
  %s0 = inlined_call_operand.vmem [shape: f32[2,18,144], index: 0, kind: input, shape index: {}]
  %s1 = inlined_call_operand.vmem [shape: f32[72,128], index: 1, kind: input, shape index: {}]
  %s2 = inlined_call_operand.vmem [shape: f32[1,128], index: 2, kind: input, shape index: {}]
  %s3 = inlined_call_operand.hbm [shape: f32[2,256,128], index: 3, kind: output, shape index: {}]
  %s4 = sld [smem:[#allocation0]]
  $region45: #{tpu_custom_call.1} parent=0
    _
  %s6 = ssub.s32 1, %s4
  %s7 = scalar_select 0, %s6, %s4
  $region1: #{tpu_custom_call.1} parent=0
    #allocation2 [shape = 'u8[262144]{0}', space=vmem, size = 0x40000, scoped, tag = 'output window, operand 0']
    #allocation3 [shape = 's32[2]{0}', space=sflag, size = 0x8, scoped, tag = 'scoped memory for tpu_custom_call.1']
    %8 = vsyncpa [#allocation3], 0
    %s9 = scalar_lea.sflag [#allocation3], 1
    %10 = vsyncpa %s9, 0
    loop: start=0, step=1, limit=4
    $region2: #{tpu_custom_call.1} parent=1 // loop_pre_header
      _
    $region3: #{tpu_custom_call.1} parent=1 // loop_header
      %s12 = sphi 0, %s16
      %p13 = scmp.ge.s32.totalorder %s12, 4
      %s19 = sphi 0, %s31
      %s20 = sphi 0, %s27
      %s21 = sphi 0, %s19
      %s22 = sphi 0, %s20
      %s23 = sphi 0, %s21
      %s24 = sphi 0, %s22
      %s34 = sphi 0, %s36
      %s37 = sphi 0, %s34
      %s38 = sphi 0, %s37
      %s54 = sphi 0, %s38
      %s58 = sphi 0, %s58
      %s60 = sphi 0, %s58
      %s61 = sphi 0, %s60
      %s75 = sphi 0, %s61
      %s79 = sphi 0, %s79
      %s81 = sphi 0, %s79
      %s82 = sphi 0, %s81
      %s96 = sphi 0, %s82
      %s104 = sphi 0, %s106
      %s107 = sphi 0, %s104
      %s108 = sphi 0, %s107
      %s124 = sphi 0, %s108
    $region4: #{tpu_custom_call.1} parent=1 // loop_header_branch
      %15 = sbr.rel (%p13) target = $region8
    $region5: #{tpu_custom_call.1} parent=1 // loop_body
      %s17 = ssub.s32 %s12, 1
      %s18 = ssub.s32 %s12, 2
      %s25 = sadd.s32 1, %s20
      %p26 = scmp.ge.s32.totalorder %s25, 1
      %s27 = scalar_select %p26, 0, %s25
      %s28 = sadd.s32 1, %s19
      %s29 = scalar_select %p26, %s28, %s19
      %p30 = scmp.ge.s32.totalorder %s29, 2
      %s31 = scalar_select %p30, 0, %s29
      %s32 = ssub.s32 %s19, %s31
      %p33 = scmp.eq.s32.totalorder %s32, 0
      %s35 = sadd.s32 %s34, 1
      %s36 = scalar_select %p33, %s34, %s35
      %p39 = pneg %p33
      %p40 = scmp.eq.s32.totalorder %s12, 1
      %p41 = por %p39, %p40
      %p42 = scmp.ne.s32.totalorder %s34, %s37
      %p43 = scmp.eq.s32.totalorder %s12, 0
      %p44 = por %p42, %p43
      %p45 = scmp.ne.s32.totalorder %s34, %s37
      %p46 = scmp.eq.s32.totalorder %s17, 1
      %p47 = por %p45, %p46
      %p48 = scmp.ne.s32.totalorder %s37, %s38
      %p49 = scmp.eq.s32.totalorder %s17, 0
      %p50 = por %p48, %p49
      %p51 = scmp.ne.s32.totalorder %s37, %s38
      %p52 = scmp.eq.s32.totalorder %s18, 1
      %p53 = por %p51, %p52
      %p55 = scmp.ne.s32.totalorder %s38, %s54
      %p56 = scmp.eq.s32.totalorder %s18, 0
      %p57 = por %p55, %p56
      %s59 = sadd.s32 %s58, 1
      %p62 = scmp.eq.s32.totalorder %s12, 1
      %p63 = scmp.ne.s32.totalorder %s58, %s60
      %p64 = scmp.eq.s32.totalorder %s12, 0
      %p65 = por %p63, %p64
      %p66 = scmp.ne.s32.totalorder %s58, %s60
      %p67 = scmp.eq.s32.totalorder %s17, 1
      %p68 = por %p66, %p67
      %p69 = scmp.ne.s32.totalorder %s60, %s61
      %p70 = scmp.eq.s32.totalorder %s17, 0
      %p71 = por %p69, %p70
      %p72 = scmp.ne.s32.totalorder %s60, %s61
      %p73 = scmp.eq.s32.totalorder %s18, 1
      %p74 = por %p72, %p73
      %p76 = scmp.ne.s32.totalorder %s61, %s75
      %p77 = scmp.eq.s32.totalorder %s18, 0
      %p78 = por %p76, %p77
      %s80 = sadd.s32 %s79, 1
      %p83 = scmp.eq.s32.totalorder %s12, 1
      %p84 = scmp.ne.s32.totalorder %s79, %s81
      %p85 = scmp.eq.s32.totalorder %s12, 0
      %p86 = por %p84, %p85
      %p87 = scmp.ne.s32.totalorder %s79, %s81
      %p88 = scmp.eq.s32.totalorder %s17, 1
      %p89 = por %p87, %p88
      %p90 = scmp.ne.s32.totalorder %s81, %s82
      %p91 = scmp.eq.s32.totalorder %s17, 0
      %p92 = por %p90, %p91
      %p93 = scmp.ne.s32.totalorder %s81, %s82
      %p94 = scmp.eq.s32.totalorder %s18, 1
      %p95 = por %p93, %p94
      %p97 = scmp.ne.s32.totalorder %s82, %s96
      %p98 = scmp.eq.s32.totalorder %s18, 0
      %p99 = por %p97, %p98
      %s100 = ssub.s32 %s19, %s31
      %s101 = ssub.s32 %s20, %s27
      %s102 = sor.u32 %s100, %s101
      %p103 = scmp.eq.s32.totalorder %s102, 0
      %s105 = sadd.s32 %s104, 1
      %s106 = scalar_select %p103, %s104, %s105
      %p109 = pneg %p103
      %p110 = scmp.eq.s32.totalorder %s12, 1
      %p111 = por %p109, %p110
      %p112 = scmp.ne.s32.totalorder %s104, %s107
      %p113 = scmp.eq.s32.totalorder %s12, 0
      %p114 = por %p112, %p113
      %p115 = scmp.ne.s32.totalorder %s104, %s107
      %p116 = scmp.eq.s32.totalorder %s17, 1
      %p117 = por %p115, %p116
      %p118 = scmp.ne.s32.totalorder %s107, %s108
      %p119 = scmp.eq.s32.totalorder %s17, 0
      %p120 = por %p118, %p119
      %p121 = scmp.ne.s32.totalorder %s107, %s108
      %p122 = scmp.eq.s32.totalorder %s18, 1
      %p123 = por %p121, %p122
      %p125 = scmp.ne.s32.totalorder %s108, %s124
      %p126 = scmp.eq.s32.totalorder %s18, 0
      %p127 = por %p125, %p126
      %p128 = scmp.le.s32.totalorder 1, %s12
      %p129 = scmp.lt.s32.totalorder %s12, 3
      %p130 = pnand %p128, %p129
      %p131 = pneg %p130
      // Predicated region
      $region9: #{tpu_custom_call.1} parent=5 // pred_check
        _
      $region10: #{tpu_custom_call.1} parent=5 // pred_check_branch
        %133 = sbr.rel (%p130) target = $region12
      $region11: #{tpu_custom_call.1} parent=5 // pred_region
        %s134 = ssub.s32 %s12, 1
        // Predicated region
        $region13: #{tpu_custom_call.1} parent=11 // pred_check
          %p135 = pneg %p71
        $region14: #{tpu_custom_call.1} parent=11 // pred_check_branch
          %137 = sbr.rel (%p135) target = $region16
        $region15: #{tpu_custom_call.1} parent=11 // pred_region
          _
        $region16: #{tpu_custom_call.1} parent=11 // pred_fallthru
          _
        // Predicated region
        $region17: #{tpu_custom_call.1} parent=11 // pred_check
          %p138 = pneg %p92
        $region18: #{tpu_custom_call.1} parent=11 // pred_check_branch
          %140 = sbr.rel (%p138) target = $region20
        $region19: #{tpu_custom_call.1} parent=11 // pred_region
          _
        $region20: #{tpu_custom_call.1} parent=11 // pred_fallthru
          _
      $region12: #{tpu_custom_call.1} parent=5 // pred_fallthru
        _
      %p141 = scmp.lt.s32.totalorder %s12, 2
      // Predicated region
      $region21: #{tpu_custom_call.1} parent=5 // pred_check
        %p142 = pneg %p141
      $region22: #{tpu_custom_call.1} parent=5 // pred_check_branch
        %144 = sbr.rel (%p142) target = $region24
      $region23: #{tpu_custom_call.1} parent=5 // pred_region
        // Predicated region
        $region25: #{tpu_custom_call.1} parent=23 // pred_check
          %p145 = pneg %p44
        $region26: #{tpu_custom_call.1} parent=23 // pred_check_branch
          %147 = sbr.rel (%p145) target = $region28
        $region27: #{tpu_custom_call.1} parent=23 // pred_region
          %p148 = scmp.lt.s32.totalorder %s19, 1
          %s149 = scalar_select %p148, %s19, 1
          %s150 = smul.addr %s149, 6
          %s151 = smul.addr %s150, 8
          %s152 = scalar_lea.vmem %s0, %s151
        $region28: #{tpu_custom_call.1} parent=23 // pred_fallthru
          _
      $region24: #{tpu_custom_call.1} parent=5 // pred_fallthru
        _
      %p153 = scmp.le.s32.totalorder 1, %s12
      %p154 = scmp.lt.s32.totalorder %s12, 3
      %p155 = pnand %p153, %p154
      %p156 = pneg %p155
      // Predicated region
      $region29: #{tpu_custom_call.1} parent=5 // pred_check
        _
      $region30: #{tpu_custom_call.1} parent=5 // pred_check_branch
        %158 = sbr.rel (%p155) target = $region32
      $region31: #{tpu_custom_call.1} parent=5 // pred_region
        %s159 = ssub.s32 %s12, 1
        %p160 = scmp.lt.s32.totalorder %s21, 1
        %s161 = scalar_select %p160, %s21, 1
        %s162 = smul.addr %s161, 6
        %s163 = smul.addr %s162, 8
        %s164 = scalar_lea.vmem %s0, %s163
        %p165 = pneg %p50
        %p166 = pneg %p47
        %p167 = pneg %p71
        %p168 = pneg %p68
        %p169 = pneg %p92
        %p170 = pneg %p89
        %p171 = pneg %p120
        %p172 = pneg %p117
        %s173 = sand.u32 %s107, 1
        %s174 = scalar_lea.sflag [#allocation3], %s173
        %s175 = sand.u32 %s107, 1
        %s176 = smul.addr %s175, 256
        %s177 = scalar_lea.vmem [#allocation2], %s176
        %p178 = scmp.lt.s32.totalorder %s21, 1
        %s179 = scalar_select %p178, %s21, 1
        %s180 = smul.addr %s179, 6
        %s181 = smul.addr %s180, 8
        %s182 = scalar_lea.vmem %s0, %s181
        %s183 = smul.u32 32, %s22
        %s184 = smul.u32 %s22, 16
        %s185 = sshra.s32 %s184, 3
        %s186 = sand.u32 %s184, 7
        %s187 = smul.u32 %s185, 2
        %s188 = smul.addr %s187, 8
        %s189 = scalar_lea.vmem %s182, %s188
        %v190 = vld [vmem:[%s189] sm:$0xff]
        %v191 = vld [vmem:[%s189 + $0x8] sm:$0xff]
        %v192 = vld [vmem:[%s189 + $0x10] sm:$0xff]
        %v193 = vld [vmem:[%s189 + $0x18] sm:$0xff]
        %v194 = vld [vmem:[%s189 + $0x20] sm:$0x3]
        %v195 = vld [vmem:[%s189 + $0x28] sm:$0x3]
        %198 = vrot.lane.b32.xlu0 %v190, 120
        %v199 = vpop.permute.xlu0 %198
        %200 = vrot.lane.b32.xlu0 %v192, 120
        %v201 = vpop.permute.xlu0 %200
        %204 = vrot.lane.b32.xlu0 %v190, 112
        %v205 = vpop.permute.xlu0 %204
        %206 = vrot.lane.b32.xlu0 %v192, 112
        %v207 = vpop.permute.xlu0 %206
        %210 = vrot.lane.b32.xlu0 %v190, 104
        %v211 = vpop.permute.xlu0 %210
        %212 = vrot.lane.b32.xlu0 %v192, 104
        %v213 = vpop.permute.xlu0 %212
        %216 = vrot.lane.b32.xlu0 %v190, 96
        %v217 = vpop.permute.xlu0 %216
        %218 = vrot.lane.b32.xlu0 %v192, 96
        %v219 = vpop.permute.xlu0 %218
        %222 = vrot.lane.b32.xlu0 %v190, 88
        %v223 = vpop.permute.xlu0 %222
        %224 = vrot.lane.b32.xlu0 %v192, 88
        %v225 = vpop.permute.xlu0 %224
        %228 = vrot.lane.b32.xlu0 %v190, 80
        %v229 = vpop.permute.xlu0 %228
        %230 = vrot.lane.b32.xlu0 %v192, 80
        %v231 = vpop.permute.xlu0 %230
        %234 = vrot.lane.b32.xlu0 %v190, 72
        %v235 = vpop.permute.xlu0 %234
        %236 = vrot.lane.b32.xlu0 %v192, 72
        %v237 = vpop.permute.xlu0 %236
        %240 = vrot.lane.b32.xlu0 %v190, 64
        %v241 = vpop.permute.xlu0 %240
        %242 = vrot.lane.b32.xlu0 %v192, 64
        %v243 = vpop.permute.xlu0 %242
        %246 = vrot.lane.b32.xlu0 %v190, 56
        %v247 = vpop.permute.xlu0 %246
        %248 = vrot.lane.b32.xlu0 %v192, 56
        %v249 = vpop.permute.xlu0 %248
        %252 = vrot.lane.b32.xlu0 %v190, 48
        %v253 = vpop.permute.xlu0 %252
        %254 = vrot.lane.b32.xlu0 %v192, 48
        %v255 = vpop.permute.xlu0 %254
        %258 = vrot.lane.b32.xlu0 %v190, 40
        %v259 = vpop.permute.xlu0 %258
        %260 = vrot.lane.b32.xlu0 %v192, 40
        %v261 = vpop.permute.xlu0 %260
        %264 = vrot.lane.b32.xlu0 %v190, 32
        %v265 = vpop.permute.xlu0 %264
        %266 = vrot.lane.b32.xlu0 %v192, 32
        %v267 = vpop.permute.xlu0 %266
        %270 = vrot.lane.b32.xlu0 %v190, 24
        %v271 = vpop.permute.xlu0 %270
        %272 = vrot.lane.b32.xlu0 %v192, 24
        %v273 = vpop.permute.xlu0 %272
        %276 = vrot.lane.b32.xlu0 %v190, 16
        %v277 = vpop.permute.xlu0 %276
        %278 = vrot.lane.b32.xlu0 %v192, 16
        %v279 = vpop.permute.xlu0 %278
        %282 = vrot.lane.b32.xlu0 %v190, 8
        %v283 = vpop.permute.xlu0 %282
        %284 = vrot.lane.b32.xlu0 %v192, 8
        %v285 = vpop.permute.xlu0 %284
        %290 = vrot.lane.b32.xlu0 %v191, 120
        %v291 = vpop.permute.xlu0 %290
        %292 = vrot.lane.b32.xlu0 %v193, 120
        %v293 = vpop.permute.xlu0 %292
        %v296 = vcombine.low %v190, %v205
        %v297 = vcombine.high %v190, %v205
        %v299 = vunpack.c.l.s4 1983009808
        %v300 = vunpack.c.0.s8 %v299
        %v301 = vlaneseq
        %v302 = vshrl.u32 %v301, 7
        %v303 = vsub.s32 %v300, %v302
        %v304 = vrot.slane %v296, %v303
        %v306 = vunpack.c.l.s4 1983009808
        %v307 = vunpack.c.0.s8 %v306
        %v308 = vlaneseq
        %v309 = vshrl.u32 %v308, 7
        %v310 = vsub.s32 %v307, %v309
        %v311 = vrot.slane %v297, %v310
        %v312 = vcombine.low %v199, %v211
        %v313 = vcombine.high %v199, %v211
        %v315 = vunpack.c.l.s4 1983009808
        %v316 = vunpack.c.0.s8 %v315
        %v317 = vlaneseq
        %v318 = vshrl.u32 %v317, 7
        %v319 = vsub.s32 %v316, %v318
        %v320 = vrot.slane %v312, %v319
        %v322 = vunpack.c.l.s4 1983009808
        %v323 = vunpack.c.0.s8 %v322
        %v324 = vlaneseq
        %v325 = vshrl.u32 %v324, 7
        %v326 = vsub.s32 %v323, %v325
        %v327 = vrot.slane %v313, %v326
        %v328 = vcombine.low %v217, %v229
        %v329 = vcombine.high %v217, %v229
        %v331 = vunpack.c.l.s4 1983009808
        %v332 = vunpack.c.0.s8 %v331
        %v333 = vlaneseq
        %v334 = vshrl.u32 %v333, 7
        %v335 = vsub.s32 %v332, %v334
        %v336 = vrot.slane %v328, %v335
        %v338 = vunpack.c.l.s4 1983009808
        %v339 = vunpack.c.0.s8 %v338
        %v340 = vlaneseq
        %v341 = vshrl.u32 %v340, 7
        %v342 = vsub.s32 %v339, %v341
        %v343 = vrot.slane %v329, %v342
        %v344 = vcombine.low %v223, %v235
        %v345 = vcombine.high %v223, %v235
        %v347 = vunpack.c.l.s4 1983009808
        %v348 = vunpack.c.0.s8 %v347
        %v349 = vlaneseq
        %v350 = vshrl.u32 %v349, 7
        %v351 = vsub.s32 %v348, %v350
        %v352 = vrot.slane %v344, %v351
        %v354 = vunpack.c.l.s4 1983009808
        %v355 = vunpack.c.0.s8 %v354
        %v356 = vlaneseq
        %v357 = vshrl.u32 %v356, 7
        %v358 = vsub.s32 %v355, %v357
        %v359 = vrot.slane %v345, %v358
        %v360 = vcombine.low %v304, %v320
        %v361 = vcombine.high %v304, %v320
        %v363 = vunpack.c.l.s4 1934713408
        %v364 = vunpack.c.0.s8 %v363
        %v365 = vlaneseq
        %v366 = vshrl.u32 %v365, 7
        %v367 = vsub.s32 %v364, %v366
        %v368 = vrot.slane %v360, %v367
        %v370 = vunpack.c.l.s4 1934713408
        %v371 = vunpack.c.0.s8 %v370
        %v372 = vlaneseq
        %v373 = vshrl.u32 %v372, 7
        %v374 = vsub.s32 %v371, %v373
        %v375 = vrot.slane %v361, %v374
        %v376 = vcombine.low %v311, %v327
        %v377 = vcombine.high %v311, %v327
        %v379 = vunpack.c.l.s4 1934713408
        %v380 = vunpack.c.0.s8 %v379
        %v381 = vlaneseq
        %v382 = vshrl.u32 %v381, 7
        %v383 = vsub.s32 %v380, %v382
        %v384 = vrot.slane %v376, %v383
        %v386 = vunpack.c.l.s4 1934713408
        %v387 = vunpack.c.0.s8 %v386
        %v388 = vlaneseq
        %v389 = vshrl.u32 %v388, 7
        %v390 = vsub.s32 %v387, %v389
        %v391 = vrot.slane %v377, %v390
        %v392 = vcombine.low %v336, %v352
        %v393 = vcombine.high %v336, %v352
        %v395 = vunpack.c.l.s4 1934713408
        %v396 = vunpack.c.0.s8 %v395
        %v397 = vlaneseq
        %v398 = vshrl.u32 %v397, 7
        %v399 = vsub.s32 %v396, %v398
        %v400 = vrot.slane %v392, %v399
        %v402 = vunpack.c.l.s4 1934713408
        %v403 = vunpack.c.0.s8 %v402
        %v404 = vlaneseq
        %v405 = vshrl.u32 %v404, 7
        %v406 = vsub.s32 %v403, %v405
        %v407 = vrot.slane %v393, %v406
        %v408 = vcombine.low %v343, %v359
        %v409 = vcombine.high %v343, %v359
        %v411 = vunpack.c.l.s4 1934713408
        %v412 = vunpack.c.0.s8 %v411
        %v413 = vlaneseq
        %v414 = vshrl.u32 %v413, 7
        %v415 = vsub.s32 %v412, %v414
        %v416 = vrot.slane %v408, %v415
        %v418 = vunpack.c.l.s4 1934713408
        %v419 = vunpack.c.0.s8 %v418
        %v420 = vlaneseq
        %v421 = vshrl.u32 %v420, 7
        %v422 = vsub.s32 %v419, %v421
        %v423 = vrot.slane %v409, %v422
        %v424 = vcombine.low %v368, %v400
        %v425 = vcombine.high %v368, %v400
        %v426 = vcombine.low %v375, %v407
        %v427 = vcombine.high %v375, %v407
        %v428 = vcombine.low %v384, %v416
        %v429 = vcombine.high %v384, %v416
        %v430 = vcombine.low %v391, %v423
        %v431 = vcombine.high %v391, %v423
        %v432 = vcombine.low %v241, %v253
        %v433 = vcombine.high %v241, %v253
        %v435 = vunpack.c.l.s4 1983009808
        %v436 = vunpack.c.0.s8 %v435
        %v437 = vlaneseq
        %v438 = vshrl.u32 %v437, 7
        %v439 = vsub.s32 %v436, %v438
        %v440 = vrot.slane %v432, %v439
        %v442 = vunpack.c.l.s4 1983009808
        %v443 = vunpack.c.0.s8 %v442
        %v444 = vlaneseq
        %v445 = vshrl.u32 %v444, 7
        %v446 = vsub.s32 %v443, %v445
        %v447 = vrot.slane %v433, %v446
        %v448 = vcombine.low %v247, %v259
        %v449 = vcombine.high %v247, %v259
        %v451 = vunpack.c.l.s4 1983009808
        %v452 = vunpack.c.0.s8 %v451
        %v453 = vlaneseq
        %v454 = vshrl.u32 %v453, 7
        %v455 = vsub.s32 %v452, %v454
        %v456 = vrot.slane %v448, %v455
        %v458 = vunpack.c.l.s4 1983009808
        %v459 = vunpack.c.0.s8 %v458
        %v460 = vlaneseq
        %v461 = vshrl.u32 %v460, 7
        %v462 = vsub.s32 %v459, %v461
        %v463 = vrot.slane %v449, %v462
        %v464 = vcombine.low %v265, %v277
        %v465 = vcombine.high %v265, %v277
        %v467 = vunpack.c.l.s4 1983009808
        %v468 = vunpack.c.0.s8 %v467
        %v469 = vlaneseq
        %v470 = vshrl.u32 %v469, 7
        %v471 = vsub.s32 %v468, %v470
        %v472 = vrot.slane %v464, %v471
        %v474 = vunpack.c.l.s4 1983009808
        %v475 = vunpack.c.0.s8 %v474
        %v476 = vlaneseq
        %v477 = vshrl.u32 %v476, 7
        %v478 = vsub.s32 %v475, %v477
        %v479 = vrot.slane %v465, %v478
        %v480 = vcombine.low %v271, %v283
        %v481 = vcombine.high %v271, %v283
        %v483 = vunpack.c.l.s4 1983009808
        %v484 = vunpack.c.0.s8 %v483
        %v485 = vlaneseq
        %v486 = vshrl.u32 %v485, 7
        %v487 = vsub.s32 %v484, %v486
        %v488 = vrot.slane %v480, %v487
        %v490 = vunpack.c.l.s4 1983009808
        %v491 = vunpack.c.0.s8 %v490
        %v492 = vlaneseq
        %v493 = vshrl.u32 %v492, 7
        %v494 = vsub.s32 %v491, %v493
        %v495 = vrot.slane %v481, %v494
        %v496 = vcombine.low %v440, %v456
        %v497 = vcombine.high %v440, %v456
        %v499 = vunpack.c.l.s4 1934713408
        %v500 = vunpack.c.0.s8 %v499
        %v501 = vlaneseq
        %v502 = vshrl.u32 %v501, 7
        %v503 = vsub.s32 %v500, %v502
        %v504 = vrot.slane %v496, %v503
        %v506 = vunpack.c.l.s4 1934713408
        %v507 = vunpack.c.0.s8 %v506
        %v508 = vlaneseq
        %v509 = vshrl.u32 %v508, 7
        %v510 = vsub.s32 %v507, %v509
        %v511 = vrot.slane %v497, %v510
        %v512 = vcombine.low %v447, %v463
        %v513 = vcombine.high %v447, %v463
        %v515 = vunpack.c.l.s4 1934713408
        %v516 = vunpack.c.0.s8 %v515
        %v517 = vlaneseq
        %v518 = vshrl.u32 %v517, 7
        %v519 = vsub.s32 %v516, %v518
        %v520 = vrot.slane %v512, %v519
        %v522 = vunpack.c.l.s4 1934713408
        %v523 = vunpack.c.0.s8 %v522
        %v524 = vlaneseq
        %v525 = vshrl.u32 %v524, 7
        %v526 = vsub.s32 %v523, %v525
        %v527 = vrot.slane %v513, %v526
        %v528 = vcombine.low %v472, %v488
        %v529 = vcombine.high %v472, %v488
        %v531 = vunpack.c.l.s4 1934713408
        %v532 = vunpack.c.0.s8 %v531
        %v533 = vlaneseq
        %v534 = vshrl.u32 %v533, 7
        %v535 = vsub.s32 %v532, %v534
        %v536 = vrot.slane %v528, %v535
        %v538 = vunpack.c.l.s4 1934713408
        %v539 = vunpack.c.0.s8 %v538
        %v540 = vlaneseq
        %v541 = vshrl.u32 %v540, 7
        %v542 = vsub.s32 %v539, %v541
        %v543 = vrot.slane %v529, %v542
        %v544 = vcombine.low %v479, %v495
        %v545 = vcombine.high %v479, %v495
        %v547 = vunpack.c.l.s4 1934713408
        %v548 = vunpack.c.0.s8 %v547
        %v549 = vlaneseq
        %v550 = vshrl.u32 %v549, 7
        %v551 = vsub.s32 %v548, %v550
        %v552 = vrot.slane %v544, %v551
        %v554 = vunpack.c.l.s4 1934713408
        %v555 = vunpack.c.0.s8 %v554
        %v556 = vlaneseq
        %v557 = vshrl.u32 %v556, 7
        %v558 = vsub.s32 %v555, %v557
        %v559 = vrot.slane %v545, %v558
        %v560 = vcombine.low %v504, %v536
        %v561 = vcombine.high %v504, %v536
        %v562 = vcombine.low %v511, %v543
        %v563 = vcombine.high %v511, %v543
        %v564 = vcombine.low %v520, %v552
        %v565 = vcombine.high %v520, %v552
        %v566 = vcombine.low %v527, %v559
        %v567 = vcombine.high %v527, %v559
        %v568 = vcombine.high %v191, 0.0
        %v570 = vunpack.c.l.s4 1983009808
        %v571 = vunpack.c.0.s8 %v570
        %v572 = vlaneseq
        %v573 = vshrl.u32 %v572, 7
        %v574 = vsub.s32 %v571, %v573
        %v575 = vrot.slane %v191, %v574
        %v577 = vunpack.c.l.s4 1983009808
        %v578 = vunpack.c.0.s8 %v577
        %v579 = vlaneseq
        %v580 = vshrl.u32 %v579, 7
        %v581 = vsub.s32 %v578, %v580
        %v582 = vrot.slane %v568, %v581
        %v583 = vcombine.high %v291, 0.0
        %v585 = vunpack.c.l.s4 1983009808
        %v586 = vunpack.c.0.s8 %v585
        %v587 = vlaneseq
        %v588 = vshrl.u32 %v587, 7
        %v589 = vsub.s32 %v586, %v588
        %v590 = vrot.slane %v291, %v589
        %v592 = vunpack.c.l.s4 1983009808
        %v593 = vunpack.c.0.s8 %v592
        %v594 = vlaneseq
        %v595 = vshrl.u32 %v594, 7
        %v596 = vsub.s32 %v593, %v595
        %v597 = vrot.slane %v583, %v596
        %v598 = vcombine.low %v575, %v590
        %v599 = vcombine.high %v575, %v590
        %v601 = vunpack.c.l.s4 1934713408
        %v602 = vunpack.c.0.s8 %v601
        %v603 = vlaneseq
        %v604 = vshrl.u32 %v603, 7
        %v605 = vsub.s32 %v602, %v604
        %v606 = vrot.slane %v598, %v605
        %v608 = vunpack.c.l.s4 1934713408
        %v609 = vunpack.c.0.s8 %v608
        %v610 = vlaneseq
        %v611 = vshrl.u32 %v610, 7
        %v612 = vsub.s32 %v609, %v611
        %v613 = vrot.slane %v599, %v612
        %v614 = vcombine.low %v582, %v597
        %v615 = vcombine.high %v582, %v597
        %v617 = vunpack.c.l.s4 1934713408
        %v618 = vunpack.c.0.s8 %v617
        %v619 = vlaneseq
        %v620 = vshrl.u32 %v619, 7
        %v621 = vsub.s32 %v618, %v620
        %v622 = vrot.slane %v614, %v621
        %v624 = vunpack.c.l.s4 1934713408
        %v625 = vunpack.c.0.s8 %v624
        %v626 = vlaneseq
        %v627 = vshrl.u32 %v626, 7
        %v628 = vsub.s32 %v625, %v627
        %v629 = vrot.slane %v615, %v628
        %v630 = vcombine.high %v606, 0.0
        %v631 = vcombine.high %v613, 0.0
        %v632 = vcombine.high %v622, 0.0
        %v633 = vcombine.high %v629, 0.0
        %v634 = vcombine.low %v192, %v207
        %v635 = vcombine.high %v192, %v207
        %v637 = vunpack.c.l.s4 1983009808
        %v638 = vunpack.c.0.s8 %v637
        %v639 = vlaneseq
        %v640 = vshrl.u32 %v639, 7
        %v641 = vsub.s32 %v638, %v640
        %v642 = vrot.slane %v634, %v641
        %v644 = vunpack.c.l.s4 1983009808
        %v645 = vunpack.c.0.s8 %v644
        %v646 = vlaneseq
        %v647 = vshrl.u32 %v646, 7
        %v648 = vsub.s32 %v645, %v647
        %v649 = vrot.slane %v635, %v648
        %v650 = vcombine.low %v201, %v213
        %v651 = vcombine.high %v201, %v213
        %v653 = vunpack.c.l.s4 1983009808
        %v654 = vunpack.c.0.s8 %v653
        %v655 = vlaneseq
        %v656 = vshrl.u32 %v655, 7
        %v657 = vsub.s32 %v654, %v656
        %v658 = vrot.slane %v650, %v657
        %v660 = vunpack.c.l.s4 1983009808
        %v661 = vunpack.c.0.s8 %v660
        %v662 = vlaneseq
        %v663 = vshrl.u32 %v662, 7
        %v664 = vsub.s32 %v661, %v663
        %v665 = vrot.slane %v651, %v664
        %v666 = vcombine.low %v219, %v231
        %v667 = vcombine.high %v219, %v231
        %v669 = vunpack.c.l.s4 1983009808
        %v670 = vunpack.c.0.s8 %v669
        %v671 = vlaneseq
        %v672 = vshrl.u32 %v671, 7
        %v673 = vsub.s32 %v670, %v672
        %v674 = vrot.slane %v666, %v673
        %v676 = vunpack.c.l.s4 1983009808
        %v677 = vunpack.c.0.s8 %v676
        %v678 = vlaneseq
        %v679 = vshrl.u32 %v678, 7
        %v680 = vsub.s32 %v677, %v679
        %v681 = vrot.slane %v667, %v680
        %v682 = vcombine.low %v225, %v237
        %v683 = vcombine.high %v225, %v237
        %v685 = vunpack.c.l.s4 1983009808
        %v686 = vunpack.c.0.s8 %v685
        %v687 = vlaneseq
        %v688 = vshrl.u32 %v687, 7
        %v689 = vsub.s32 %v686, %v688
        %v690 = vrot.slane %v682, %v689
        %v692 = vunpack.c.l.s4 1983009808
        %v693 = vunpack.c.0.s8 %v692
        %v694 = vlaneseq
        %v695 = vshrl.u32 %v694, 7
        %v696 = vsub.s32 %v693, %v695
        %v697 = vrot.slane %v683, %v696
        %v698 = vcombine.low %v642, %v658
        %v699 = vcombine.high %v642, %v658
        %v701 = vunpack.c.l.s4 1934713408
        %v702 = vunpack.c.0.s8 %v701
        %v703 = vlaneseq
        %v704 = vshrl.u32 %v703, 7
        %v705 = vsub.s32 %v702, %v704
        %v706 = vrot.slane %v698, %v705
        %v708 = vunpack.c.l.s4 1934713408
        %v709 = vunpack.c.0.s8 %v708
        %v710 = vlaneseq
        %v711 = vshrl.u32 %v710, 7
        %v712 = vsub.s32 %v709, %v711
        %v713 = vrot.slane %v699, %v712
        %v714 = vcombine.low %v649, %v665
        %v715 = vcombine.high %v649, %v665
        %v717 = vunpack.c.l.s4 1934713408
        %v718 = vunpack.c.0.s8 %v717
        %v719 = vlaneseq
        %v720 = vshrl.u32 %v719, 7
        %v721 = vsub.s32 %v718, %v720
        %v722 = vrot.slane %v714, %v721
        %v724 = vunpack.c.l.s4 1934713408
        %v725 = vunpack.c.0.s8 %v724
        %v726 = vlaneseq
        %v727 = vshrl.u32 %v726, 7
        %v728 = vsub.s32 %v725, %v727
        %v729 = vrot.slane %v715, %v728
        %v730 = vcombine.low %v674, %v690
        %v731 = vcombine.high %v674, %v690
        %v733 = vunpack.c.l.s4 1934713408
        %v734 = vunpack.c.0.s8 %v733
        %v735 = vlaneseq
        %v736 = vshrl.u32 %v735, 7
        %v737 = vsub.s32 %v734, %v736
        %v738 = vrot.slane %v730, %v737
        %v740 = vunpack.c.l.s4 1934713408
        %v741 = vunpack.c.0.s8 %v740
        %v742 = vlaneseq
        %v743 = vshrl.u32 %v742, 7
        %v744 = vsub.s32 %v741, %v743
        %v745 = vrot.slane %v731, %v744
        %v746 = vcombine.low %v681, %v697
        %v747 = vcombine.high %v681, %v697
        %v749 = vunpack.c.l.s4 1934713408
        %v750 = vunpack.c.0.s8 %v749
        %v751 = vlaneseq
        %v752 = vshrl.u32 %v751, 7
        %v753 = vsub.s32 %v750, %v752
        %v754 = vrot.slane %v746, %v753
        %v756 = vunpack.c.l.s4 1934713408
        %v757 = vunpack.c.0.s8 %v756
        %v758 = vlaneseq
        %v759 = vshrl.u32 %v758, 7
        %v760 = vsub.s32 %v757, %v759
        %v761 = vrot.slane %v747, %v760
        %v762 = vcombine.low %v706, %v738
        %v763 = vcombine.high %v706, %v738
        %v764 = vcombine.low %v713, %v745
        %v765 = vcombine.high %v713, %v745
        %v766 = vcombine.low %v722, %v754
        %v767 = vcombine.high %v722, %v754
        %v768 = vcombine.low %v729, %v761
        %v769 = vcombine.high %v729, %v761
        %v770 = vcombine.low %v243, %v255
        %v771 = vcombine.high %v243, %v255
        %v773 = vunpack.c.l.s4 1983009808
        %v774 = vunpack.c.0.s8 %v773
        %v775 = vlaneseq
        %v776 = vshrl.u32 %v775, 7
        %v777 = vsub.s32 %v774, %v776
        %v778 = vrot.slane %v770, %v777
        %v780 = vunpack.c.l.s4 1983009808
        %v781 = vunpack.c.0.s8 %v780
        %v782 = vlaneseq
        %v783 = vshrl.u32 %v782, 7
        %v784 = vsub.s32 %v781, %v783
        %v785 = vrot.slane %v771, %v784
        %v786 = vcombine.low %v249, %v261
        %v787 = vcombine.high %v249, %v261
        %v789 = vunpack.c.l.s4 1983009808
        %v790 = vunpack.c.0.s8 %v789
        %v791 = vlaneseq
        %v792 = vshrl.u32 %v791, 7
        %v793 = vsub.s32 %v790, %v792
        %v794 = vrot.slane %v786, %v793
        %v796 = vunpack.c.l.s4 1983009808
        %v797 = vunpack.c.0.s8 %v796
        %v798 = vlaneseq
        %v799 = vshrl.u32 %v798, 7
        %v800 = vsub.s32 %v797, %v799
        %v801 = vrot.slane %v787, %v800
        %v802 = vcombine.low %v267, %v279
        %v803 = vcombine.high %v267, %v279
        %v805 = vunpack.c.l.s4 1983009808
        %v806 = vunpack.c.0.s8 %v805
        %v807 = vlaneseq
        %v808 = vshrl.u32 %v807, 7
        %v809 = vsub.s32 %v806, %v808
        %v810 = vrot.slane %v802, %v809
        %v812 = vunpack.c.l.s4 1983009808
        %v813 = vunpack.c.0.s8 %v812
        %v814 = vlaneseq
        %v815 = vshrl.u32 %v814, 7
        %v816 = vsub.s32 %v813, %v815
        %v817 = vrot.slane %v803, %v816
        %v818 = vcombine.low %v273, %v285
        %v819 = vcombine.high %v273, %v285
        %v821 = vunpack.c.l.s4 1983009808
        %v822 = vunpack.c.0.s8 %v821
        %v823 = vlaneseq
        %v824 = vshrl.u32 %v823, 7
        %v825 = vsub.s32 %v822, %v824
        %v826 = vrot.slane %v818, %v825
        %v828 = vunpack.c.l.s4 1983009808
        %v829 = vunpack.c.0.s8 %v828
        %v830 = vlaneseq
        %v831 = vshrl.u32 %v830, 7
        %v832 = vsub.s32 %v829, %v831
        %v833 = vrot.slane %v819, %v832
        %v834 = vcombine.low %v778, %v794
        %v835 = vcombine.high %v778, %v794
        %v837 = vunpack.c.l.s4 1934713408
        %v838 = vunpack.c.0.s8 %v837
        %v839 = vlaneseq
        %v840 = vshrl.u32 %v839, 7
        %v841 = vsub.s32 %v838, %v840
        %v842 = vrot.slane %v834, %v841
        %v844 = vunpack.c.l.s4 1934713408
        %v845 = vunpack.c.0.s8 %v844
        %v846 = vlaneseq
        %v847 = vshrl.u32 %v846, 7
        %v848 = vsub.s32 %v845, %v847
        %v849 = vrot.slane %v835, %v848
        %v850 = vcombine.low %v785, %v801
        %v851 = vcombine.high %v785, %v801
        %v853 = vunpack.c.l.s4 1934713408
        %v854 = vunpack.c.0.s8 %v853
        %v855 = vlaneseq
        %v856 = vshrl.u32 %v855, 7
        %v857 = vsub.s32 %v854, %v856
        %v858 = vrot.slane %v850, %v857
        %v860 = vunpack.c.l.s4 1934713408
        %v861 = vunpack.c.0.s8 %v860
        %v862 = vlaneseq
        %v863 = vshrl.u32 %v862, 7
        %v864 = vsub.s32 %v861, %v863
        %v865 = vrot.slane %v851, %v864
        %v866 = vcombine.low %v810, %v826
        %v867 = vcombine.high %v810, %v826
        %v869 = vunpack.c.l.s4 1934713408
        %v870 = vunpack.c.0.s8 %v869
        %v871 = vlaneseq
        %v872 = vshrl.u32 %v871, 7
        %v873 = vsub.s32 %v870, %v872
        %v874 = vrot.slane %v866, %v873
        %v876 = vunpack.c.l.s4 1934713408
        %v877 = vunpack.c.0.s8 %v876
        %v878 = vlaneseq
        %v879 = vshrl.u32 %v878, 7
        %v880 = vsub.s32 %v877, %v879
        %v881 = vrot.slane %v867, %v880
        %v882 = vcombine.low %v817, %v833
        %v883 = vcombine.high %v817, %v833
        %v885 = vunpack.c.l.s4 1934713408
        %v886 = vunpack.c.0.s8 %v885
        %v887 = vlaneseq
        %v888 = vshrl.u32 %v887, 7
        %v889 = vsub.s32 %v886, %v888
        %v890 = vrot.slane %v882, %v889
        %v892 = vunpack.c.l.s4 1934713408
        %v893 = vunpack.c.0.s8 %v892
        %v894 = vlaneseq
        %v895 = vshrl.u32 %v894, 7
        %v896 = vsub.s32 %v893, %v895
        %v897 = vrot.slane %v883, %v896
        %v898 = vcombine.low %v842, %v874
        %v899 = vcombine.high %v842, %v874
        %v900 = vcombine.low %v849, %v881
        %v901 = vcombine.high %v849, %v881
        %v902 = vcombine.low %v858, %v890
        %v903 = vcombine.high %v858, %v890
        %v904 = vcombine.low %v865, %v897
        %v905 = vcombine.high %v865, %v897
        %v906 = vcombine.high %v193, 0.0
        %v908 = vunpack.c.l.s4 1983009808
        %v909 = vunpack.c.0.s8 %v908
        %v910 = vlaneseq
        %v911 = vshrl.u32 %v910, 7
        %v912 = vsub.s32 %v909, %v911
        %v913 = vrot.slane %v193, %v912
        %v915 = vunpack.c.l.s4 1983009808
        %v916 = vunpack.c.0.s8 %v915
        %v917 = vlaneseq
        %v918 = vshrl.u32 %v917, 7
        %v919 = vsub.s32 %v916, %v918
        %v920 = vrot.slane %v906, %v919
        %v921 = vcombine.high %v293, 0.0
        %v923 = vunpack.c.l.s4 1983009808
        %v924 = vunpack.c.0.s8 %v923
        %v925 = vlaneseq
        %v926 = vshrl.u32 %v925, 7
        %v927 = vsub.s32 %v924, %v926
        %v928 = vrot.slane %v293, %v927
        %v930 = vunpack.c.l.s4 1983009808
        %v931 = vunpack.c.0.s8 %v930
        %v932 = vlaneseq
        %v933 = vshrl.u32 %v932, 7
        %v934 = vsub.s32 %v931, %v933
        %v935 = vrot.slane %v921, %v934
        %v936 = vcombine.low %v913, %v928
        %v937 = vcombine.high %v913, %v928
        %v939 = vunpack.c.l.s4 1934713408
        %v940 = vunpack.c.0.s8 %v939
        %v941 = vlaneseq
        %v942 = vshrl.u32 %v941, 7
        %v943 = vsub.s32 %v940, %v942
        %v944 = vrot.slane %v936, %v943
        %v946 = vunpack.c.l.s4 1934713408
        %v947 = vunpack.c.0.s8 %v946
        %v948 = vlaneseq
        %v949 = vshrl.u32 %v948, 7
        %v950 = vsub.s32 %v947, %v949
        %v951 = vrot.slane %v937, %v950
        %v952 = vcombine.low %v920, %v935
        %v953 = vcombine.high %v920, %v935
        %v955 = vunpack.c.l.s4 1934713408
        %v956 = vunpack.c.0.s8 %v955
        %v957 = vlaneseq
        %v958 = vshrl.u32 %v957, 7
        %v959 = vsub.s32 %v956, %v958
        %v960 = vrot.slane %v952, %v959
        %v962 = vunpack.c.l.s4 1934713408
        %v963 = vunpack.c.0.s8 %v962
        %v964 = vlaneseq
        %v965 = vshrl.u32 %v964, 7
        %v966 = vsub.s32 %v963, %v965
        %v967 = vrot.slane %v953, %v966
        %v968 = vcombine.high %v944, 0.0
        %v969 = vcombine.high %v951, 0.0
        %v970 = vcombine.high %v960, 0.0
        %v971 = vcombine.high %v967, 0.0
        %973 = vrot.lane.b32.xlu0 %v194, 120
        %v974 = vpop.permute.xlu0 %973
        %975 = vrot.lane.b32.xlu0 %v194, 112
        %v976 = vpop.permute.xlu0 %975
        %977 = vrot.lane.b32.xlu0 %v194, 104
        %v978 = vpop.permute.xlu0 %977
        %979 = vrot.lane.b32.xlu0 %v194, 96
        %v980 = vpop.permute.xlu0 %979
        %981 = vrot.lane.b32.xlu0 %v194, 88
        %v982 = vpop.permute.xlu0 %981
        %983 = vrot.lane.b32.xlu0 %v194, 80
        %v984 = vpop.permute.xlu0 %983
        %985 = vrot.lane.b32.xlu0 %v194, 72
        %v986 = vpop.permute.xlu0 %985
        %987 = vrot.lane.b32.xlu0 %v194, 64
        %v988 = vpop.permute.xlu0 %987
        %989 = vrot.lane.b32.xlu0 %v194, 56
        %v990 = vpop.permute.xlu0 %989
        %991 = vrot.lane.b32.xlu0 %v194, 48
        %v992 = vpop.permute.xlu0 %991
        %993 = vrot.lane.b32.xlu0 %v194, 40
        %v994 = vpop.permute.xlu0 %993
        %995 = vrot.lane.b32.xlu0 %v194, 32
        %v996 = vpop.permute.xlu0 %995
        %997 = vrot.lane.b32.xlu0 %v194, 24
        %v998 = vpop.permute.xlu0 %997
        %999 = vrot.lane.b32.xlu0 %v194, 16
        %v1000 = vpop.permute.xlu0 %999
        %1001 = vrot.lane.b32.xlu0 %v194, 8
        %v1002 = vpop.permute.xlu0 %1001
        %1004 = vrot.lane.b32.xlu0 %v195, 120
        %v1005 = vpop.permute.xlu0 %1004
        %vm1006 = vcmask 1046528
        %v1007 = vrot.slane %v190, 1
        %v1008 = vrot.slane %v192, 1
        %v1009 = vsel %vm1006, %v1007, %v1008
        %v1010 = vrot.slane %v194, 1
        %v1011 = vsel %vm1006, %v1008, %v1010
        %v1012 = vrot.slane %v199, 1
        %v1013 = vrot.slane %v201, 1
        %v1014 = vsel %vm1006, %v1012, %v1013
        %v1015 = vrot.slane %v974, 1
        %v1016 = vsel %vm1006, %v1013, %v1015
        %v1017 = vrot.slane %v205, 1
        %v1018 = vrot.slane %v207, 1
        %v1019 = vsel %vm1006, %v1017, %v1018
        %v1020 = vrot.slane %v976, 1
        %v1021 = vsel %vm1006, %v1018, %v1020
        %v1022 = vrot.slane %v211, 1
        %v1023 = vrot.slane %v213, 1
        %v1024 = vsel %vm1006, %v1022, %v1023
        %v1025 = vrot.slane %v978, 1
        %v1026 = vsel %vm1006, %v1023, %v1025
        %v1027 = vrot.slane %v217, 1
        %v1028 = vrot.slane %v219, 1
        %v1029 = vsel %vm1006, %v1027, %v1028
        %v1030 = vrot.slane %v980, 1
        %v1031 = vsel %vm1006, %v1028, %v1030
        %v1032 = vrot.slane %v223, 1
        %v1033 = vrot.slane %v225, 1
        %v1034 = vsel %vm1006, %v1032, %v1033
        %v1035 = vrot.slane %v982, 1
        %v1036 = vsel %vm1006, %v1033, %v1035
        %v1037 = vrot.slane %v229, 1
        %v1038 = vrot.slane %v231, 1
        %v1039 = vsel %vm1006, %v1037, %v1038
        %v1040 = vrot.slane %v984, 1
        %v1041 = vsel %vm1006, %v1038, %v1040
        %v1042 = vrot.slane %v235, 1
        %v1043 = vrot.slane %v237, 1
        %v1044 = vsel %vm1006, %v1042, %v1043
        %v1045 = vrot.slane %v986, 1
        %v1046 = vsel %vm1006, %v1043, %v1045
        %v1047 = vrot.slane %v241, 1
        %v1048 = vrot.slane %v243, 1
        %v1049 = vsel %vm1006, %v1047, %v1048
        %v1050 = vrot.slane %v988, 1
        %v1051 = vsel %vm1006, %v1048, %v1050
        %v1052 = vrot.slane %v247, 1
        %v1053 = vrot.slane %v249, 1
        %v1054 = vsel %vm1006, %v1052, %v1053
        %v1055 = vrot.slane %v990, 1
        %v1056 = vsel %vm1006, %v1053, %v1055
        %v1057 = vrot.slane %v253, 1
        %v1058 = vrot.slane %v255, 1
        %v1059 = vsel %vm1006, %v1057, %v1058
        %v1060 = vrot.slane %v992, 1
        %v1061 = vsel %vm1006, %v1058, %v1060
        %v1062 = vrot.slane %v259, 1
        %v1063 = vrot.slane %v261, 1
        %v1064 = vsel %vm1006, %v1062, %v1063
        %v1065 = vrot.slane %v994, 1
        %v1066 = vsel %vm1006, %v1063, %v1065
        %v1067 = vrot.slane %v265, 1
        %v1068 = vrot.slane %v267, 1
        %v1069 = vsel %vm1006, %v1067, %v1068
        %v1070 = vrot.slane %v996, 1
        %v1071 = vsel %vm1006, %v1068, %v1070
        %v1072 = vrot.slane %v271, 1
        %v1073 = vrot.slane %v273, 1
        %v1074 = vsel %vm1006, %v1072, %v1073
        %v1075 = vrot.slane %v998, 1
        %v1076 = vsel %vm1006, %v1073, %v1075
        %v1077 = vrot.slane %v277, 1
        %v1078 = vrot.slane %v279, 1
        %v1079 = vsel %vm1006, %v1077, %v1078
        %v1080 = vrot.slane %v1000, 1
        %v1081 = vsel %vm1006, %v1078, %v1080
        %v1082 = vrot.slane %v283, 1
        %v1083 = vrot.slane %v285, 1
        %v1084 = vsel %vm1006, %v1082, %v1083
        %v1085 = vrot.slane %v1002, 1
        %v1086 = vsel %vm1006, %v1083, %v1085
        %v1087 = vrot.slane %v191, 1
        %v1088 = vrot.slane %v193, 1
        %v1089 = vsel %vm1006, %v1087, %v1088
        %v1090 = vrot.slane %v195, 1
        %v1091 = vsel %vm1006, %v1088, %v1090
        %v1092 = vrot.slane %v291, 1
        %v1093 = vrot.slane %v293, 1
        %v1094 = vsel %vm1006, %v1092, %v1093
        %v1095 = vrot.slane %v1005, 1
        %v1096 = vsel %vm1006, %v1093, %v1095
        %v1133 = vcombine.low %v1009, %v1019
        %v1134 = vcombine.high %v1009, %v1019
        %v1136 = vunpack.c.l.s4 1983009808
        %v1137 = vunpack.c.0.s8 %v1136
        %v1138 = vlaneseq
        %v1139 = vshrl.u32 %v1138, 7
        %v1140 = vsub.s32 %v1137, %v1139
        %v1141 = vrot.slane %v1133, %v1140
        %v1143 = vunpack.c.l.s4 1983009808
        %v1144 = vunpack.c.0.s8 %v1143
        %v1145 = vlaneseq
        %v1146 = vshrl.u32 %v1145, 7
        %v1147 = vsub.s32 %v1144, %v1146
        %v1148 = vrot.slane %v1134, %v1147
        %v1149 = vcombine.low %v1014, %v1024
        %v1150 = vcombine.high %v1014, %v1024
        %v1152 = vunpack.c.l.s4 1983009808
        %v1153 = vunpack.c.0.s8 %v1152
        %v1154 = vlaneseq
        %v1155 = vshrl.u32 %v1154, 7
        %v1156 = vsub.s32 %v1153, %v1155
        %v1157 = vrot.slane %v1149, %v1156
        %v1159 = vunpack.c.l.s4 1983009808
        %v1160 = vunpack.c.0.s8 %v1159
        %v1161 = vlaneseq
        %v1162 = vshrl.u32 %v1161, 7
        %v1163 = vsub.s32 %v1160, %v1162
        %v1164 = vrot.slane %v1150, %v1163
        %v1165 = vcombine.low %v1029, %v1039
        %v1166 = vcombine.high %v1029, %v1039
        %v1168 = vunpack.c.l.s4 1983009808
        %v1169 = vunpack.c.0.s8 %v1168
        %v1170 = vlaneseq
        %v1171 = vshrl.u32 %v1170, 7
        %v1172 = vsub.s32 %v1169, %v1171
        %v1173 = vrot.slane %v1165, %v1172
        %v1175 = vunpack.c.l.s4 1983009808
        %v1176 = vunpack.c.0.s8 %v1175
        %v1177 = vlaneseq
        %v1178 = vshrl.u32 %v1177, 7
        %v1179 = vsub.s32 %v1176, %v1178
        %v1180 = vrot.slane %v1166, %v1179
        %v1181 = vcombine.low %v1034, %v1044
        %v1182 = vcombine.high %v1034, %v1044
        %v1184 = vunpack.c.l.s4 1983009808
        %v1185 = vunpack.c.0.s8 %v1184
        %v1186 = vlaneseq
        %v1187 = vshrl.u32 %v1186, 7
        %v1188 = vsub.s32 %v1185, %v1187
        %v1189 = vrot.slane %v1181, %v1188
        %v1191 = vunpack.c.l.s4 1983009808
        %v1192 = vunpack.c.0.s8 %v1191
        %v1193 = vlaneseq
        %v1194 = vshrl.u32 %v1193, 7
        %v1195 = vsub.s32 %v1192, %v1194
        %v1196 = vrot.slane %v1182, %v1195
        %v1197 = vcombine.low %v1141, %v1157
        %v1198 = vcombine.high %v1141, %v1157
        %v1200 = vunpack.c.l.s4 1934713408
        %v1201 = vunpack.c.0.s8 %v1200
        %v1202 = vlaneseq
        %v1203 = vshrl.u32 %v1202, 7
        %v1204 = vsub.s32 %v1201, %v1203
        %v1205 = vrot.slane %v1197, %v1204
        %v1207 = vunpack.c.l.s4 1934713408
        %v1208 = vunpack.c.0.s8 %v1207
        %v1209 = vlaneseq
        %v1210 = vshrl.u32 %v1209, 7
        %v1211 = vsub.s32 %v1208, %v1210
        %v1212 = vrot.slane %v1198, %v1211
        %v1213 = vcombine.low %v1148, %v1164
        %v1214 = vcombine.high %v1148, %v1164
        %v1216 = vunpack.c.l.s4 1934713408
        %v1217 = vunpack.c.0.s8 %v1216
        %v1218 = vlaneseq
        %v1219 = vshrl.u32 %v1218, 7
        %v1220 = vsub.s32 %v1217, %v1219
        %v1221 = vrot.slane %v1213, %v1220
        %v1223 = vunpack.c.l.s4 1934713408
        %v1224 = vunpack.c.0.s8 %v1223
        %v1225 = vlaneseq
        %v1226 = vshrl.u32 %v1225, 7
        %v1227 = vsub.s32 %v1224, %v1226
        %v1228 = vrot.slane %v1214, %v1227
        %v1229 = vcombine.low %v1173, %v1189
        %v1230 = vcombine.high %v1173, %v1189
        %v1232 = vunpack.c.l.s4 1934713408
        %v1233 = vunpack.c.0.s8 %v1232
        %v1234 = vlaneseq
        %v1235 = vshrl.u32 %v1234, 7
        %v1236 = vsub.s32 %v1233, %v1235
        %v1237 = vrot.slane %v1229, %v1236
        %v1239 = vunpack.c.l.s4 1934713408
        %v1240 = vunpack.c.0.s8 %v1239
        %v1241 = vlaneseq
        %v1242 = vshrl.u32 %v1241, 7
        %v1243 = vsub.s32 %v1240, %v1242
        %v1244 = vrot.slane %v1230, %v1243
        %v1245 = vcombine.low %v1180, %v1196
        %v1246 = vcombine.high %v1180, %v1196
        %v1248 = vunpack.c.l.s4 1934713408
        %v1249 = vunpack.c.0.s8 %v1248
        %v1250 = vlaneseq
        %v1251 = vshrl.u32 %v1250, 7
        %v1252 = vsub.s32 %v1249, %v1251
        %v1253 = vrot.slane %v1245, %v1252
        %v1255 = vunpack.c.l.s4 1934713408
        %v1256 = vunpack.c.0.s8 %v1255
        %v1257 = vlaneseq
        %v1258 = vshrl.u32 %v1257, 7
        %v1259 = vsub.s32 %v1256, %v1258
        %v1260 = vrot.slane %v1246, %v1259
        %v1261 = vcombine.low %v1205, %v1237
        %v1262 = vcombine.high %v1205, %v1237
        %v1263 = vcombine.low %v1212, %v1244
        %v1264 = vcombine.high %v1212, %v1244
        %v1265 = vcombine.low %v1221, %v1253
        %v1266 = vcombine.high %v1221, %v1253
        %v1267 = vcombine.low %v1228, %v1260
        %v1268 = vcombine.high %v1228, %v1260
        %v1269 = vcombine.low %v1049, %v1059
        %v1270 = vcombine.high %v1049, %v1059
        %v1272 = vunpack.c.l.s4 1983009808
        %v1273 = vunpack.c.0.s8 %v1272
        %v1274 = vlaneseq
        %v1275 = vshrl.u32 %v1274, 7
        %v1276 = vsub.s32 %v1273, %v1275
        %v1277 = vrot.slane %v1269, %v1276
        %v1279 = vunpack.c.l.s4 1983009808
        %v1280 = vunpack.c.0.s8 %v1279
        %v1281 = vlaneseq
        %v1282 = vshrl.u32 %v1281, 7
        %v1283 = vsub.s32 %v1280, %v1282
        %v1284 = vrot.slane %v1270, %v1283
        %v1285 = vcombine.low %v1054, %v1064
        %v1286 = vcombine.high %v1054, %v1064
        %v1288 = vunpack.c.l.s4 1983009808
        %v1289 = vunpack.c.0.s8 %v1288
        %v1290 = vlaneseq
        %v1291 = vshrl.u32 %v1290, 7
        %v1292 = vsub.s32 %v1289, %v1291
        %v1293 = vrot.slane %v1285, %v1292
        %v1295 = vunpack.c.l.s4 1983009808
        %v1296 = vunpack.c.0.s8 %v1295
        %v1297 = vlaneseq
        %v1298 = vshrl.u32 %v1297, 7
        %v1299 = vsub.s32 %v1296, %v1298
        %v1300 = vrot.slane %v1286, %v1299
        %v1301 = vcombine.low %v1069, %v1079
        %v1302 = vcombine.high %v1069, %v1079
        %v1304 = vunpack.c.l.s4 1983009808
        %v1305 = vunpack.c.0.s8 %v1304
        %v1306 = vlaneseq
        %v1307 = vshrl.u32 %v1306, 7
        %v1308 = vsub.s32 %v1305, %v1307
        %v1309 = vrot.slane %v1301, %v1308
        %v1311 = vunpack.c.l.s4 1983009808
        %v1312 = vunpack.c.0.s8 %v1311
        %v1313 = vlaneseq
        %v1314 = vshrl.u32 %v1313, 7
        %v1315 = vsub.s32 %v1312, %v1314
        %v1316 = vrot.slane %v1302, %v1315
        %v1317 = vcombine.low %v1074, %v1084
        %v1318 = vcombine.high %v1074, %v1084
        %v1320 = vunpack.c.l.s4 1983009808
        %v1321 = vunpack.c.0.s8 %v1320
        %v1322 = vlaneseq
        %v1323 = vshrl.u32 %v1322, 7
        %v1324 = vsub.s32 %v1321, %v1323
        %v1325 = vrot.slane %v1317, %v1324
        %v1327 = vunpack.c.l.s4 1983009808
        %v1328 = vunpack.c.0.s8 %v1327
        %v1329 = vlaneseq
        %v1330 = vshrl.u32 %v1329, 7
        %v1331 = vsub.s32 %v1328, %v1330
        %v1332 = vrot.slane %v1318, %v1331
        %v1333 = vcombine.low %v1277, %v1293
        %v1334 = vcombine.high %v1277, %v1293
        %v1336 = vunpack.c.l.s4 1934713408
        %v1337 = vunpack.c.0.s8 %v1336
        %v1338 = vlaneseq
        %v1339 = vshrl.u32 %v1338, 7
        %v1340 = vsub.s32 %v1337, %v1339
        %v1341 = vrot.slane %v1333, %v1340
        %v1343 = vunpack.c.l.s4 1934713408
        %v1344 = vunpack.c.0.s8 %v1343
        %v1345 = vlaneseq
        %v1346 = vshrl.u32 %v1345, 7
        %v1347 = vsub.s32 %v1344, %v1346
        %v1348 = vrot.slane %v1334, %v1347
        %v1349 = vcombine.low %v1284, %v1300
        %v1350 = vcombine.high %v1284, %v1300
        %v1352 = vunpack.c.l.s4 1934713408
        %v1353 = vunpack.c.0.s8 %v1352
        %v1354 = vlaneseq
        %v1355 = vshrl.u32 %v1354, 7
        %v1356 = vsub.s32 %v1353, %v1355
        %v1357 = vrot.slane %v1349, %v1356
        %v1359 = vunpack.c.l.s4 1934713408
        %v1360 = vunpack.c.0.s8 %v1359
        %v1361 = vlaneseq
        %v1362 = vshrl.u32 %v1361, 7
        %v1363 = vsub.s32 %v1360, %v1362
        %v1364 = vrot.slane %v1350, %v1363
        %v1365 = vcombine.low %v1309, %v1325
        %v1366 = vcombine.high %v1309, %v1325
        %v1368 = vunpack.c.l.s4 1934713408
        %v1369 = vunpack.c.0.s8 %v1368
        %v1370 = vlaneseq
        %v1371 = vshrl.u32 %v1370, 7
        %v1372 = vsub.s32 %v1369, %v1371
        %v1373 = vrot.slane %v1365, %v1372
        %v1375 = vunpack.c.l.s4 1934713408
        %v1376 = vunpack.c.0.s8 %v1375
        %v1377 = vlaneseq
        %v1378 = vshrl.u32 %v1377, 7
        %v1379 = vsub.s32 %v1376, %v1378
        %v1380 = vrot.slane %v1366, %v1379
        %v1381 = vcombine.low %v1316, %v1332
        %v1382 = vcombine.high %v1316, %v1332
        %v1384 = vunpack.c.l.s4 1934713408
        %v1385 = vunpack.c.0.s8 %v1384
        %v1386 = vlaneseq
        %v1387 = vshrl.u32 %v1386, 7
        %v1388 = vsub.s32 %v1385, %v1387
        %v1389 = vrot.slane %v1381, %v1388
        %v1391 = vunpack.c.l.s4 1934713408
        %v1392 = vunpack.c.0.s8 %v1391
        %v1393 = vlaneseq
        %v1394 = vshrl.u32 %v1393, 7
        %v1395 = vsub.s32 %v1392, %v1394
        %v1396 = vrot.slane %v1382, %v1395
        %v1397 = vcombine.low %v1341, %v1373
        %v1398 = vcombine.high %v1341, %v1373
        %v1399 = vcombine.low %v1348, %v1380
        %v1400 = vcombine.high %v1348, %v1380
        %v1401 = vcombine.low %v1357, %v1389
        %v1402 = vcombine.high %v1357, %v1389
        %v1403 = vcombine.low %v1364, %v1396
        %v1404 = vcombine.high %v1364, %v1396
        %v1405 = vcombine.high %v1089, 0.0
        %v1407 = vunpack.c.l.s4 1983009808
        %v1408 = vunpack.c.0.s8 %v1407
        %v1409 = vlaneseq
        %v1410 = vshrl.u32 %v1409, 7
        %v1411 = vsub.s32 %v1408, %v1410
        %v1412 = vrot.slane %v1089, %v1411
        %v1414 = vunpack.c.l.s4 1983009808
        %v1415 = vunpack.c.0.s8 %v1414
        %v1416 = vlaneseq
        %v1417 = vshrl.u32 %v1416, 7
        %v1418 = vsub.s32 %v1415, %v1417
        %v1419 = vrot.slane %v1405, %v1418
        %v1420 = vcombine.high %v1094, 0.0
        %v1422 = vunpack.c.l.s4 1983009808
        %v1423 = vunpack.c.0.s8 %v1422
        %v1424 = vlaneseq
        %v1425 = vshrl.u32 %v1424, 7
        %v1426 = vsub.s32 %v1423, %v1425
        %v1427 = vrot.slane %v1094, %v1426
        %v1429 = vunpack.c.l.s4 1983009808
        %v1430 = vunpack.c.0.s8 %v1429
        %v1431 = vlaneseq
        %v1432 = vshrl.u32 %v1431, 7
        %v1433 = vsub.s32 %v1430, %v1432
        %v1434 = vrot.slane %v1420, %v1433
        %v1435 = vcombine.low %v1412, %v1427
        %v1436 = vcombine.high %v1412, %v1427
        %v1438 = vunpack.c.l.s4 1934713408
        %v1439 = vunpack.c.0.s8 %v1438
        %v1440 = vlaneseq
        %v1441 = vshrl.u32 %v1440, 7
        %v1442 = vsub.s32 %v1439, %v1441
        %v1443 = vrot.slane %v1435, %v1442
        %v1445 = vunpack.c.l.s4 1934713408
        %v1446 = vunpack.c.0.s8 %v1445
        %v1447 = vlaneseq
        %v1448 = vshrl.u32 %v1447, 7
        %v1449 = vsub.s32 %v1446, %v1448
        %v1450 = vrot.slane %v1436, %v1449
        %v1451 = vcombine.low %v1419, %v1434
        %v1452 = vcombine.high %v1419, %v1434
        %v1454 = vunpack.c.l.s4 1934713408
        %v1455 = vunpack.c.0.s8 %v1454
        %v1456 = vlaneseq
        %v1457 = vshrl.u32 %v1456, 7
        %v1458 = vsub.s32 %v1455, %v1457
        %v1459 = vrot.slane %v1451, %v1458
        %v1461 = vunpack.c.l.s4 1934713408
        %v1462 = vunpack.c.0.s8 %v1461
        %v1463 = vlaneseq
        %v1464 = vshrl.u32 %v1463, 7
        %v1465 = vsub.s32 %v1462, %v1464
        %v1466 = vrot.slane %v1452, %v1465
        %v1467 = vcombine.high %v1443, 0.0
        %v1468 = vcombine.high %v1450, 0.0
        %v1469 = vcombine.high %v1459, 0.0
        %v1470 = vcombine.high %v1466, 0.0
        %v1471 = vcombine.low %v1011, %v1021
        %v1472 = vcombine.high %v1011, %v1021
        %v1474 = vunpack.c.l.s4 1983009808
        %v1475 = vunpack.c.0.s8 %v1474
        %v1476 = vlaneseq
        %v1477 = vshrl.u32 %v1476, 7
        %v1478 = vsub.s32 %v1475, %v1477
        %v1479 = vrot.slane %v1471, %v1478
        %v1481 = vunpack.c.l.s4 1983009808
        %v1482 = vunpack.c.0.s8 %v1481
        %v1483 = vlaneseq
        %v1484 = vshrl.u32 %v1483, 7
        %v1485 = vsub.s32 %v1482, %v1484
        %v1486 = vrot.slane %v1472, %v1485
        %v1487 = vcombine.low %v1016, %v1026
        %v1488 = vcombine.high %v1016, %v1026
        %v1490 = vunpack.c.l.s4 1983009808
        %v1491 = vunpack.c.0.s8 %v1490
        %v1492 = vlaneseq
        %v1493 = vshrl.u32 %v1492, 7
        %v1494 = vsub.s32 %v1491, %v1493
        %v1495 = vrot.slane %v1487, %v1494
        %v1497 = vunpack.c.l.s4 1983009808
        %v1498 = vunpack.c.0.s8 %v1497
        %v1499 = vlaneseq
        %v1500 = vshrl.u32 %v1499, 7
        %v1501 = vsub.s32 %v1498, %v1500
        %v1502 = vrot.slane %v1488, %v1501
        %v1503 = vcombine.low %v1031, %v1041
        %v1504 = vcombine.high %v1031, %v1041
        %v1506 = vunpack.c.l.s4 1983009808
        %v1507 = vunpack.c.0.s8 %v1506
        %v1508 = vlaneseq
        %v1509 = vshrl.u32 %v1508, 7
        %v1510 = vsub.s32 %v1507, %v1509
        %v1511 = vrot.slane %v1503, %v1510
        %v1513 = vunpack.c.l.s4 1983009808
        %v1514 = vunpack.c.0.s8 %v1513
        %v1515 = vlaneseq
        %v1516 = vshrl.u32 %v1515, 7
        %v1517 = vsub.s32 %v1514, %v1516
        %v1518 = vrot.slane %v1504, %v1517
        %v1519 = vcombine.low %v1036, %v1046
        %v1520 = vcombine.high %v1036, %v1046
        %v1522 = vunpack.c.l.s4 1983009808
        %v1523 = vunpack.c.0.s8 %v1522
        %v1524 = vlaneseq
        %v1525 = vshrl.u32 %v1524, 7
        %v1526 = vsub.s32 %v1523, %v1525
        %v1527 = vrot.slane %v1519, %v1526
        %v1529 = vunpack.c.l.s4 1983009808
        %v1530 = vunpack.c.0.s8 %v1529
        %v1531 = vlaneseq
        %v1532 = vshrl.u32 %v1531, 7
        %v1533 = vsub.s32 %v1530, %v1532
        %v1534 = vrot.slane %v1520, %v1533
        %v1535 = vcombine.low %v1479, %v1495
        %v1536 = vcombine.high %v1479, %v1495
        %v1538 = vunpack.c.l.s4 1934713408
        %v1539 = vunpack.c.0.s8 %v1538
        %v1540 = vlaneseq
        %v1541 = vshrl.u32 %v1540, 7
        %v1542 = vsub.s32 %v1539, %v1541
        %v1543 = vrot.slane %v1535, %v1542
        %v1545 = vunpack.c.l.s4 1934713408
        %v1546 = vunpack.c.0.s8 %v1545
        %v1547 = vlaneseq
        %v1548 = vshrl.u32 %v1547, 7
        %v1549 = vsub.s32 %v1546, %v1548
        %v1550 = vrot.slane %v1536, %v1549
        %v1551 = vcombine.low %v1486, %v1502
        %v1552 = vcombine.high %v1486, %v1502
        %v1554 = vunpack.c.l.s4 1934713408
        %v1555 = vunpack.c.0.s8 %v1554
        %v1556 = vlaneseq
        %v1557 = vshrl.u32 %v1556, 7
        %v1558 = vsub.s32 %v1555, %v1557
        %v1559 = vrot.slane %v1551, %v1558
        %v1561 = vunpack.c.l.s4 1934713408
        %v1562 = vunpack.c.0.s8 %v1561
        %v1563 = vlaneseq
        %v1564 = vshrl.u32 %v1563, 7
        %v1565 = vsub.s32 %v1562, %v1564
        %v1566 = vrot.slane %v1552, %v1565
        %v1567 = vcombine.low %v1511, %v1527
        %v1568 = vcombine.high %v1511, %v1527
        %v1570 = vunpack.c.l.s4 1934713408
        %v1571 = vunpack.c.0.s8 %v1570
        %v1572 = vlaneseq
        %v1573 = vshrl.u32 %v1572, 7
        %v1574 = vsub.s32 %v1571, %v1573
        %v1575 = vrot.slane %v1567, %v1574
        %v1577 = vunpack.c.l.s4 1934713408
        %v1578 = vunpack.c.0.s8 %v1577
        %v1579 = vlaneseq
        %v1580 = vshrl.u32 %v1579, 7
        %v1581 = vsub.s32 %v1578, %v1580
        %v1582 = vrot.slane %v1568, %v1581
        %v1583 = vcombine.low %v1518, %v1534
        %v1584 = vcombine.high %v1518, %v1534
        %v1586 = vunpack.c.l.s4 1934713408
        %v1587 = vunpack.c.0.s8 %v1586
        %v1588 = vlaneseq
        %v1589 = vshrl.u32 %v1588, 7
        %v1590 = vsub.s32 %v1587, %v1589
        %v1591 = vrot.slane %v1583, %v1590
        %v1593 = vunpack.c.l.s4 1934713408
        %v1594 = vunpack.c.0.s8 %v1593
        %v1595 = vlaneseq
        %v1596 = vshrl.u32 %v1595, 7
        %v1597 = vsub.s32 %v1594, %v1596
        %v1598 = vrot.slane %v1584, %v1597
        %v1599 = vcombine.low %v1543, %v1575
        %v1600 = vcombine.high %v1543, %v1575
        %v1601 = vcombine.low %v1550, %v1582
        %v1602 = vcombine.high %v1550, %v1582
        %v1603 = vcombine.low %v1559, %v1591
        %v1604 = vcombine.high %v1559, %v1591
        %v1605 = vcombine.low %v1566, %v1598
        %v1606 = vcombine.high %v1566, %v1598
        %v1607 = vcombine.low %v1051, %v1061
        %v1608 = vcombine.high %v1051, %v1061
        %v1610 = vunpack.c.l.s4 1983009808
        %v1611 = vunpack.c.0.s8 %v1610
        %v1612 = vlaneseq
        %v1613 = vshrl.u32 %v1612, 7
        %v1614 = vsub.s32 %v1611, %v1613
        %v1615 = vrot.slane %v1607, %v1614
        %v1617 = vunpack.c.l.s4 1983009808
        %v1618 = vunpack.c.0.s8 %v1617
        %v1619 = vlaneseq
        %v1620 = vshrl.u32 %v1619, 7
        %v1621 = vsub.s32 %v1618, %v1620
        %v1622 = vrot.slane %v1608, %v1621
        %v1623 = vcombine.low %v1056, %v1066
        %v1624 = vcombine.high %v1056, %v1066
        %v1626 = vunpack.c.l.s4 1983009808
        %v1627 = vunpack.c.0.s8 %v1626
        %v1628 = vlaneseq
        %v1629 = vshrl.u32 %v1628, 7
        %v1630 = vsub.s32 %v1627, %v1629
        %v1631 = vrot.slane %v1623, %v1630
        %v1633 = vunpack.c.l.s4 1983009808
        %v1634 = vunpack.c.0.s8 %v1633
        %v1635 = vlaneseq
        %v1636 = vshrl.u32 %v1635, 7
        %v1637 = vsub.s32 %v1634, %v1636
        %v1638 = vrot.slane %v1624, %v1637
        %v1639 = vcombine.low %v1071, %v1081
        %v1640 = vcombine.high %v1071, %v1081
        %v1642 = vunpack.c.l.s4 1983009808
        %v1643 = vunpack.c.0.s8 %v1642
        %v1644 = vlaneseq
        %v1645 = vshrl.u32 %v1644, 7
        %v1646 = vsub.s32 %v1643, %v1645
        %v1647 = vrot.slane %v1639, %v1646
        %v1649 = vunpack.c.l.s4 1983009808
        %v1650 = vunpack.c.0.s8 %v1649
        %v1651 = vlaneseq
        %v1652 = vshrl.u32 %v1651, 7
        %v1653 = vsub.s32 %v1650, %v1652
        %v1654 = vrot.slane %v1640, %v1653
        %v1655 = vcombine.low %v1076, %v1086
        %v1656 = vcombine.high %v1076, %v1086
        %v1658 = vunpack.c.l.s4 1983009808
        %v1659 = vunpack.c.0.s8 %v1658
        %v1660 = vlaneseq
        %v1661 = vshrl.u32 %v1660, 7
        %v1662 = vsub.s32 %v1659, %v1661
        %v1663 = vrot.slane %v1655, %v1662
        %v1665 = vunpack.c.l.s4 1983009808
        %v1666 = vunpack.c.0.s8 %v1665
        %v1667 = vlaneseq
        %v1668 = vshrl.u32 %v1667, 7
        %v1669 = vsub.s32 %v1666, %v1668
        %v1670 = vrot.slane %v1656, %v1669
        %v1671 = vcombine.low %v1615, %v1631
        %v1672 = vcombine.high %v1615, %v1631
        %v1674 = vunpack.c.l.s4 1934713408
        %v1675 = vunpack.c.0.s8 %v1674
        %v1676 = vlaneseq
        %v1677 = vshrl.u32 %v1676, 7
        %v1678 = vsub.s32 %v1675, %v1677
        %v1679 = vrot.slane %v1671, %v1678
        %v1681 = vunpack.c.l.s4 1934713408
        %v1682 = vunpack.c.0.s8 %v1681
        %v1683 = vlaneseq
        %v1684 = vshrl.u32 %v1683, 7
        %v1685 = vsub.s32 %v1682, %v1684
        %v1686 = vrot.slane %v1672, %v1685
        %v1687 = vcombine.low %v1622, %v1638
        %v1688 = vcombine.high %v1622, %v1638
        %v1690 = vunpack.c.l.s4 1934713408
        %v1691 = vunpack.c.0.s8 %v1690
        %v1692 = vlaneseq
        %v1693 = vshrl.u32 %v1692, 7
        %v1694 = vsub.s32 %v1691, %v1693
        %v1695 = vrot.slane %v1687, %v1694
        %v1697 = vunpack.c.l.s4 1934713408
        %v1698 = vunpack.c.0.s8 %v1697
        %v1699 = vlaneseq
        %v1700 = vshrl.u32 %v1699, 7
        %v1701 = vsub.s32 %v1698, %v1700
        %v1702 = vrot.slane %v1688, %v1701
        %v1703 = vcombine.low %v1647, %v1663
        %v1704 = vcombine.high %v1647, %v1663
        %v1706 = vunpack.c.l.s4 1934713408
        %v1707 = vunpack.c.0.s8 %v1706
        %v1708 = vlaneseq
        %v1709 = vshrl.u32 %v1708, 7
        %v1710 = vsub.s32 %v1707, %v1709
        %v1711 = vrot.slane %v1703, %v1710
        %v1713 = vunpack.c.l.s4 1934713408
        %v1714 = vunpack.c.0.s8 %v1713
        %v1715 = vlaneseq
        %v1716 = vshrl.u32 %v1715, 7
        %v1717 = vsub.s32 %v1714, %v1716
        %v1718 = vrot.slane %v1704, %v1717
        %v1719 = vcombine.low %v1654, %v1670
        %v1720 = vcombine.high %v1654, %v1670
        %v1722 = vunpack.c.l.s4 1934713408
        %v1723 = vunpack.c.0.s8 %v1722
        %v1724 = vlaneseq
        %v1725 = vshrl.u32 %v1724, 7
        %v1726 = vsub.s32 %v1723, %v1725
        %v1727 = vrot.slane %v1719, %v1726
        %v1729 = vunpack.c.l.s4 1934713408
        %v1730 = vunpack.c.0.s8 %v1729
        %v1731 = vlaneseq
        %v1732 = vshrl.u32 %v1731, 7
        %v1733 = vsub.s32 %v1730, %v1732
        %v1734 = vrot.slane %v1720, %v1733
        %v1735 = vcombine.low %v1679, %v1711
        %v1736 = vcombine.high %v1679, %v1711
        %v1737 = vcombine.low %v1686, %v1718
        %v1738 = vcombine.high %v1686, %v1718
        %v1739 = vcombine.low %v1695, %v1727
        %v1740 = vcombine.high %v1695, %v1727
        %v1741 = vcombine.low %v1702, %v1734
        %v1742 = vcombine.high %v1702, %v1734
        %v1743 = vcombine.high %v1091, 0.0
        %v1745 = vunpack.c.l.s4 1983009808
        %v1746 = vunpack.c.0.s8 %v1745
        %v1747 = vlaneseq
        %v1748 = vshrl.u32 %v1747, 7
        %v1749 = vsub.s32 %v1746, %v1748
        %v1750 = vrot.slane %v1091, %v1749
        %v1752 = vunpack.c.l.s4 1983009808
        %v1753 = vunpack.c.0.s8 %v1752
        %v1754 = vlaneseq
        %v1755 = vshrl.u32 %v1754, 7
        %v1756 = vsub.s32 %v1753, %v1755
        %v1757 = vrot.slane %v1743, %v1756
        %v1758 = vcombine.high %v1096, 0.0
        %v1760 = vunpack.c.l.s4 1983009808
        %v1761 = vunpack.c.0.s8 %v1760
        %v1762 = vlaneseq
        %v1763 = vshrl.u32 %v1762, 7
        %v1764 = vsub.s32 %v1761, %v1763
        %v1765 = vrot.slane %v1096, %v1764
        %v1767 = vunpack.c.l.s4 1983009808
        %v1768 = vunpack.c.0.s8 %v1767
        %v1769 = vlaneseq
        %v1770 = vshrl.u32 %v1769, 7
        %v1771 = vsub.s32 %v1768, %v1770
        %v1772 = vrot.slane %v1758, %v1771
        %v1773 = vcombine.low %v1750, %v1765
        %v1774 = vcombine.high %v1750, %v1765
        %v1776 = vunpack.c.l.s4 1934713408
        %v1777 = vunpack.c.0.s8 %v1776
        %v1778 = vlaneseq
        %v1779 = vshrl.u32 %v1778, 7
        %v1780 = vsub.s32 %v1777, %v1779
        %v1781 = vrot.slane %v1773, %v1780
        %v1783 = vunpack.c.l.s4 1934713408
        %v1784 = vunpack.c.0.s8 %v1783
        %v1785 = vlaneseq
        %v1786 = vshrl.u32 %v1785, 7
        %v1787 = vsub.s32 %v1784, %v1786
        %v1788 = vrot.slane %v1774, %v1787
        %v1789 = vcombine.low %v1757, %v1772
        %v1790 = vcombine.high %v1757, %v1772
        %v1792 = vunpack.c.l.s4 1934713408
        %v1793 = vunpack.c.0.s8 %v1792
        %v1794 = vlaneseq
        %v1795 = vshrl.u32 %v1794, 7
        %v1796 = vsub.s32 %v1793, %v1795
        %v1797 = vrot.slane %v1789, %v1796
        %v1799 = vunpack.c.l.s4 1934713408
        %v1800 = vunpack.c.0.s8 %v1799
        %v1801 = vlaneseq
        %v1802 = vshrl.u32 %v1801, 7
        %v1803 = vsub.s32 %v1800, %v1802
        %v1804 = vrot.slane %v1790, %v1803
        %v1805 = vcombine.high %v1781, 0.0
        %v1806 = vcombine.high %v1788, 0.0
        %v1807 = vcombine.high %v1797, 0.0
        %v1808 = vcombine.high %v1804, 0.0
        %vm1809 = vcmask 1045504
        %v1810 = vrot.slane %v190, 2
        %v1811 = vrot.slane %v192, 2
        %v1812 = vsel %vm1809, %v1810, %v1811
        %v1813 = vrot.slane %v194, 2
        %v1814 = vsel %vm1809, %v1811, %v1813
        %v1815 = vrot.slane %v199, 2
        %v1816 = vrot.slane %v201, 2
        %v1817 = vsel %vm1809, %v1815, %v1816
        %v1818 = vrot.slane %v974, 2
        %v1819 = vsel %vm1809, %v1816, %v1818
        %v1820 = vrot.slane %v205, 2
        %v1821 = vrot.slane %v207, 2
        %v1822 = vsel %vm1809, %v1820, %v1821
        %v1823 = vrot.slane %v976, 2
        %v1824 = vsel %vm1809, %v1821, %v1823
        %v1825 = vrot.slane %v211, 2
        %v1826 = vrot.slane %v213, 2
        %v1827 = vsel %vm1809, %v1825, %v1826
        %v1828 = vrot.slane %v978, 2
        %v1829 = vsel %vm1809, %v1826, %v1828
        %v1830 = vrot.slane %v217, 2
        %v1831 = vrot.slane %v219, 2
        %v1832 = vsel %vm1809, %v1830, %v1831
        %v1833 = vrot.slane %v980, 2
        %v1834 = vsel %vm1809, %v1831, %v1833
        %v1835 = vrot.slane %v223, 2
        %v1836 = vrot.slane %v225, 2
        %v1837 = vsel %vm1809, %v1835, %v1836
        %v1838 = vrot.slane %v982, 2
        %v1839 = vsel %vm1809, %v1836, %v1838
        %v1840 = vrot.slane %v229, 2
        %v1841 = vrot.slane %v231, 2
        %v1842 = vsel %vm1809, %v1840, %v1841
        %v1843 = vrot.slane %v984, 2
        %v1844 = vsel %vm1809, %v1841, %v1843
        %v1845 = vrot.slane %v235, 2
        %v1846 = vrot.slane %v237, 2
        %v1847 = vsel %vm1809, %v1845, %v1846
        %v1848 = vrot.slane %v986, 2
        %v1849 = vsel %vm1809, %v1846, %v1848
        %v1850 = vrot.slane %v241, 2
        %v1851 = vrot.slane %v243, 2
        %v1852 = vsel %vm1809, %v1850, %v1851
        %v1853 = vrot.slane %v988, 2
        %v1854 = vsel %vm1809, %v1851, %v1853
        %v1855 = vrot.slane %v247, 2
        %v1856 = vrot.slane %v249, 2
        %v1857 = vsel %vm1809, %v1855, %v1856
        %v1858 = vrot.slane %v990, 2
        %v1859 = vsel %vm1809, %v1856, %v1858
        %v1860 = vrot.slane %v253, 2
        %v1861 = vrot.slane %v255, 2
        %v1862 = vsel %vm1809, %v1860, %v1861
        %v1863 = vrot.slane %v992, 2
        %v1864 = vsel %vm1809, %v1861, %v1863
        %v1865 = vrot.slane %v259, 2
        %v1866 = vrot.slane %v261, 2
        %v1867 = vsel %vm1809, %v1865, %v1866
        %v1868 = vrot.slane %v994, 2
        %v1869 = vsel %vm1809, %v1866, %v1868
        %v1870 = vrot.slane %v265, 2
        %v1871 = vrot.slane %v267, 2
        %v1872 = vsel %vm1809, %v1870, %v1871
        %v1873 = vrot.slane %v996, 2
        %v1874 = vsel %vm1809, %v1871, %v1873
        %v1875 = vrot.slane %v271, 2
        %v1876 = vrot.slane %v273, 2
        %v1877 = vsel %vm1809, %v1875, %v1876
        %v1878 = vrot.slane %v998, 2
        %v1879 = vsel %vm1809, %v1876, %v1878
        %v1880 = vrot.slane %v277, 2
        %v1881 = vrot.slane %v279, 2
        %v1882 = vsel %vm1809, %v1880, %v1881
        %v1883 = vrot.slane %v1000, 2
        %v1884 = vsel %vm1809, %v1881, %v1883
        %v1885 = vrot.slane %v283, 2
        %v1886 = vrot.slane %v285, 2
        %v1887 = vsel %vm1809, %v1885, %v1886
        %v1888 = vrot.slane %v1002, 2
        %v1889 = vsel %vm1809, %v1886, %v1888
        %v1890 = vrot.slane %v191, 2
        %v1891 = vrot.slane %v193, 2
        %v1892 = vsel %vm1809, %v1890, %v1891
        %v1893 = vrot.slane %v195, 2
        %v1894 = vsel %vm1809, %v1891, %v1893
        %v1895 = vrot.slane %v291, 2
        %v1896 = vrot.slane %v293, 2
        %v1897 = vsel %vm1809, %v1895, %v1896
        %v1898 = vrot.slane %v1005, 2
        %v1899 = vsel %vm1809, %v1896, %v1898
        %v1936 = vcombine.low %v1812, %v1822
        %v1937 = vcombine.high %v1812, %v1822
        %v1939 = vunpack.c.l.s4 1983009808
        %v1940 = vunpack.c.0.s8 %v1939
        %v1941 = vlaneseq
        %v1942 = vshrl.u32 %v1941, 7
        %v1943 = vsub.s32 %v1940, %v1942
        %v1944 = vrot.slane %v1936, %v1943
        %v1946 = vunpack.c.l.s4 1983009808
        %v1947 = vunpack.c.0.s8 %v1946
        %v1948 = vlaneseq
        %v1949 = vshrl.u32 %v1948, 7
        %v1950 = vsub.s32 %v1947, %v1949
        %v1951 = vrot.slane %v1937, %v1950
        %v1952 = vcombine.low %v1817, %v1827
        %v1953 = vcombine.high %v1817, %v1827
        %v1955 = vunpack.c.l.s4 1983009808
        %v1956 = vunpack.c.0.s8 %v1955
        %v1957 = vlaneseq
        %v1958 = vshrl.u32 %v1957, 7
        %v1959 = vsub.s32 %v1956, %v1958
        %v1960 = vrot.slane %v1952, %v1959
        %v1962 = vunpack.c.l.s4 1983009808
        %v1963 = vunpack.c.0.s8 %v1962
        %v1964 = vlaneseq
        %v1965 = vshrl.u32 %v1964, 7
        %v1966 = vsub.s32 %v1963, %v1965
        %v1967 = vrot.slane %v1953, %v1966
        %v1968 = vcombine.low %v1832, %v1842
        %v1969 = vcombine.high %v1832, %v1842
        %v1971 = vunpack.c.l.s4 1983009808
        %v1972 = vunpack.c.0.s8 %v1971
        %v1973 = vlaneseq
        %v1974 = vshrl.u32 %v1973, 7
        %v1975 = vsub.s32 %v1972, %v1974
        %v1976 = vrot.slane %v1968, %v1975
        %v1978 = vunpack.c.l.s4 1983009808
        %v1979 = vunpack.c.0.s8 %v1978
        %v1980 = vlaneseq
        %v1981 = vshrl.u32 %v1980, 7
        %v1982 = vsub.s32 %v1979, %v1981
        %v1983 = vrot.slane %v1969, %v1982
        %v1984 = vcombine.low %v1837, %v1847
        %v1985 = vcombine.high %v1837, %v1847
        %v1987 = vunpack.c.l.s4 1983009808
        %v1988 = vunpack.c.0.s8 %v1987
        %v1989 = vlaneseq
        %v1990 = vshrl.u32 %v1989, 7
        %v1991 = vsub.s32 %v1988, %v1990
        %v1992 = vrot.slane %v1984, %v1991
        %v1994 = vunpack.c.l.s4 1983009808
        %v1995 = vunpack.c.0.s8 %v1994
        %v1996 = vlaneseq
        %v1997 = vshrl.u32 %v1996, 7
        %v1998 = vsub.s32 %v1995, %v1997
        %v1999 = vrot.slane %v1985, %v1998
        %v2000 = vcombine.low %v1944, %v1960
        %v2001 = vcombine.high %v1944, %v1960
        %v2003 = vunpack.c.l.s4 1934713408
        %v2004 = vunpack.c.0.s8 %v2003
        %v2005 = vlaneseq
        %v2006 = vshrl.u32 %v2005, 7
        %v2007 = vsub.s32 %v2004, %v2006
        %v2008 = vrot.slane %v2000, %v2007
        %v2010 = vunpack.c.l.s4 1934713408
        %v2011 = vunpack.c.0.s8 %v2010
        %v2012 = vlaneseq
        %v2013 = vshrl.u32 %v2012, 7
        %v2014 = vsub.s32 %v2011, %v2013
        %v2015 = vrot.slane %v2001, %v2014
        %v2016 = vcombine.low %v1951, %v1967
        %v2017 = vcombine.high %v1951, %v1967
        %v2019 = vunpack.c.l.s4 1934713408
        %v2020 = vunpack.c.0.s8 %v2019
        %v2021 = vlaneseq
        %v2022 = vshrl.u32 %v2021, 7
        %v2023 = vsub.s32 %v2020, %v2022
        %v2024 = vrot.slane %v2016, %v2023
        %v2026 = vunpack.c.l.s4 1934713408
        %v2027 = vunpack.c.0.s8 %v2026
        %v2028 = vlaneseq
        %v2029 = vshrl.u32 %v2028, 7
        %v2030 = vsub.s32 %v2027, %v2029
        %v2031 = vrot.slane %v2017, %v2030
        %v2032 = vcombine.low %v1976, %v1992
        %v2033 = vcombine.high %v1976, %v1992
        %v2035 = vunpack.c.l.s4 1934713408
        %v2036 = vunpack.c.0.s8 %v2035
        %v2037 = vlaneseq
        %v2038 = vshrl.u32 %v2037, 7
        %v2039 = vsub.s32 %v2036, %v2038
        %v2040 = vrot.slane %v2032, %v2039
        %v2042 = vunpack.c.l.s4 1934713408
        %v2043 = vunpack.c.0.s8 %v2042
        %v2044 = vlaneseq
        %v2045 = vshrl.u32 %v2044, 7
        %v2046 = vsub.s32 %v2043, %v2045
        %v2047 = vrot.slane %v2033, %v2046
        %v2048 = vcombine.low %v1983, %v1999
        %v2049 = vcombine.high %v1983, %v1999
        %v2051 = vunpack.c.l.s4 1934713408
        %v2052 = vunpack.c.0.s8 %v2051
        %v2053 = vlaneseq
        %v2054 = vshrl.u32 %v2053, 7
        %v2055 = vsub.s32 %v2052, %v2054
        %v2056 = vrot.slane %v2048, %v2055
        %v2058 = vunpack.c.l.s4 1934713408
        %v2059 = vunpack.c.0.s8 %v2058
        %v2060 = vlaneseq
        %v2061 = vshrl.u32 %v2060, 7
        %v2062 = vsub.s32 %v2059, %v2061
        %v2063 = vrot.slane %v2049, %v2062
        %v2064 = vcombine.low %v2008, %v2040
        %v2065 = vcombine.high %v2008, %v2040
        %v2066 = vcombine.low %v2015, %v2047
        %v2067 = vcombine.high %v2015, %v2047
        %v2068 = vcombine.low %v2024, %v2056
        %v2069 = vcombine.high %v2024, %v2056
        %v2070 = vcombine.low %v2031, %v2063
        %v2071 = vcombine.high %v2031, %v2063
        %v2072 = vcombine.low %v1852, %v1862
        %v2073 = vcombine.high %v1852, %v1862
        %v2075 = vunpack.c.l.s4 1983009808
        %v2076 = vunpack.c.0.s8 %v2075
        %v2077 = vlaneseq
        %v2078 = vshrl.u32 %v2077, 7
        %v2079 = vsub.s32 %v2076, %v2078
        %v2080 = vrot.slane %v2072, %v2079
        %v2082 = vunpack.c.l.s4 1983009808
        %v2083 = vunpack.c.0.s8 %v2082
        %v2084 = vlaneseq
        %v2085 = vshrl.u32 %v2084, 7
        %v2086 = vsub.s32 %v2083, %v2085
        %v2087 = vrot.slane %v2073, %v2086
        %v2088 = vcombine.low %v1857, %v1867
        %v2089 = vcombine.high %v1857, %v1867
        %v2091 = vunpack.c.l.s4 1983009808
        %v2092 = vunpack.c.0.s8 %v2091
        %v2093 = vlaneseq
        %v2094 = vshrl.u32 %v2093, 7
        %v2095 = vsub.s32 %v2092, %v2094
        %v2096 = vrot.slane %v2088, %v2095
        %v2098 = vunpack.c.l.s4 1983009808
        %v2099 = vunpack.c.0.s8 %v2098
        %v2100 = vlaneseq
        %v2101 = vshrl.u32 %v2100, 7
        %v2102 = vsub.s32 %v2099, %v2101
        %v2103 = vrot.slane %v2089, %v2102
        %v2104 = vcombine.low %v1872, %v1882
        %v2105 = vcombine.high %v1872, %v1882
        %v2107 = vunpack.c.l.s4 1983009808
        %v2108 = vunpack.c.0.s8 %v2107
        %v2109 = vlaneseq
        %v2110 = vshrl.u32 %v2109, 7
        %v2111 = vsub.s32 %v2108, %v2110
        %v2112 = vrot.slane %v2104, %v2111
        %v2114 = vunpack.c.l.s4 1983009808
        %v2115 = vunpack.c.0.s8 %v2114
        %v2116 = vlaneseq
        %v2117 = vshrl.u32 %v2116, 7
        %v2118 = vsub.s32 %v2115, %v2117
        %v2119 = vrot.slane %v2105, %v2118
        %v2120 = vcombine.low %v1877, %v1887
        %v2121 = vcombine.high %v1877, %v1887
        %v2123 = vunpack.c.l.s4 1983009808
        %v2124 = vunpack.c.0.s8 %v2123
        %v2125 = vlaneseq
        %v2126 = vshrl.u32 %v2125, 7
        %v2127 = vsub.s32 %v2124, %v2126
        %v2128 = vrot.slane %v2120, %v2127
        %v2130 = vunpack.c.l.s4 1983009808
        %v2131 = vunpack.c.0.s8 %v2130
        %v2132 = vlaneseq
        %v2133 = vshrl.u32 %v2132, 7
        %v2134 = vsub.s32 %v2131, %v2133
        %v2135 = vrot.slane %v2121, %v2134
        %v2136 = vcombine.low %v2080, %v2096
        %v2137 = vcombine.high %v2080, %v2096
        %v2139 = vunpack.c.l.s4 1934713408
        %v2140 = vunpack.c.0.s8 %v2139
        %v2141 = vlaneseq
        %v2142 = vshrl.u32 %v2141, 7
        %v2143 = vsub.s32 %v2140, %v2142
        %v2144 = vrot.slane %v2136, %v2143
        %v2146 = vunpack.c.l.s4 1934713408
        %v2147 = vunpack.c.0.s8 %v2146
        %v2148 = vlaneseq
        %v2149 = vshrl.u32 %v2148, 7
        %v2150 = vsub.s32 %v2147, %v2149
        %v2151 = vrot.slane %v2137, %v2150
        %v2152 = vcombine.low %v2087, %v2103
        %v2153 = vcombine.high %v2087, %v2103
        %v2155 = vunpack.c.l.s4 1934713408
        %v2156 = vunpack.c.0.s8 %v2155
        %v2157 = vlaneseq
        %v2158 = vshrl.u32 %v2157, 7
        %v2159 = vsub.s32 %v2156, %v2158
        %v2160 = vrot.slane %v2152, %v2159
        %v2162 = vunpack.c.l.s4 1934713408
        %v2163 = vunpack.c.0.s8 %v2162
        %v2164 = vlaneseq
        %v2165 = vshrl.u32 %v2164, 7
        %v2166 = vsub.s32 %v2163, %v2165
        %v2167 = vrot.slane %v2153, %v2166
        %v2168 = vcombine.low %v2112, %v2128
        %v2169 = vcombine.high %v2112, %v2128
        %v2171 = vunpack.c.l.s4 1934713408
        %v2172 = vunpack.c.0.s8 %v2171
        %v2173 = vlaneseq
        %v2174 = vshrl.u32 %v2173, 7
        %v2175 = vsub.s32 %v2172, %v2174
        %v2176 = vrot.slane %v2168, %v2175
        %v2178 = vunpack.c.l.s4 1934713408
        %v2179 = vunpack.c.0.s8 %v2178
        %v2180 = vlaneseq
        %v2181 = vshrl.u32 %v2180, 7
        %v2182 = vsub.s32 %v2179, %v2181
        %v2183 = vrot.slane %v2169, %v2182
        %v2184 = vcombine.low %v2119, %v2135
        %v2185 = vcombine.high %v2119, %v2135
        %v2187 = vunpack.c.l.s4 1934713408
        %v2188 = vunpack.c.0.s8 %v2187
        %v2189 = vlaneseq
        %v2190 = vshrl.u32 %v2189, 7
        %v2191 = vsub.s32 %v2188, %v2190
        %v2192 = vrot.slane %v2184, %v2191
        %v2194 = vunpack.c.l.s4 1934713408
        %v2195 = vunpack.c.0.s8 %v2194
        %v2196 = vlaneseq
        %v2197 = vshrl.u32 %v2196, 7
        %v2198 = vsub.s32 %v2195, %v2197
        %v2199 = vrot.slane %v2185, %v2198
        %v2200 = vcombine.low %v2144, %v2176
        %v2201 = vcombine.high %v2144, %v2176
        %v2202 = vcombine.low %v2151, %v2183
        %v2203 = vcombine.high %v2151, %v2183
        %v2204 = vcombine.low %v2160, %v2192
        %v2205 = vcombine.high %v2160, %v2192
        %v2206 = vcombine.low %v2167, %v2199
        %v2207 = vcombine.high %v2167, %v2199
        %v2208 = vcombine.high %v1892, 0.0
        %v2210 = vunpack.c.l.s4 1983009808
        %v2211 = vunpack.c.0.s8 %v2210
        %v2212 = vlaneseq
        %v2213 = vshrl.u32 %v2212, 7
        %v2214 = vsub.s32 %v2211, %v2213
        %v2215 = vrot.slane %v1892, %v2214
        %v2217 = vunpack.c.l.s4 1983009808
        %v2218 = vunpack.c.0.s8 %v2217
        %v2219 = vlaneseq
        %v2220 = vshrl.u32 %v2219, 7
        %v2221 = vsub.s32 %v2218, %v2220
        %v2222 = vrot.slane %v2208, %v2221
        %v2223 = vcombine.high %v1897, 0.0
        %v2225 = vunpack.c.l.s4 1983009808
        %v2226 = vunpack.c.0.s8 %v2225
        %v2227 = vlaneseq
        %v2228 = vshrl.u32 %v2227, 7
        %v2229 = vsub.s32 %v2226, %v2228
        %v2230 = vrot.slane %v1897, %v2229
        %v2232 = vunpack.c.l.s4 1983009808
        %v2233 = vunpack.c.0.s8 %v2232
        %v2234 = vlaneseq
        %v2235 = vshrl.u32 %v2234, 7
        %v2236 = vsub.s32 %v2233, %v2235
        %v2237 = vrot.slane %v2223, %v2236
        %v2238 = vcombine.low %v2215, %v2230
        %v2239 = vcombine.high %v2215, %v2230
        %v2241 = vunpack.c.l.s4 1934713408
        %v2242 = vunpack.c.0.s8 %v2241
        %v2243 = vlaneseq
        %v2244 = vshrl.u32 %v2243, 7
        %v2245 = vsub.s32 %v2242, %v2244
        %v2246 = vrot.slane %v2238, %v2245
        %v2248 = vunpack.c.l.s4 1934713408
        %v2249 = vunpack.c.0.s8 %v2248
        %v2250 = vlaneseq
        %v2251 = vshrl.u32 %v2250, 7
        %v2252 = vsub.s32 %v2249, %v2251
        %v2253 = vrot.slane %v2239, %v2252
        %v2254 = vcombine.low %v2222, %v2237
        %v2255 = vcombine.high %v2222, %v2237
        %v2257 = vunpack.c.l.s4 1934713408
        %v2258 = vunpack.c.0.s8 %v2257
        %v2259 = vlaneseq
        %v2260 = vshrl.u32 %v2259, 7
        %v2261 = vsub.s32 %v2258, %v2260
        %v2262 = vrot.slane %v2254, %v2261
        %v2264 = vunpack.c.l.s4 1934713408
        %v2265 = vunpack.c.0.s8 %v2264
        %v2266 = vlaneseq
        %v2267 = vshrl.u32 %v2266, 7
        %v2268 = vsub.s32 %v2265, %v2267
        %v2269 = vrot.slane %v2255, %v2268
        %v2270 = vcombine.high %v2246, 0.0
        %v2271 = vcombine.high %v2253, 0.0
        %v2272 = vcombine.high %v2262, 0.0
        %v2273 = vcombine.high %v2269, 0.0
        %v2274 = vcombine.low %v1814, %v1824
        %v2275 = vcombine.high %v1814, %v1824
        %v2277 = vunpack.c.l.s4 1983009808
        %v2278 = vunpack.c.0.s8 %v2277
        %v2279 = vlaneseq
        %v2280 = vshrl.u32 %v2279, 7
        %v2281 = vsub.s32 %v2278, %v2280
        %v2282 = vrot.slane %v2274, %v2281
        %v2284 = vunpack.c.l.s4 1983009808
        %v2285 = vunpack.c.0.s8 %v2284
        %v2286 = vlaneseq
        %v2287 = vshrl.u32 %v2286, 7
        %v2288 = vsub.s32 %v2285, %v2287
        %v2289 = vrot.slane %v2275, %v2288
        %v2290 = vcombine.low %v1819, %v1829
        %v2291 = vcombine.high %v1819, %v1829
        %v2293 = vunpack.c.l.s4 1983009808
        %v2294 = vunpack.c.0.s8 %v2293
        %v2295 = vlaneseq
        %v2296 = vshrl.u32 %v2295, 7
        %v2297 = vsub.s32 %v2294, %v2296
        %v2298 = vrot.slane %v2290, %v2297
        %v2300 = vunpack.c.l.s4 1983009808
        %v2301 = vunpack.c.0.s8 %v2300
        %v2302 = vlaneseq
        %v2303 = vshrl.u32 %v2302, 7
        %v2304 = vsub.s32 %v2301, %v2303
        %v2305 = vrot.slane %v2291, %v2304
        %v2306 = vcombine.low %v1834, %v1844
        %v2307 = vcombine.high %v1834, %v1844
        %v2309 = vunpack.c.l.s4 1983009808
        %v2310 = vunpack.c.0.s8 %v2309
        %v2311 = vlaneseq
        %v2312 = vshrl.u32 %v2311, 7
        %v2313 = vsub.s32 %v2310, %v2312
        %v2314 = vrot.slane %v2306, %v2313
        %v2316 = vunpack.c.l.s4 1983009808
        %v2317 = vunpack.c.0.s8 %v2316
        %v2318 = vlaneseq
        %v2319 = vshrl.u32 %v2318, 7
        %v2320 = vsub.s32 %v2317, %v2319
        %v2321 = vrot.slane %v2307, %v2320
        %v2322 = vcombine.low %v1839, %v1849
        %v2323 = vcombine.high %v1839, %v1849
        %v2325 = vunpack.c.l.s4 1983009808
        %v2326 = vunpack.c.0.s8 %v2325
        %v2327 = vlaneseq
        %v2328 = vshrl.u32 %v2327, 7
        %v2329 = vsub.s32 %v2326, %v2328
        %v2330 = vrot.slane %v2322, %v2329
        %v2332 = vunpack.c.l.s4 1983009808
        %v2333 = vunpack.c.0.s8 %v2332
        %v2334 = vlaneseq
        %v2335 = vshrl.u32 %v2334, 7
        %v2336 = vsub.s32 %v2333, %v2335
        %v2337 = vrot.slane %v2323, %v2336
        %v2338 = vcombine.low %v2282, %v2298
        %v2339 = vcombine.high %v2282, %v2298
        %v2341 = vunpack.c.l.s4 1934713408
        %v2342 = vunpack.c.0.s8 %v2341
        %v2343 = vlaneseq
        %v2344 = vshrl.u32 %v2343, 7
        %v2345 = vsub.s32 %v2342, %v2344
        %v2346 = vrot.slane %v2338, %v2345
        %v2348 = vunpack.c.l.s4 1934713408
        %v2349 = vunpack.c.0.s8 %v2348
        %v2350 = vlaneseq
        %v2351 = vshrl.u32 %v2350, 7
        %v2352 = vsub.s32 %v2349, %v2351
        %v2353 = vrot.slane %v2339, %v2352
        %v2354 = vcombine.low %v2289, %v2305
        %v2355 = vcombine.high %v2289, %v2305
        %v2357 = vunpack.c.l.s4 1934713408
        %v2358 = vunpack.c.0.s8 %v2357
        %v2359 = vlaneseq
        %v2360 = vshrl.u32 %v2359, 7
        %v2361 = vsub.s32 %v2358, %v2360
        %v2362 = vrot.slane %v2354, %v2361
        %v2364 = vunpack.c.l.s4 1934713408
        %v2365 = vunpack.c.0.s8 %v2364
        %v2366 = vlaneseq
        %v2367 = vshrl.u32 %v2366, 7
        %v2368 = vsub.s32 %v2365, %v2367
        %v2369 = vrot.slane %v2355, %v2368
        %v2370 = vcombine.low %v2314, %v2330
        %v2371 = vcombine.high %v2314, %v2330
        %v2373 = vunpack.c.l.s4 1934713408
        %v2374 = vunpack.c.0.s8 %v2373
        %v2375 = vlaneseq
        %v2376 = vshrl.u32 %v2375, 7
        %v2377 = vsub.s32 %v2374, %v2376
        %v2378 = vrot.slane %v2370, %v2377
        %v2380 = vunpack.c.l.s4 1934713408
        %v2381 = vunpack.c.0.s8 %v2380
        %v2382 = vlaneseq
        %v2383 = vshrl.u32 %v2382, 7
        %v2384 = vsub.s32 %v2381, %v2383
        %v2385 = vrot.slane %v2371, %v2384
        %v2386 = vcombine.low %v2321, %v2337
        %v2387 = vcombine.high %v2321, %v2337
        %v2389 = vunpack.c.l.s4 1934713408
        %v2390 = vunpack.c.0.s8 %v2389
        %v2391 = vlaneseq
        %v2392 = vshrl.u32 %v2391, 7
        %v2393 = vsub.s32 %v2390, %v2392
        %v2394 = vrot.slane %v2386, %v2393
        %v2396 = vunpack.c.l.s4 1934713408
        %v2397 = vunpack.c.0.s8 %v2396
        %v2398 = vlaneseq
        %v2399 = vshrl.u32 %v2398, 7
        %v2400 = vsub.s32 %v2397, %v2399
        %v2401 = vrot.slane %v2387, %v2400
        %v2402 = vcombine.low %v2346, %v2378
        %v2403 = vcombine.high %v2346, %v2378
        %v2404 = vcombine.low %v2353, %v2385
        %v2405 = vcombine.high %v2353, %v2385
        %v2406 = vcombine.low %v2362, %v2394
        %v2407 = vcombine.high %v2362, %v2394
        %v2408 = vcombine.low %v2369, %v2401
        %v2409 = vcombine.high %v2369, %v2401
        %v2410 = vcombine.low %v1854, %v1864
        %v2411 = vcombine.high %v1854, %v1864
        %v2413 = vunpack.c.l.s4 1983009808
        %v2414 = vunpack.c.0.s8 %v2413
        %v2415 = vlaneseq
        %v2416 = vshrl.u32 %v2415, 7
        %v2417 = vsub.s32 %v2414, %v2416
        %v2418 = vrot.slane %v2410, %v2417
        %v2420 = vunpack.c.l.s4 1983009808
        %v2421 = vunpack.c.0.s8 %v2420
        %v2422 = vlaneseq
        %v2423 = vshrl.u32 %v2422, 7
        %v2424 = vsub.s32 %v2421, %v2423
        %v2425 = vrot.slane %v2411, %v2424
        %v2426 = vcombine.low %v1859, %v1869
        %v2427 = vcombine.high %v1859, %v1869
        %v2429 = vunpack.c.l.s4 1983009808
        %v2430 = vunpack.c.0.s8 %v2429
        %v2431 = vlaneseq
        %v2432 = vshrl.u32 %v2431, 7
        %v2433 = vsub.s32 %v2430, %v2432
        %v2434 = vrot.slane %v2426, %v2433
        %v2436 = vunpack.c.l.s4 1983009808
        %v2437 = vunpack.c.0.s8 %v2436
        %v2438 = vlaneseq
        %v2439 = vshrl.u32 %v2438, 7
        %v2440 = vsub.s32 %v2437, %v2439
        %v2441 = vrot.slane %v2427, %v2440
        %v2442 = vcombine.low %v1874, %v1884
        %v2443 = vcombine.high %v1874, %v1884
        %v2445 = vunpack.c.l.s4 1983009808
        %v2446 = vunpack.c.0.s8 %v2445
        %v2447 = vlaneseq
        %v2448 = vshrl.u32 %v2447, 7
        %v2449 = vsub.s32 %v2446, %v2448
        %v2450 = vrot.slane %v2442, %v2449
        %v2452 = vunpack.c.l.s4 1983009808
        %v2453 = vunpack.c.0.s8 %v2452
        %v2454 = vlaneseq
        %v2455 = vshrl.u32 %v2454, 7
        %v2456 = vsub.s32 %v2453, %v2455
        %v2457 = vrot.slane %v2443, %v2456
        %v2458 = vcombine.low %v1879, %v1889
        %v2459 = vcombine.high %v1879, %v1889
        %v2461 = vunpack.c.l.s4 1983009808
        %v2462 = vunpack.c.0.s8 %v2461
        %v2463 = vlaneseq
        %v2464 = vshrl.u32 %v2463, 7
        %v2465 = vsub.s32 %v2462, %v2464
        %v2466 = vrot.slane %v2458, %v2465
        %v2468 = vunpack.c.l.s4 1983009808
        %v2469 = vunpack.c.0.s8 %v2468
        %v2470 = vlaneseq
        %v2471 = vshrl.u32 %v2470, 7
        %v2472 = vsub.s32 %v2469, %v2471
        %v2473 = vrot.slane %v2459, %v2472
        %v2474 = vcombine.low %v2418, %v2434
        %v2475 = vcombine.high %v2418, %v2434
        %v2477 = vunpack.c.l.s4 1934713408
        %v2478 = vunpack.c.0.s8 %v2477
        %v2479 = vlaneseq
        %v2480 = vshrl.u32 %v2479, 7
        %v2481 = vsub.s32 %v2478, %v2480
        %v2482 = vrot.slane %v2474, %v2481
        %v2484 = vunpack.c.l.s4 1934713408
        %v2485 = vunpack.c.0.s8 %v2484
        %v2486 = vlaneseq
        %v2487 = vshrl.u32 %v2486, 7
        %v2488 = vsub.s32 %v2485, %v2487
        %v2489 = vrot.slane %v2475, %v2488
        %v2490 = vcombine.low %v2425, %v2441
        %v2491 = vcombine.high %v2425, %v2441
        %v2493 = vunpack.c.l.s4 1934713408
        %v2494 = vunpack.c.0.s8 %v2493
        %v2495 = vlaneseq
        %v2496 = vshrl.u32 %v2495, 7
        %v2497 = vsub.s32 %v2494, %v2496
        %v2498 = vrot.slane %v2490, %v2497
        %v2500 = vunpack.c.l.s4 1934713408
        %v2501 = vunpack.c.0.s8 %v2500
        %v2502 = vlaneseq
        %v2503 = vshrl.u32 %v2502, 7
        %v2504 = vsub.s32 %v2501, %v2503
        %v2505 = vrot.slane %v2491, %v2504
        %v2506 = vcombine.low %v2450, %v2466
        %v2507 = vcombine.high %v2450, %v2466
        %v2509 = vunpack.c.l.s4 1934713408
        %v2510 = vunpack.c.0.s8 %v2509
        %v2511 = vlaneseq
        %v2512 = vshrl.u32 %v2511, 7
        %v2513 = vsub.s32 %v2510, %v2512
        %v2514 = vrot.slane %v2506, %v2513
        %v2516 = vunpack.c.l.s4 1934713408
        %v2517 = vunpack.c.0.s8 %v2516
        %v2518 = vlaneseq
        %v2519 = vshrl.u32 %v2518, 7
        %v2520 = vsub.s32 %v2517, %v2519
        %v2521 = vrot.slane %v2507, %v2520
        %v2522 = vcombine.low %v2457, %v2473
        %v2523 = vcombine.high %v2457, %v2473
        %v2525 = vunpack.c.l.s4 1934713408
        %v2526 = vunpack.c.0.s8 %v2525
        %v2527 = vlaneseq
        %v2528 = vshrl.u32 %v2527, 7
        %v2529 = vsub.s32 %v2526, %v2528
        %v2530 = vrot.slane %v2522, %v2529
        %v2532 = vunpack.c.l.s4 1934713408
        %v2533 = vunpack.c.0.s8 %v2532
        %v2534 = vlaneseq
        %v2535 = vshrl.u32 %v2534, 7
        %v2536 = vsub.s32 %v2533, %v2535
        %v2537 = vrot.slane %v2523, %v2536
        %v2538 = vcombine.low %v2482, %v2514
        %v2539 = vcombine.high %v2482, %v2514
        %v2540 = vcombine.low %v2489, %v2521
        %v2541 = vcombine.high %v2489, %v2521
        %v2542 = vcombine.low %v2498, %v2530
        %v2543 = vcombine.high %v2498, %v2530
        %v2544 = vcombine.low %v2505, %v2537
        %v2545 = vcombine.high %v2505, %v2537
        %v2546 = vcombine.high %v1894, 0.0
        %v2548 = vunpack.c.l.s4 1983009808
        %v2549 = vunpack.c.0.s8 %v2548
        %v2550 = vlaneseq
        %v2551 = vshrl.u32 %v2550, 7
        %v2552 = vsub.s32 %v2549, %v2551
        %v2553 = vrot.slane %v1894, %v2552
        %v2555 = vunpack.c.l.s4 1983009808
        %v2556 = vunpack.c.0.s8 %v2555
        %v2557 = vlaneseq
        %v2558 = vshrl.u32 %v2557, 7
        %v2559 = vsub.s32 %v2556, %v2558
        %v2560 = vrot.slane %v2546, %v2559
        %v2561 = vcombine.high %v1899, 0.0
        %v2563 = vunpack.c.l.s4 1983009808
        %v2564 = vunpack.c.0.s8 %v2563
        %v2565 = vlaneseq
        %v2566 = vshrl.u32 %v2565, 7
        %v2567 = vsub.s32 %v2564, %v2566
        %v2568 = vrot.slane %v1899, %v2567
        %v2570 = vunpack.c.l.s4 1983009808
        %v2571 = vunpack.c.0.s8 %v2570
        %v2572 = vlaneseq
        %v2573 = vshrl.u32 %v2572, 7
        %v2574 = vsub.s32 %v2571, %v2573
        %v2575 = vrot.slane %v2561, %v2574
        %v2576 = vcombine.low %v2553, %v2568
        %v2577 = vcombine.high %v2553, %v2568
        %v2579 = vunpack.c.l.s4 1934713408
        %v2580 = vunpack.c.0.s8 %v2579
        %v2581 = vlaneseq
        %v2582 = vshrl.u32 %v2581, 7
        %v2583 = vsub.s32 %v2580, %v2582
        %v2584 = vrot.slane %v2576, %v2583
        %v2586 = vunpack.c.l.s4 1934713408
        %v2587 = vunpack.c.0.s8 %v2586
        %v2588 = vlaneseq
        %v2589 = vshrl.u32 %v2588, 7
        %v2590 = vsub.s32 %v2587, %v2589
        %v2591 = vrot.slane %v2577, %v2590
        %v2592 = vcombine.low %v2560, %v2575
        %v2593 = vcombine.high %v2560, %v2575
        %v2595 = vunpack.c.l.s4 1934713408
        %v2596 = vunpack.c.0.s8 %v2595
        %v2597 = vlaneseq
        %v2598 = vshrl.u32 %v2597, 7
        %v2599 = vsub.s32 %v2596, %v2598
        %v2600 = vrot.slane %v2592, %v2599
        %v2602 = vunpack.c.l.s4 1934713408
        %v2603 = vunpack.c.0.s8 %v2602
        %v2604 = vlaneseq
        %v2605 = vshrl.u32 %v2604, 7
        %v2606 = vsub.s32 %v2603, %v2605
        %v2607 = vrot.slane %v2593, %v2606
        %v2608 = vcombine.high %v2584, 0.0
        %v2609 = vcombine.high %v2591, 0.0
        %v2610 = vcombine.high %v2600, 0.0
        %v2611 = vcombine.high %v2607, 0.0
        %v2660 = vrot.slane %v424, 1
        %v2661 = vrot.slane %v560, 1
        %v2662 = vsel %vm1006, %v2660, %v2661
        %v2663 = vrot.slane %v606, 1
        %v2664 = vsel %vm1006, %v2661, %v2663
        %v2665 = vrot.slane %v425, 1
        %v2666 = vrot.slane %v561, 1
        %v2667 = vsel %vm1006, %v2665, %v2666
        %v2668 = vrot.slane %v630, 1
        %v2669 = vsel %vm1006, %v2666, %v2668
        %v2670 = vrot.slane %v426, 1
        %v2671 = vrot.slane %v562, 1
        %v2672 = vsel %vm1006, %v2670, %v2671
        %v2673 = vrot.slane %v613, 1
        %v2674 = vsel %vm1006, %v2671, %v2673
        %v2675 = vrot.slane %v427, 1
        %v2676 = vrot.slane %v563, 1
        %v2677 = vsel %vm1006, %v2675, %v2676
        %v2678 = vrot.slane %v631, 1
        %v2679 = vsel %vm1006, %v2676, %v2678
        %v2680 = vrot.slane %v428, 1
        %v2681 = vrot.slane %v564, 1
        %v2682 = vsel %vm1006, %v2680, %v2681
        %v2683 = vrot.slane %v622, 1
        %v2684 = vsel %vm1006, %v2681, %v2683
        %v2685 = vrot.slane %v429, 1
        %v2686 = vrot.slane %v565, 1
        %v2687 = vsel %vm1006, %v2685, %v2686
        %v2688 = vrot.slane %v632, 1
        %v2689 = vsel %vm1006, %v2686, %v2688
        %v2690 = vrot.slane %v430, 1
        %v2691 = vrot.slane %v566, 1
        %v2692 = vsel %vm1006, %v2690, %v2691
        %v2693 = vrot.slane %v629, 1
        %v2694 = vsel %vm1006, %v2691, %v2693
        %v2695 = vrot.slane %v431, 1
        %v2696 = vrot.slane %v567, 1
        %v2697 = vsel %vm1006, %v2695, %v2696
        %v2698 = vrot.slane %v633, 1
        %v2699 = vsel %vm1006, %v2696, %v2698
        %v2700 = vrot.slane %v762, 1
        %v2701 = vrot.slane %v898, 1
        %v2702 = vsel %vm1006, %v2700, %v2701
        %v2703 = vrot.slane %v944, 1
        %v2704 = vsel %vm1006, %v2701, %v2703
        %v2705 = vrot.slane %v763, 1
        %v2706 = vrot.slane %v899, 1
        %v2707 = vsel %vm1006, %v2705, %v2706
        %v2708 = vrot.slane %v968, 1
        %v2709 = vsel %vm1006, %v2706, %v2708
        %v2710 = vrot.slane %v764, 1
        %v2711 = vrot.slane %v900, 1
        %v2712 = vsel %vm1006, %v2710, %v2711
        %v2713 = vrot.slane %v951, 1
        %v2714 = vsel %vm1006, %v2711, %v2713
        %v2715 = vrot.slane %v765, 1
        %v2716 = vrot.slane %v901, 1
        %v2717 = vsel %vm1006, %v2715, %v2716
        %v2718 = vrot.slane %v969, 1
        %v2719 = vsel %vm1006, %v2716, %v2718
        %v2720 = vrot.slane %v766, 1
        %v2721 = vrot.slane %v902, 1
        %v2722 = vsel %vm1006, %v2720, %v2721
        %v2723 = vrot.slane %v960, 1
        %v2724 = vsel %vm1006, %v2721, %v2723
        %v2725 = vrot.slane %v767, 1
        %v2726 = vrot.slane %v903, 1
        %v2727 = vsel %vm1006, %v2725, %v2726
        %v2728 = vrot.slane %v970, 1
        %v2729 = vsel %vm1006, %v2726, %v2728
        %v2730 = vrot.slane %v768, 1
        %v2731 = vrot.slane %v904, 1
        %v2732 = vsel %vm1006, %v2730, %v2731
        %v2733 = vrot.slane %v967, 1
        %v2734 = vsel %vm1006, %v2731, %v2733
        %v2735 = vrot.slane %v769, 1
        %v2736 = vrot.slane %v905, 1
        %v2737 = vsel %vm1006, %v2735, %v2736
        %v2738 = vrot.slane %v971, 1
        %v2739 = vsel %vm1006, %v2736, %v2738
        %2740 = vrot.lane.b32.xlu0 %v2662, 8
        %v2741 = vpop.permute.xlu0 %2740
        %2742 = vrot.lane.b32.xlu0 %v2664, 8
        %v2743 = vpop.permute.xlu0 %2742
        %2744 = vrot.lane.b32.xlu0 %v2667, 8
        %v2745 = vpop.permute.xlu0 %2744
        %2746 = vrot.lane.b32.xlu0 %v2669, 8
        %v2747 = vpop.permute.xlu0 %2746
        %2748 = vrot.lane.b32.xlu0 %v2672, 8
        %v2749 = vpop.permute.xlu0 %2748
        %2750 = vrot.lane.b32.xlu0 %v2674, 8
        %v2751 = vpop.permute.xlu0 %2750
        %2752 = vrot.lane.b32.xlu0 %v2677, 8
        %v2753 = vpop.permute.xlu0 %2752
        %2754 = vrot.lane.b32.xlu0 %v2679, 8
        %v2755 = vpop.permute.xlu0 %2754
        %2756 = vrot.lane.b32.xlu0 %v2682, 8
        %v2757 = vpop.permute.xlu0 %2756
        %2758 = vrot.lane.b32.xlu0 %v2684, 8
        %v2759 = vpop.permute.xlu0 %2758
        %2760 = vrot.lane.b32.xlu0 %v2687, 8
        %v2761 = vpop.permute.xlu0 %2760
        %2762 = vrot.lane.b32.xlu0 %v2689, 8
        %v2763 = vpop.permute.xlu0 %2762
        %2764 = vrot.lane.b32.xlu0 %v2692, 8
        %v2765 = vpop.permute.xlu0 %2764
        %2766 = vrot.lane.b32.xlu0 %v2694, 8
        %v2767 = vpop.permute.xlu0 %2766
        %2768 = vrot.lane.b32.xlu0 %v2697, 8
        %v2769 = vpop.permute.xlu0 %2768
        %2770 = vrot.lane.b32.xlu0 %v2699, 8
        %v2771 = vpop.permute.xlu0 %2770
        %2772 = vrot.lane.b32.xlu0 %v2702, 8
        %v2773 = vpop.permute.xlu0 %2772
        %2774 = vrot.lane.b32.xlu0 %v2704, 8
        %v2775 = vpop.permute.xlu0 %2774
        %2776 = vrot.lane.b32.xlu0 %v2707, 8
        %v2777 = vpop.permute.xlu0 %2776
        %2778 = vrot.lane.b32.xlu0 %v2709, 8
        %v2779 = vpop.permute.xlu0 %2778
        %2780 = vrot.lane.b32.xlu0 %v2712, 8
        %v2781 = vpop.permute.xlu0 %2780
        %2782 = vrot.lane.b32.xlu0 %v2714, 8
        %v2783 = vpop.permute.xlu0 %2782
        %2784 = vrot.lane.b32.xlu0 %v2717, 8
        %v2785 = vpop.permute.xlu0 %2784
        %2786 = vrot.lane.b32.xlu0 %v2719, 8
        %v2787 = vpop.permute.xlu0 %2786
        %2788 = vrot.lane.b32.xlu0 %v2722, 8
        %v2789 = vpop.permute.xlu0 %2788
        %2790 = vrot.lane.b32.xlu0 %v2724, 8
        %v2791 = vpop.permute.xlu0 %2790
        %2792 = vrot.lane.b32.xlu0 %v2727, 8
        %v2793 = vpop.permute.xlu0 %2792
        %2794 = vrot.lane.b32.xlu0 %v2729, 8
        %v2795 = vpop.permute.xlu0 %2794
        %2796 = vrot.lane.b32.xlu0 %v2732, 8
        %v2797 = vpop.permute.xlu0 %2796
        %2798 = vrot.lane.b32.xlu0 %v2734, 8
        %v2799 = vpop.permute.xlu0 %2798
        %2800 = vrot.lane.b32.xlu0 %v2737, 8
        %v2801 = vpop.permute.xlu0 %2800
        %2802 = vrot.lane.b32.xlu0 %v2739, 8
        %v2803 = vpop.permute.xlu0 %2802
        %v2836 = vrot.slane %v424, 2
        %v2837 = vrot.slane %v560, 2
        %v2838 = vsel %vm1809, %v2836, %v2837
        %v2839 = vrot.slane %v606, 2
        %v2840 = vsel %vm1809, %v2837, %v2839
        %v2841 = vrot.slane %v425, 2
        %v2842 = vrot.slane %v561, 2
        %v2843 = vsel %vm1809, %v2841, %v2842
        %v2844 = vrot.slane %v630, 2
        %v2845 = vsel %vm1809, %v2842, %v2844
        %v2846 = vrot.slane %v426, 2
        %v2847 = vrot.slane %v562, 2
        %v2848 = vsel %vm1809, %v2846, %v2847
        %v2849 = vrot.slane %v613, 2
        %v2850 = vsel %vm1809, %v2847, %v2849
        %v2851 = vrot.slane %v427, 2
        %v2852 = vrot.slane %v563, 2
        %v2853 = vsel %vm1809, %v2851, %v2852
        %v2854 = vrot.slane %v631, 2
        %v2855 = vsel %vm1809, %v2852, %v2854
        %v2856 = vrot.slane %v428, 2
        %v2857 = vrot.slane %v564, 2
        %v2858 = vsel %vm1809, %v2856, %v2857
        %v2859 = vrot.slane %v622, 2
        %v2860 = vsel %vm1809, %v2857, %v2859
        %v2861 = vrot.slane %v429, 2
        %v2862 = vrot.slane %v565, 2
        %v2863 = vsel %vm1809, %v2861, %v2862
        %v2864 = vrot.slane %v632, 2
        %v2865 = vsel %vm1809, %v2862, %v2864
        %v2866 = vrot.slane %v430, 2
        %v2867 = vrot.slane %v566, 2
        %v2868 = vsel %vm1809, %v2866, %v2867
        %v2869 = vrot.slane %v629, 2
        %v2870 = vsel %vm1809, %v2867, %v2869
        %v2871 = vrot.slane %v431, 2
        %v2872 = vrot.slane %v567, 2
        %v2873 = vsel %vm1809, %v2871, %v2872
        %v2874 = vrot.slane %v633, 2
        %v2875 = vsel %vm1809, %v2872, %v2874
        %v2876 = vrot.slane %v762, 2
        %v2877 = vrot.slane %v898, 2
        %v2878 = vsel %vm1809, %v2876, %v2877
        %v2879 = vrot.slane %v944, 2
        %v2880 = vsel %vm1809, %v2877, %v2879
        %v2881 = vrot.slane %v763, 2
        %v2882 = vrot.slane %v899, 2
        %v2883 = vsel %vm1809, %v2881, %v2882
        %v2884 = vrot.slane %v968, 2
        %v2885 = vsel %vm1809, %v2882, %v2884
        %v2886 = vrot.slane %v764, 2
        %v2887 = vrot.slane %v900, 2
        %v2888 = vsel %vm1809, %v2886, %v2887
        %v2889 = vrot.slane %v951, 2
        %v2890 = vsel %vm1809, %v2887, %v2889
        %v2891 = vrot.slane %v765, 2
        %v2892 = vrot.slane %v901, 2
        %v2893 = vsel %vm1809, %v2891, %v2892
        %v2894 = vrot.slane %v969, 2
        %v2895 = vsel %vm1809, %v2892, %v2894
        %v2896 = vrot.slane %v766, 2
        %v2897 = vrot.slane %v902, 2
        %v2898 = vsel %vm1809, %v2896, %v2897
        %v2899 = vrot.slane %v960, 2
        %v2900 = vsel %vm1809, %v2897, %v2899
        %v2901 = vrot.slane %v767, 2
        %v2902 = vrot.slane %v903, 2
        %v2903 = vsel %vm1809, %v2901, %v2902
        %v2904 = vrot.slane %v970, 2
        %v2905 = vsel %vm1809, %v2902, %v2904
        %v2906 = vrot.slane %v768, 2
        %v2907 = vrot.slane %v904, 2
        %v2908 = vsel %vm1809, %v2906, %v2907
        %v2909 = vrot.slane %v967, 2
        %v2910 = vsel %vm1809, %v2907, %v2909
        %v2911 = vrot.slane %v769, 2
        %v2912 = vrot.slane %v905, 2
        %v2913 = vsel %vm1809, %v2911, %v2912
        %v2914 = vrot.slane %v971, 2
        %v2915 = vsel %vm1809, %v2912, %v2914
        %2916 = vrot.lane.b32.xlu0 %v2838, 16
        %v2917 = vpop.permute.xlu0 %2916
        %2918 = vrot.lane.b32.xlu0 %v2840, 16
        %v2919 = vpop.permute.xlu0 %2918
        %2920 = vrot.lane.b32.xlu0 %v2843, 16
        %v2921 = vpop.permute.xlu0 %2920
        %2922 = vrot.lane.b32.xlu0 %v2845, 16
        %v2923 = vpop.permute.xlu0 %2922
        %2924 = vrot.lane.b32.xlu0 %v2848, 16
        %v2925 = vpop.permute.xlu0 %2924
        %2926 = vrot.lane.b32.xlu0 %v2850, 16
        %v2927 = vpop.permute.xlu0 %2926
        %2928 = vrot.lane.b32.xlu0 %v2853, 16
        %v2929 = vpop.permute.xlu0 %2928
        %2930 = vrot.lane.b32.xlu0 %v2855, 16
        %v2931 = vpop.permute.xlu0 %2930
        %2932 = vrot.lane.b32.xlu0 %v2858, 16
        %v2933 = vpop.permute.xlu0 %2932
        %2934 = vrot.lane.b32.xlu0 %v2860, 16
        %v2935 = vpop.permute.xlu0 %2934
        %2936 = vrot.lane.b32.xlu0 %v2863, 16
        %v2937 = vpop.permute.xlu0 %2936
        %2938 = vrot.lane.b32.xlu0 %v2865, 16
        %v2939 = vpop.permute.xlu0 %2938
        %2940 = vrot.lane.b32.xlu0 %v2868, 16
        %v2941 = vpop.permute.xlu0 %2940
        %2942 = vrot.lane.b32.xlu0 %v2870, 16
        %v2943 = vpop.permute.xlu0 %2942
        %2944 = vrot.lane.b32.xlu0 %v2873, 16
        %v2945 = vpop.permute.xlu0 %2944
        %2946 = vrot.lane.b32.xlu0 %v2875, 16
        %v2947 = vpop.permute.xlu0 %2946
        %2948 = vrot.lane.b32.xlu0 %v2878, 16
        %v2949 = vpop.permute.xlu0 %2948
        %2950 = vrot.lane.b32.xlu0 %v2880, 16
        %v2951 = vpop.permute.xlu0 %2950
        %2952 = vrot.lane.b32.xlu0 %v2883, 16
        %v2953 = vpop.permute.xlu0 %2952
        %2954 = vrot.lane.b32.xlu0 %v2885, 16
        %v2955 = vpop.permute.xlu0 %2954
        %2956 = vrot.lane.b32.xlu0 %v2888, 16
        %v2957 = vpop.permute.xlu0 %2956
        %2958 = vrot.lane.b32.xlu0 %v2890, 16
        %v2959 = vpop.permute.xlu0 %2958
        %2960 = vrot.lane.b32.xlu0 %v2893, 16
        %v2961 = vpop.permute.xlu0 %2960
        %2962 = vrot.lane.b32.xlu0 %v2895, 16
        %v2963 = vpop.permute.xlu0 %2962
        %2964 = vrot.lane.b32.xlu0 %v2898, 16
        %v2965 = vpop.permute.xlu0 %2964
        %2966 = vrot.lane.b32.xlu0 %v2900, 16
        %v2967 = vpop.permute.xlu0 %2966
        %2968 = vrot.lane.b32.xlu0 %v2903, 16
        %v2969 = vpop.permute.xlu0 %2968
        %2970 = vrot.lane.b32.xlu0 %v2905, 16
        %v2971 = vpop.permute.xlu0 %2970
        %2972 = vrot.lane.b32.xlu0 %v2908, 16
        %v2973 = vpop.permute.xlu0 %2972
        %2974 = vrot.lane.b32.xlu0 %v2910, 16
        %v2975 = vpop.permute.xlu0 %2974
        %2976 = vrot.lane.b32.xlu0 %v2913, 16
        %v2977 = vpop.permute.xlu0 %2976
        %2978 = vrot.lane.b32.xlu0 %v2915, 16
        %v2979 = vpop.permute.xlu0 %2978
        %3044 = vrot.lane.b32.xlu0 %v1261, 24
        %v3045 = vpop.permute.xlu0 %3044
        %3046 = vrot.lane.b32.xlu0 %v1397, 24
        %v3047 = vpop.permute.xlu0 %3046
        %3048 = vrot.lane.b32.xlu0 %v1262, 24
        %v3049 = vpop.permute.xlu0 %3048
        %3050 = vrot.lane.b32.xlu0 %v1398, 24
        %v3051 = vpop.permute.xlu0 %3050
        %3052 = vrot.lane.b32.xlu0 %v1263, 24
        %v3053 = vpop.permute.xlu0 %3052
        %3054 = vrot.lane.b32.xlu0 %v1399, 24
        %v3055 = vpop.permute.xlu0 %3054
        %3056 = vrot.lane.b32.xlu0 %v1264, 24
        %v3057 = vpop.permute.xlu0 %3056
        %3058 = vrot.lane.b32.xlu0 %v1400, 24
        %v3059 = vpop.permute.xlu0 %3058
        %3060 = vrot.lane.b32.xlu0 %v1265, 24
        %v3061 = vpop.permute.xlu0 %3060
        %3062 = vrot.lane.b32.xlu0 %v1401, 24
        %v3063 = vpop.permute.xlu0 %3062
        %3064 = vrot.lane.b32.xlu0 %v1266, 24
        %v3065 = vpop.permute.xlu0 %3064
        %3066 = vrot.lane.b32.xlu0 %v1402, 24
        %v3067 = vpop.permute.xlu0 %3066
        %3068 = vrot.lane.b32.xlu0 %v1267, 24
        %v3069 = vpop.permute.xlu0 %3068
        %3070 = vrot.lane.b32.xlu0 %v1403, 24
        %v3071 = vpop.permute.xlu0 %3070
        %3072 = vrot.lane.b32.xlu0 %v1268, 24
        %v3073 = vpop.permute.xlu0 %3072
        %3074 = vrot.lane.b32.xlu0 %v1404, 24
        %v3075 = vpop.permute.xlu0 %3074
        %3076 = vrot.lane.b32.xlu0 %v1599, 24
        %v3077 = vpop.permute.xlu0 %3076
        %3078 = vrot.lane.b32.xlu0 %v1735, 24
        %v3079 = vpop.permute.xlu0 %3078
        %3080 = vrot.lane.b32.xlu0 %v1600, 24
        %v3081 = vpop.permute.xlu0 %3080
        %3082 = vrot.lane.b32.xlu0 %v1736, 24
        %v3083 = vpop.permute.xlu0 %3082
        %3084 = vrot.lane.b32.xlu0 %v1601, 24
        %v3085 = vpop.permute.xlu0 %3084
        %3086 = vrot.lane.b32.xlu0 %v1737, 24
        %v3087 = vpop.permute.xlu0 %3086
        %3088 = vrot.lane.b32.xlu0 %v1602, 24
        %v3089 = vpop.permute.xlu0 %3088
        %3090 = vrot.lane.b32.xlu0 %v1738, 24
        %v3091 = vpop.permute.xlu0 %3090
        %3092 = vrot.lane.b32.xlu0 %v1603, 24
        %v3093 = vpop.permute.xlu0 %3092
        %3094 = vrot.lane.b32.xlu0 %v1739, 24
        %v3095 = vpop.permute.xlu0 %3094
        %3096 = vrot.lane.b32.xlu0 %v1604, 24
        %v3097 = vpop.permute.xlu0 %3096
        %3098 = vrot.lane.b32.xlu0 %v1740, 24
        %v3099 = vpop.permute.xlu0 %3098
        %3100 = vrot.lane.b32.xlu0 %v1605, 24
        %v3101 = vpop.permute.xlu0 %3100
        %3102 = vrot.lane.b32.xlu0 %v1741, 24
        %v3103 = vpop.permute.xlu0 %3102
        %3104 = vrot.lane.b32.xlu0 %v1606, 24
        %v3105 = vpop.permute.xlu0 %3104
        %3106 = vrot.lane.b32.xlu0 %v1742, 24
        %v3107 = vpop.permute.xlu0 %3106
        %v3156 = vrot.slane %v1261, 1
        %v3157 = vrot.slane %v1397, 1
        %v3158 = vsel %vm1006, %v3156, %v3157
        %v3159 = vrot.slane %v1443, 1
        %v3160 = vsel %vm1006, %v3157, %v3159
        %v3161 = vrot.slane %v1262, 1
        %v3162 = vrot.slane %v1398, 1
        %v3163 = vsel %vm1006, %v3161, %v3162
        %v3164 = vrot.slane %v1467, 1
        %v3165 = vsel %vm1006, %v3162, %v3164
        %v3166 = vrot.slane %v1263, 1
        %v3167 = vrot.slane %v1399, 1
        %v3168 = vsel %vm1006, %v3166, %v3167
        %v3169 = vrot.slane %v1450, 1
        %v3170 = vsel %vm1006, %v3167, %v3169
        %v3171 = vrot.slane %v1264, 1
        %v3172 = vrot.slane %v1400, 1
        %v3173 = vsel %vm1006, %v3171, %v3172
        %v3174 = vrot.slane %v1468, 1
        %v3175 = vsel %vm1006, %v3172, %v3174
        %v3176 = vrot.slane %v1265, 1
        %v3177 = vrot.slane %v1401, 1
        %v3178 = vsel %vm1006, %v3176, %v3177
        %v3179 = vrot.slane %v1459, 1
        %v3180 = vsel %vm1006, %v3177, %v3179
        %v3181 = vrot.slane %v1266, 1
        %v3182 = vrot.slane %v1402, 1
        %v3183 = vsel %vm1006, %v3181, %v3182
        %v3184 = vrot.slane %v1469, 1
        %v3185 = vsel %vm1006, %v3182, %v3184
        %v3186 = vrot.slane %v1267, 1
        %v3187 = vrot.slane %v1403, 1
        %v3188 = vsel %vm1006, %v3186, %v3187
        %v3189 = vrot.slane %v1466, 1
        %v3190 = vsel %vm1006, %v3187, %v3189
        %v3191 = vrot.slane %v1268, 1
        %v3192 = vrot.slane %v1404, 1
        %v3193 = vsel %vm1006, %v3191, %v3192
        %v3194 = vrot.slane %v1470, 1
        %v3195 = vsel %vm1006, %v3192, %v3194
        %v3196 = vrot.slane %v1599, 1
        %v3197 = vrot.slane %v1735, 1
        %v3198 = vsel %vm1006, %v3196, %v3197
        %v3199 = vrot.slane %v1781, 1
        %v3200 = vsel %vm1006, %v3197, %v3199
        %v3201 = vrot.slane %v1600, 1
        %v3202 = vrot.slane %v1736, 1
        %v3203 = vsel %vm1006, %v3201, %v3202
        %v3204 = vrot.slane %v1805, 1
        %v3205 = vsel %vm1006, %v3202, %v3204
        %v3206 = vrot.slane %v1601, 1
        %v3207 = vrot.slane %v1737, 1
        %v3208 = vsel %vm1006, %v3206, %v3207
        %v3209 = vrot.slane %v1788, 1
        %v3210 = vsel %vm1006, %v3207, %v3209
        %v3211 = vrot.slane %v1602, 1
        %v3212 = vrot.slane %v1738, 1
        %v3213 = vsel %vm1006, %v3211, %v3212
        %v3214 = vrot.slane %v1806, 1
        %v3215 = vsel %vm1006, %v3212, %v3214
        %v3216 = vrot.slane %v1603, 1
        %v3217 = vrot.slane %v1739, 1
        %v3218 = vsel %vm1006, %v3216, %v3217
        %v3219 = vrot.slane %v1797, 1
        %v3220 = vsel %vm1006, %v3217, %v3219
        %v3221 = vrot.slane %v1604, 1
        %v3222 = vrot.slane %v1740, 1
        %v3223 = vsel %vm1006, %v3221, %v3222
        %v3224 = vrot.slane %v1807, 1
        %v3225 = vsel %vm1006, %v3222, %v3224
        %v3226 = vrot.slane %v1605, 1
        %v3227 = vrot.slane %v1741, 1
        %v3228 = vsel %vm1006, %v3226, %v3227
        %v3229 = vrot.slane %v1804, 1
        %v3230 = vsel %vm1006, %v3227, %v3229
        %v3231 = vrot.slane %v1606, 1
        %v3232 = vrot.slane %v1742, 1
        %v3233 = vsel %vm1006, %v3231, %v3232
        %v3234 = vrot.slane %v1808, 1
        %v3235 = vsel %vm1006, %v3232, %v3234
        %3236 = vrot.lane.b32.xlu0 %v3158, 32
        %v3237 = vpop.permute.xlu0 %3236
        %3238 = vrot.lane.b32.xlu0 %v3160, 32
        %v3239 = vpop.permute.xlu0 %3238
        %3240 = vrot.lane.b32.xlu0 %v3163, 32
        %v3241 = vpop.permute.xlu0 %3240
        %3242 = vrot.lane.b32.xlu0 %v3165, 32
        %v3243 = vpop.permute.xlu0 %3242
        %3244 = vrot.lane.b32.xlu0 %v3168, 32
        %v3245 = vpop.permute.xlu0 %3244
        %3246 = vrot.lane.b32.xlu0 %v3170, 32
        %v3247 = vpop.permute.xlu0 %3246
        %3248 = vrot.lane.b32.xlu0 %v3173, 32
        %v3249 = vpop.permute.xlu0 %3248
        %3250 = vrot.lane.b32.xlu0 %v3175, 32
        %v3251 = vpop.permute.xlu0 %3250
        %3252 = vrot.lane.b32.xlu0 %v3178, 32
        %v3253 = vpop.permute.xlu0 %3252
        %3254 = vrot.lane.b32.xlu0 %v3180, 32
        %v3255 = vpop.permute.xlu0 %3254
        %3256 = vrot.lane.b32.xlu0 %v3183, 32
        %v3257 = vpop.permute.xlu0 %3256
        %3258 = vrot.lane.b32.xlu0 %v3185, 32
        %v3259 = vpop.permute.xlu0 %3258
        %3260 = vrot.lane.b32.xlu0 %v3188, 32
        %v3261 = vpop.permute.xlu0 %3260
        %3262 = vrot.lane.b32.xlu0 %v3190, 32
        %v3263 = vpop.permute.xlu0 %3262
        %3264 = vrot.lane.b32.xlu0 %v3193, 32
        %v3265 = vpop.permute.xlu0 %3264
        %3266 = vrot.lane.b32.xlu0 %v3195, 32
        %v3267 = vpop.permute.xlu0 %3266
        %3268 = vrot.lane.b32.xlu0 %v3198, 32
        %v3269 = vpop.permute.xlu0 %3268
        %3270 = vrot.lane.b32.xlu0 %v3200, 32
        %v3271 = vpop.permute.xlu0 %3270
        %3272 = vrot.lane.b32.xlu0 %v3203, 32
        %v3273 = vpop.permute.xlu0 %3272
        %3274 = vrot.lane.b32.xlu0 %v3205, 32
        %v3275 = vpop.permute.xlu0 %3274
        %3276 = vrot.lane.b32.xlu0 %v3208, 32
        %v3277 = vpop.permute.xlu0 %3276
        %3278 = vrot.lane.b32.xlu0 %v3210, 32
        %v3279 = vpop.permute.xlu0 %3278
        %3280 = vrot.lane.b32.xlu0 %v3213, 32
        %v3281 = vpop.permute.xlu0 %3280
        %3282 = vrot.lane.b32.xlu0 %v3215, 32
        %v3283 = vpop.permute.xlu0 %3282
        %3284 = vrot.lane.b32.xlu0 %v3218, 32
        %v3285 = vpop.permute.xlu0 %3284
        %3286 = vrot.lane.b32.xlu0 %v3220, 32
        %v3287 = vpop.permute.xlu0 %3286
        %3288 = vrot.lane.b32.xlu0 %v3223, 32
        %v3289 = vpop.permute.xlu0 %3288
        %3290 = vrot.lane.b32.xlu0 %v3225, 32
        %v3291 = vpop.permute.xlu0 %3290
        %3292 = vrot.lane.b32.xlu0 %v3228, 32
        %v3293 = vpop.permute.xlu0 %3292
        %3294 = vrot.lane.b32.xlu0 %v3230, 32
        %v3295 = vpop.permute.xlu0 %3294
        %3296 = vrot.lane.b32.xlu0 %v3233, 32
        %v3297 = vpop.permute.xlu0 %3296
        %3298 = vrot.lane.b32.xlu0 %v3235, 32
        %v3299 = vpop.permute.xlu0 %3298
        %v3332 = vrot.slane %v1261, 2
        %v3333 = vrot.slane %v1397, 2
        %v3334 = vsel %vm1809, %v3332, %v3333
        %v3335 = vrot.slane %v1443, 2
        %v3336 = vsel %vm1809, %v3333, %v3335
        %v3337 = vrot.slane %v1262, 2
        %v3338 = vrot.slane %v1398, 2
        %v3339 = vsel %vm1809, %v3337, %v3338
        %v3340 = vrot.slane %v1467, 2
        %v3341 = vsel %vm1809, %v3338, %v3340
        %v3342 = vrot.slane %v1263, 2
        %v3343 = vrot.slane %v1399, 2
        %v3344 = vsel %vm1809, %v3342, %v3343
        %v3345 = vrot.slane %v1450, 2
        %v3346 = vsel %vm1809, %v3343, %v3345
        %v3347 = vrot.slane %v1264, 2
        %v3348 = vrot.slane %v1400, 2
        %v3349 = vsel %vm1809, %v3347, %v3348
        %v3350 = vrot.slane %v1468, 2
        %v3351 = vsel %vm1809, %v3348, %v3350
        %v3352 = vrot.slane %v1265, 2
        %v3353 = vrot.slane %v1401, 2
        %v3354 = vsel %vm1809, %v3352, %v3353
        %v3355 = vrot.slane %v1459, 2
        %v3356 = vsel %vm1809, %v3353, %v3355
        %v3357 = vrot.slane %v1266, 2
        %v3358 = vrot.slane %v1402, 2
        %v3359 = vsel %vm1809, %v3357, %v3358
        %v3360 = vrot.slane %v1469, 2
        %v3361 = vsel %vm1809, %v3358, %v3360
        %v3362 = vrot.slane %v1267, 2
        %v3363 = vrot.slane %v1403, 2
        %v3364 = vsel %vm1809, %v3362, %v3363
        %v3365 = vrot.slane %v1466, 2
        %v3366 = vsel %vm1809, %v3363, %v3365
        %v3367 = vrot.slane %v1268, 2
        %v3368 = vrot.slane %v1404, 2
        %v3369 = vsel %vm1809, %v3367, %v3368
        %v3370 = vrot.slane %v1470, 2
        %v3371 = vsel %vm1809, %v3368, %v3370
        %v3372 = vrot.slane %v1599, 2
        %v3373 = vrot.slane %v1735, 2
        %v3374 = vsel %vm1809, %v3372, %v3373
        %v3375 = vrot.slane %v1781, 2
        %v3376 = vsel %vm1809, %v3373, %v3375
        %v3377 = vrot.slane %v1600, 2
        %v3378 = vrot.slane %v1736, 2
        %v3379 = vsel %vm1809, %v3377, %v3378
        %v3380 = vrot.slane %v1805, 2
        %v3381 = vsel %vm1809, %v3378, %v3380
        %v3382 = vrot.slane %v1601, 2
        %v3383 = vrot.slane %v1737, 2
        %v3384 = vsel %vm1809, %v3382, %v3383
        %v3385 = vrot.slane %v1788, 2
        %v3386 = vsel %vm1809, %v3383, %v3385
        %v3387 = vrot.slane %v1602, 2
        %v3388 = vrot.slane %v1738, 2
        %v3389 = vsel %vm1809, %v3387, %v3388
        %v3390 = vrot.slane %v1806, 2
        %v3391 = vsel %vm1809, %v3388, %v3390
        %v3392 = vrot.slane %v1603, 2
        %v3393 = vrot.slane %v1739, 2
        %v3394 = vsel %vm1809, %v3392, %v3393
        %v3395 = vrot.slane %v1797, 2
        %v3396 = vsel %vm1809, %v3393, %v3395
        %v3397 = vrot.slane %v1604, 2
        %v3398 = vrot.slane %v1740, 2
        %v3399 = vsel %vm1809, %v3397, %v3398
        %v3400 = vrot.slane %v1807, 2
        %v3401 = vsel %vm1809, %v3398, %v3400
        %v3402 = vrot.slane %v1605, 2
        %v3403 = vrot.slane %v1741, 2
        %v3404 = vsel %vm1809, %v3402, %v3403
        %v3405 = vrot.slane %v1804, 2
        %v3406 = vsel %vm1809, %v3403, %v3405
        %v3407 = vrot.slane %v1606, 2
        %v3408 = vrot.slane %v1742, 2
        %v3409 = vsel %vm1809, %v3407, %v3408
        %v3410 = vrot.slane %v1808, 2
        %v3411 = vsel %vm1809, %v3408, %v3410
        %3412 = vrot.lane.b32.xlu0 %v3334, 40
        %v3413 = vpop.permute.xlu0 %3412
        %3414 = vrot.lane.b32.xlu0 %v3336, 40
        %v3415 = vpop.permute.xlu0 %3414
        %3416 = vrot.lane.b32.xlu0 %v3339, 40
        %v3417 = vpop.permute.xlu0 %3416
        %3418 = vrot.lane.b32.xlu0 %v3341, 40
        %v3419 = vpop.permute.xlu0 %3418
        %3420 = vrot.lane.b32.xlu0 %v3344, 40
        %v3421 = vpop.permute.xlu0 %3420
        %3422 = vrot.lane.b32.xlu0 %v3346, 40
        %v3423 = vpop.permute.xlu0 %3422
        %3424 = vrot.lane.b32.xlu0 %v3349, 40
        %v3425 = vpop.permute.xlu0 %3424
        %3426 = vrot.lane.b32.xlu0 %v3351, 40
        %v3427 = vpop.permute.xlu0 %3426
        %3428 = vrot.lane.b32.xlu0 %v3354, 40
        %v3429 = vpop.permute.xlu0 %3428
        %3430 = vrot.lane.b32.xlu0 %v3356, 40
        %v3431 = vpop.permute.xlu0 %3430
        %3432 = vrot.lane.b32.xlu0 %v3359, 40
        %v3433 = vpop.permute.xlu0 %3432
        %3434 = vrot.lane.b32.xlu0 %v3361, 40
        %v3435 = vpop.permute.xlu0 %3434
        %3436 = vrot.lane.b32.xlu0 %v3364, 40
        %v3437 = vpop.permute.xlu0 %3436
        %3438 = vrot.lane.b32.xlu0 %v3366, 40
        %v3439 = vpop.permute.xlu0 %3438
        %3440 = vrot.lane.b32.xlu0 %v3369, 40
        %v3441 = vpop.permute.xlu0 %3440
        %3442 = vrot.lane.b32.xlu0 %v3371, 40
        %v3443 = vpop.permute.xlu0 %3442
        %3444 = vrot.lane.b32.xlu0 %v3374, 40
        %v3445 = vpop.permute.xlu0 %3444
        %3446 = vrot.lane.b32.xlu0 %v3376, 40
        %v3447 = vpop.permute.xlu0 %3446
        %3448 = vrot.lane.b32.xlu0 %v3379, 40
        %v3449 = vpop.permute.xlu0 %3448
        %3450 = vrot.lane.b32.xlu0 %v3381, 40
        %v3451 = vpop.permute.xlu0 %3450
        %3452 = vrot.lane.b32.xlu0 %v3384, 40
        %v3453 = vpop.permute.xlu0 %3452
        %3454 = vrot.lane.b32.xlu0 %v3386, 40
        %v3455 = vpop.permute.xlu0 %3454
        %3456 = vrot.lane.b32.xlu0 %v3389, 40
        %v3457 = vpop.permute.xlu0 %3456
        %3458 = vrot.lane.b32.xlu0 %v3391, 40
        %v3459 = vpop.permute.xlu0 %3458
        %3460 = vrot.lane.b32.xlu0 %v3394, 40
        %v3461 = vpop.permute.xlu0 %3460
        %3462 = vrot.lane.b32.xlu0 %v3396, 40
        %v3463 = vpop.permute.xlu0 %3462
        %3464 = vrot.lane.b32.xlu0 %v3399, 40
        %v3465 = vpop.permute.xlu0 %3464
        %3466 = vrot.lane.b32.xlu0 %v3401, 40
        %v3467 = vpop.permute.xlu0 %3466
        %3468 = vrot.lane.b32.xlu0 %v3404, 40
        %v3469 = vpop.permute.xlu0 %3468
        %3470 = vrot.lane.b32.xlu0 %v3406, 40
        %v3471 = vpop.permute.xlu0 %3470
        %3472 = vrot.lane.b32.xlu0 %v3409, 40
        %v3473 = vpop.permute.xlu0 %3472
        %3474 = vrot.lane.b32.xlu0 %v3411, 40
        %v3475 = vpop.permute.xlu0 %3474
        %3540 = vrot.lane.b32.xlu0 %v2064, 48
        %v3541 = vpop.permute.xlu0 %3540
        %3542 = vrot.lane.b32.xlu0 %v2200, 48
        %v3543 = vpop.permute.xlu0 %3542
        %3544 = vrot.lane.b32.xlu0 %v2065, 48
        %v3545 = vpop.permute.xlu0 %3544
        %3546 = vrot.lane.b32.xlu0 %v2201, 48
        %v3547 = vpop.permute.xlu0 %3546
        %3548 = vrot.lane.b32.xlu0 %v2066, 48
        %v3549 = vpop.permute.xlu0 %3548
        %3550 = vrot.lane.b32.xlu0 %v2202, 48
        %v3551 = vpop.permute.xlu0 %3550
        %3552 = vrot.lane.b32.xlu0 %v2067, 48
        %v3553 = vpop.permute.xlu0 %3552
        %3554 = vrot.lane.b32.xlu0 %v2203, 48
        %v3555 = vpop.permute.xlu0 %3554
        %3556 = vrot.lane.b32.xlu0 %v2068, 48
        %v3557 = vpop.permute.xlu0 %3556
        %3558 = vrot.lane.b32.xlu0 %v2204, 48
        %v3559 = vpop.permute.xlu0 %3558
        %3560 = vrot.lane.b32.xlu0 %v2069, 48
        %v3561 = vpop.permute.xlu0 %3560
        %3562 = vrot.lane.b32.xlu0 %v2205, 48
        %v3563 = vpop.permute.xlu0 %3562
        %3564 = vrot.lane.b32.xlu0 %v2070, 48
        %v3565 = vpop.permute.xlu0 %3564
        %3566 = vrot.lane.b32.xlu0 %v2206, 48
        %v3567 = vpop.permute.xlu0 %3566
        %3568 = vrot.lane.b32.xlu0 %v2071, 48
        %v3569 = vpop.permute.xlu0 %3568
        %3570 = vrot.lane.b32.xlu0 %v2207, 48
        %v3571 = vpop.permute.xlu0 %3570
        %3572 = vrot.lane.b32.xlu0 %v2402, 48
        %v3573 = vpop.permute.xlu0 %3572
        %3574 = vrot.lane.b32.xlu0 %v2538, 48
        %v3575 = vpop.permute.xlu0 %3574
        %3576 = vrot.lane.b32.xlu0 %v2403, 48
        %v3577 = vpop.permute.xlu0 %3576
        %3578 = vrot.lane.b32.xlu0 %v2539, 48
        %v3579 = vpop.permute.xlu0 %3578
        %3580 = vrot.lane.b32.xlu0 %v2404, 48
        %v3581 = vpop.permute.xlu0 %3580
        %3582 = vrot.lane.b32.xlu0 %v2540, 48
        %v3583 = vpop.permute.xlu0 %3582
        %3584 = vrot.lane.b32.xlu0 %v2405, 48
        %v3585 = vpop.permute.xlu0 %3584
        %3586 = vrot.lane.b32.xlu0 %v2541, 48
        %v3587 = vpop.permute.xlu0 %3586
        %3588 = vrot.lane.b32.xlu0 %v2406, 48
        %v3589 = vpop.permute.xlu0 %3588
        %3590 = vrot.lane.b32.xlu0 %v2542, 48
        %v3591 = vpop.permute.xlu0 %3590
        %3592 = vrot.lane.b32.xlu0 %v2407, 48
        %v3593 = vpop.permute.xlu0 %3592
        %3594 = vrot.lane.b32.xlu0 %v2543, 48
        %v3595 = vpop.permute.xlu0 %3594
        %3596 = vrot.lane.b32.xlu0 %v2408, 48
        %v3597 = vpop.permute.xlu0 %3596
        %3598 = vrot.lane.b32.xlu0 %v2544, 48
        %v3599 = vpop.permute.xlu0 %3598
        %3600 = vrot.lane.b32.xlu0 %v2409, 48
        %v3601 = vpop.permute.xlu0 %3600
        %3602 = vrot.lane.b32.xlu0 %v2545, 48
        %v3603 = vpop.permute.xlu0 %3602
        %v3652 = vrot.slane %v2064, 1
        %v3653 = vrot.slane %v2200, 1
        %v3654 = vsel %vm1006, %v3652, %v3653
        %v3655 = vrot.slane %v2246, 1
        %v3656 = vsel %vm1006, %v3653, %v3655
        %v3657 = vrot.slane %v2065, 1
        %v3658 = vrot.slane %v2201, 1
        %v3659 = vsel %vm1006, %v3657, %v3658
        %v3660 = vrot.slane %v2270, 1
        %v3661 = vsel %vm1006, %v3658, %v3660
        %v3662 = vrot.slane %v2066, 1
        %v3663 = vrot.slane %v2202, 1
        %v3664 = vsel %vm1006, %v3662, %v3663
        %v3665 = vrot.slane %v2253, 1
        %v3666 = vsel %vm1006, %v3663, %v3665
        %v3667 = vrot.slane %v2067, 1
        %v3668 = vrot.slane %v2203, 1
        %v3669 = vsel %vm1006, %v3667, %v3668
        %v3670 = vrot.slane %v2271, 1
        %v3671 = vsel %vm1006, %v3668, %v3670
        %v3672 = vrot.slane %v2068, 1
        %v3673 = vrot.slane %v2204, 1
        %v3674 = vsel %vm1006, %v3672, %v3673
        %v3675 = vrot.slane %v2262, 1
        %v3676 = vsel %vm1006, %v3673, %v3675
        %v3677 = vrot.slane %v2069, 1
        %v3678 = vrot.slane %v2205, 1
        %v3679 = vsel %vm1006, %v3677, %v3678
        %v3680 = vrot.slane %v2272, 1
        %v3681 = vsel %vm1006, %v3678, %v3680
        %v3682 = vrot.slane %v2070, 1
        %v3683 = vrot.slane %v2206, 1
        %v3684 = vsel %vm1006, %v3682, %v3683
        %v3685 = vrot.slane %v2269, 1
        %v3686 = vsel %vm1006, %v3683, %v3685
        %v3687 = vrot.slane %v2071, 1
        %v3688 = vrot.slane %v2207, 1
        %v3689 = vsel %vm1006, %v3687, %v3688
        %v3690 = vrot.slane %v2273, 1
        %v3691 = vsel %vm1006, %v3688, %v3690
        %v3692 = vrot.slane %v2402, 1
        %v3693 = vrot.slane %v2538, 1
        %v3694 = vsel %vm1006, %v3692, %v3693
        %v3695 = vrot.slane %v2584, 1
        %v3696 = vsel %vm1006, %v3693, %v3695
        %v3697 = vrot.slane %v2403, 1
        %v3698 = vrot.slane %v2539, 1
        %v3699 = vsel %vm1006, %v3697, %v3698
        %v3700 = vrot.slane %v2608, 1
        %v3701 = vsel %vm1006, %v3698, %v3700
        %v3702 = vrot.slane %v2404, 1
        %v3703 = vrot.slane %v2540, 1
        %v3704 = vsel %vm1006, %v3702, %v3703
        %v3705 = vrot.slane %v2591, 1
        %v3706 = vsel %vm1006, %v3703, %v3705
        %v3707 = vrot.slane %v2405, 1
        %v3708 = vrot.slane %v2541, 1
        %v3709 = vsel %vm1006, %v3707, %v3708
        %v3710 = vrot.slane %v2609, 1
        %v3711 = vsel %vm1006, %v3708, %v3710
        %v3712 = vrot.slane %v2406, 1
        %v3713 = vrot.slane %v2542, 1
        %v3714 = vsel %vm1006, %v3712, %v3713
        %v3715 = vrot.slane %v2600, 1
        %v3716 = vsel %vm1006, %v3713, %v3715
        %v3717 = vrot.slane %v2407, 1
        %v3718 = vrot.slane %v2543, 1
        %v3719 = vsel %vm1006, %v3717, %v3718
        %v3720 = vrot.slane %v2610, 1
        %v3721 = vsel %vm1006, %v3718, %v3720
        %v3722 = vrot.slane %v2408, 1
        %v3723 = vrot.slane %v2544, 1
        %v3724 = vsel %vm1006, %v3722, %v3723
        %v3725 = vrot.slane %v2607, 1
        %v3726 = vsel %vm1006, %v3723, %v3725
        %v3727 = vrot.slane %v2409, 1
        %v3728 = vrot.slane %v2545, 1
        %v3729 = vsel %vm1006, %v3727, %v3728
        %v3730 = vrot.slane %v2611, 1
        %v3731 = vsel %vm1006, %v3728, %v3730
        %3732 = vrot.lane.b32.xlu0 %v3654, 56
        %v3733 = vpop.permute.xlu0 %3732
        %3734 = vrot.lane.b32.xlu0 %v3656, 56
        %v3735 = vpop.permute.xlu0 %3734
        %3736 = vrot.lane.b32.xlu0 %v3659, 56
        %v3737 = vpop.permute.xlu0 %3736
        %3738 = vrot.lane.b32.xlu0 %v3661, 56
        %v3739 = vpop.permute.xlu0 %3738
        %3740 = vrot.lane.b32.xlu0 %v3664, 56
        %v3741 = vpop.permute.xlu0 %3740
        %3742 = vrot.lane.b32.xlu0 %v3666, 56
        %v3743 = vpop.permute.xlu0 %3742
        %3744 = vrot.lane.b32.xlu0 %v3669, 56
        %v3745 = vpop.permute.xlu0 %3744
        %3746 = vrot.lane.b32.xlu0 %v3671, 56
        %v3747 = vpop.permute.xlu0 %3746
        %3748 = vrot.lane.b32.xlu0 %v3674, 56
        %v3749 = vpop.permute.xlu0 %3748
        %3750 = vrot.lane.b32.xlu0 %v3676, 56
        %v3751 = vpop.permute.xlu0 %3750
        %3752 = vrot.lane.b32.xlu0 %v3679, 56
        %v3753 = vpop.permute.xlu0 %3752
        %3754 = vrot.lane.b32.xlu0 %v3681, 56
        %v3755 = vpop.permute.xlu0 %3754
        %3756 = vrot.lane.b32.xlu0 %v3684, 56
        %v3757 = vpop.permute.xlu0 %3756
        %3758 = vrot.lane.b32.xlu0 %v3686, 56
        %v3759 = vpop.permute.xlu0 %3758
        %3760 = vrot.lane.b32.xlu0 %v3689, 56
        %v3761 = vpop.permute.xlu0 %3760
        %3762 = vrot.lane.b32.xlu0 %v3691, 56
        %v3763 = vpop.permute.xlu0 %3762
        %3764 = vrot.lane.b32.xlu0 %v3694, 56
        %v3765 = vpop.permute.xlu0 %3764
        %3766 = vrot.lane.b32.xlu0 %v3696, 56
        %v3767 = vpop.permute.xlu0 %3766
        %3768 = vrot.lane.b32.xlu0 %v3699, 56
        %v3769 = vpop.permute.xlu0 %3768
        %3770 = vrot.lane.b32.xlu0 %v3701, 56
        %v3771 = vpop.permute.xlu0 %3770
        %3772 = vrot.lane.b32.xlu0 %v3704, 56
        %v3773 = vpop.permute.xlu0 %3772
        %3774 = vrot.lane.b32.xlu0 %v3706, 56
        %v3775 = vpop.permute.xlu0 %3774
        %3776 = vrot.lane.b32.xlu0 %v3709, 56
        %v3777 = vpop.permute.xlu0 %3776
        %3778 = vrot.lane.b32.xlu0 %v3711, 56
        %v3779 = vpop.permute.xlu0 %3778
        %3780 = vrot.lane.b32.xlu0 %v3714, 56
        %v3781 = vpop.permute.xlu0 %3780
        %3782 = vrot.lane.b32.xlu0 %v3716, 56
        %v3783 = vpop.permute.xlu0 %3782
        %3784 = vrot.lane.b32.xlu0 %v3719, 56
        %v3785 = vpop.permute.xlu0 %3784
        %3786 = vrot.lane.b32.xlu0 %v3721, 56
        %v3787 = vpop.permute.xlu0 %3786
        %3788 = vrot.lane.b32.xlu0 %v3724, 56
        %v3789 = vpop.permute.xlu0 %3788
        %3790 = vrot.lane.b32.xlu0 %v3726, 56
        %v3791 = vpop.permute.xlu0 %3790
        %3792 = vrot.lane.b32.xlu0 %v3729, 56
        %v3793 = vpop.permute.xlu0 %3792
        %3794 = vrot.lane.b32.xlu0 %v3731, 56
        %v3795 = vpop.permute.xlu0 %3794
        %v3828 = vrot.slane %v2064, 2
        %v3829 = vrot.slane %v2200, 2
        %v3830 = vsel %vm1809, %v3828, %v3829
        %v3831 = vrot.slane %v2246, 2
        %v3832 = vsel %vm1809, %v3829, %v3831
        %v3833 = vrot.slane %v2065, 2
        %v3834 = vrot.slane %v2201, 2
        %v3835 = vsel %vm1809, %v3833, %v3834
        %v3836 = vrot.slane %v2270, 2
        %v3837 = vsel %vm1809, %v3834, %v3836
        %v3838 = vrot.slane %v2066, 2
        %v3839 = vrot.slane %v2202, 2
        %v3840 = vsel %vm1809, %v3838, %v3839
        %v3841 = vrot.slane %v2253, 2
        %v3842 = vsel %vm1809, %v3839, %v3841
        %v3843 = vrot.slane %v2067, 2
        %v3844 = vrot.slane %v2203, 2
        %v3845 = vsel %vm1809, %v3843, %v3844
        %v3846 = vrot.slane %v2271, 2
        %v3847 = vsel %vm1809, %v3844, %v3846
        %v3848 = vrot.slane %v2068, 2
        %v3849 = vrot.slane %v2204, 2
        %v3850 = vsel %vm1809, %v3848, %v3849
        %v3851 = vrot.slane %v2262, 2
        %v3852 = vsel %vm1809, %v3849, %v3851
        %v3853 = vrot.slane %v2069, 2
        %v3854 = vrot.slane %v2205, 2
        %v3855 = vsel %vm1809, %v3853, %v3854
        %v3856 = vrot.slane %v2272, 2
        %v3857 = vsel %vm1809, %v3854, %v3856
        %v3858 = vrot.slane %v2070, 2
        %v3859 = vrot.slane %v2206, 2
        %v3860 = vsel %vm1809, %v3858, %v3859
        %v3861 = vrot.slane %v2269, 2
        %v3862 = vsel %vm1809, %v3859, %v3861
        %v3863 = vrot.slane %v2071, 2
        %v3864 = vrot.slane %v2207, 2
        %v3865 = vsel %vm1809, %v3863, %v3864
        %v3866 = vrot.slane %v2273, 2
        %v3867 = vsel %vm1809, %v3864, %v3866
        %v3868 = vrot.slane %v2402, 2
        %v3869 = vrot.slane %v2538, 2
        %v3870 = vsel %vm1809, %v3868, %v3869
        %v3871 = vrot.slane %v2584, 2
        %v3872 = vsel %vm1809, %v3869, %v3871
        %v3873 = vrot.slane %v2403, 2
        %v3874 = vrot.slane %v2539, 2
        %v3875 = vsel %vm1809, %v3873, %v3874
        %v3876 = vrot.slane %v2608, 2
        %v3877 = vsel %vm1809, %v3874, %v3876
        %v3878 = vrot.slane %v2404, 2
        %v3879 = vrot.slane %v2540, 2
        %v3880 = vsel %vm1809, %v3878, %v3879
        %v3881 = vrot.slane %v2591, 2
        %v3882 = vsel %vm1809, %v3879, %v3881
        %v3883 = vrot.slane %v2405, 2
        %v3884 = vrot.slane %v2541, 2
        %v3885 = vsel %vm1809, %v3883, %v3884
        %v3886 = vrot.slane %v2609, 2
        %v3887 = vsel %vm1809, %v3884, %v3886
        %v3888 = vrot.slane %v2406, 2
        %v3889 = vrot.slane %v2542, 2
        %v3890 = vsel %vm1809, %v3888, %v3889
        %v3891 = vrot.slane %v2600, 2
        %v3892 = vsel %vm1809, %v3889, %v3891
        %v3893 = vrot.slane %v2407, 2
        %v3894 = vrot.slane %v2543, 2
        %v3895 = vsel %vm1809, %v3893, %v3894
        %v3896 = vrot.slane %v2610, 2
        %v3897 = vsel %vm1809, %v3894, %v3896
        %v3898 = vrot.slane %v2408, 2
        %v3899 = vrot.slane %v2544, 2
        %v3900 = vsel %vm1809, %v3898, %v3899
        %v3901 = vrot.slane %v2607, 2
        %v3902 = vsel %vm1809, %v3899, %v3901
        %v3903 = vrot.slane %v2409, 2
        %v3904 = vrot.slane %v2545, 2
        %v3905 = vsel %vm1809, %v3903, %v3904
        %v3906 = vrot.slane %v2611, 2
        %v3907 = vsel %vm1809, %v3904, %v3906
        %3908 = vrot.lane.b32.xlu0 %v3830, 64
        %v3909 = vpop.permute.xlu0 %3908
        %3910 = vrot.lane.b32.xlu0 %v3832, 64
        %v3911 = vpop.permute.xlu0 %3910
        %3912 = vrot.lane.b32.xlu0 %v3835, 64
        %v3913 = vpop.permute.xlu0 %3912
        %3914 = vrot.lane.b32.xlu0 %v3837, 64
        %v3915 = vpop.permute.xlu0 %3914
        %3916 = vrot.lane.b32.xlu0 %v3840, 64
        %v3917 = vpop.permute.xlu0 %3916
        %3918 = vrot.lane.b32.xlu0 %v3842, 64
        %v3919 = vpop.permute.xlu0 %3918
        %3920 = vrot.lane.b32.xlu0 %v3845, 64
        %v3921 = vpop.permute.xlu0 %3920
        %3922 = vrot.lane.b32.xlu0 %v3847, 64
        %v3923 = vpop.permute.xlu0 %3922
        %3924 = vrot.lane.b32.xlu0 %v3850, 64
        %v3925 = vpop.permute.xlu0 %3924
        %3926 = vrot.lane.b32.xlu0 %v3852, 64
        %v3927 = vpop.permute.xlu0 %3926
        %3928 = vrot.lane.b32.xlu0 %v3855, 64
        %v3929 = vpop.permute.xlu0 %3928
        %3930 = vrot.lane.b32.xlu0 %v3857, 64
        %v3931 = vpop.permute.xlu0 %3930
        %3932 = vrot.lane.b32.xlu0 %v3860, 64
        %v3933 = vpop.permute.xlu0 %3932
        %3934 = vrot.lane.b32.xlu0 %v3862, 64
        %v3935 = vpop.permute.xlu0 %3934
        %3936 = vrot.lane.b32.xlu0 %v3865, 64
        %v3937 = vpop.permute.xlu0 %3936
        %3938 = vrot.lane.b32.xlu0 %v3867, 64
        %v3939 = vpop.permute.xlu0 %3938
        %3940 = vrot.lane.b32.xlu0 %v3870, 64
        %v3941 = vpop.permute.xlu0 %3940
        %3942 = vrot.lane.b32.xlu0 %v3872, 64
        %v3943 = vpop.permute.xlu0 %3942
        %3944 = vrot.lane.b32.xlu0 %v3875, 64
        %v3945 = vpop.permute.xlu0 %3944
        %3946 = vrot.lane.b32.xlu0 %v3877, 64
        %v3947 = vpop.permute.xlu0 %3946
        %3948 = vrot.lane.b32.xlu0 %v3880, 64
        %v3949 = vpop.permute.xlu0 %3948
        %3950 = vrot.lane.b32.xlu0 %v3882, 64
        %v3951 = vpop.permute.xlu0 %3950
        %3952 = vrot.lane.b32.xlu0 %v3885, 64
        %v3953 = vpop.permute.xlu0 %3952
        %3954 = vrot.lane.b32.xlu0 %v3887, 64
        %v3955 = vpop.permute.xlu0 %3954
        %3956 = vrot.lane.b32.xlu0 %v3890, 64
        %v3957 = vpop.permute.xlu0 %3956
        %3958 = vrot.lane.b32.xlu0 %v3892, 64
        %v3959 = vpop.permute.xlu0 %3958
        %3960 = vrot.lane.b32.xlu0 %v3895, 64
        %v3961 = vpop.permute.xlu0 %3960
        %3962 = vrot.lane.b32.xlu0 %v3897, 64
        %v3963 = vpop.permute.xlu0 %3962
        %3964 = vrot.lane.b32.xlu0 %v3900, 64
        %v3965 = vpop.permute.xlu0 %3964
        %3966 = vrot.lane.b32.xlu0 %v3902, 64
        %v3967 = vpop.permute.xlu0 %3966
        %3968 = vrot.lane.b32.xlu0 %v3905, 64
        %v3969 = vpop.permute.xlu0 %3968
        %3970 = vrot.lane.b32.xlu0 %v3907, 64
        %v3971 = vpop.permute.xlu0 %3970
        %vm4004 = vcmask 64512
        %v4005 = vsel %vm4004, %v424, %v2741
        %v4006 = vsel %vm4004, %v560, %v2743
        %v4007 = vsel %vm4004, %v425, %v2745
        %v4008 = vsel %vm4004, %v561, %v2747
        %v4009 = vsel %vm4004, %v426, %v2749
        %v4010 = vsel %vm4004, %v562, %v2751
        %v4011 = vsel %vm4004, %v427, %v2753
        %v4012 = vsel %vm4004, %v563, %v2755
        %v4013 = vsel %vm4004, %v428, %v2757
        %v4014 = vsel %vm4004, %v564, %v2759
        %v4015 = vsel %vm4004, %v429, %v2761
        %v4016 = vsel %vm4004, %v565, %v2763
        %v4017 = vsel %vm4004, %v430, %v2765
        %v4018 = vsel %vm4004, %v566, %v2767
        %v4019 = vsel %vm4004, %v431, %v2769
        %v4020 = vsel %vm4004, %v567, %v2771
        %v4021 = vsel %vm4004, %v762, %v2773
        %v4022 = vsel %vm4004, %v898, %v2775
        %v4023 = vsel %vm4004, %v763, %v2777
        %v4024 = vsel %vm4004, %v899, %v2779
        %v4025 = vsel %vm4004, %v764, %v2781
        %v4026 = vsel %vm4004, %v900, %v2783
        %v4027 = vsel %vm4004, %v765, %v2785
        %v4028 = vsel %vm4004, %v901, %v2787
        %v4029 = vsel %vm4004, %v766, %v2789
        %v4030 = vsel %vm4004, %v902, %v2791
        %v4031 = vsel %vm4004, %v767, %v2793
        %v4032 = vsel %vm4004, %v903, %v2795
        %v4033 = vsel %vm4004, %v768, %v2797
        %v4034 = vsel %vm4004, %v904, %v2799
        %v4035 = vsel %vm4004, %v769, %v2801
        %v4036 = vsel %vm4004, %v905, %v2803
        %vm4037 = vcmask 130048
        %v4038 = vsel %vm4037, %v4005, %v2917
        %v4039 = vsel %vm4037, %v4006, %v2919
        %v4040 = vsel %vm4037, %v4007, %v2921
        %v4041 = vsel %vm4037, %v4008, %v2923
        %v4042 = vsel %vm4037, %v4009, %v2925
        %v4043 = vsel %vm4037, %v4010, %v2927
        %v4044 = vsel %vm4037, %v4011, %v2929
        %v4045 = vsel %vm4037, %v4012, %v2931
        %v4046 = vsel %vm4037, %v4013, %v2933
        %v4047 = vsel %vm4037, %v4014, %v2935
        %v4048 = vsel %vm4037, %v4015, %v2937
        %v4049 = vsel %vm4037, %v4016, %v2939
        %v4050 = vsel %vm4037, %v4017, %v2941
        %v4051 = vsel %vm4037, %v4018, %v2943
        %v4052 = vsel %vm4037, %v4019, %v2945
        %v4053 = vsel %vm4037, %v4020, %v2947
        %v4054 = vsel %vm4037, %v4021, %v2949
        %v4055 = vsel %vm4037, %v4022, %v2951
        %v4056 = vsel %vm4037, %v4023, %v2953
        %v4057 = vsel %vm4037, %v4024, %v2955
        %v4058 = vsel %vm4037, %v4025, %v2957
        %v4059 = vsel %vm4037, %v4026, %v2959
        %v4060 = vsel %vm4037, %v4027, %v2961
        %v4061 = vsel %vm4037, %v4028, %v2963
        %v4062 = vsel %vm4037, %v4029, %v2965
        %v4063 = vsel %vm4037, %v4030, %v2967
        %v4064 = vsel %vm4037, %v4031, %v2969
        %v4065 = vsel %vm4037, %v4032, %v2971
        %v4066 = vsel %vm4037, %v4033, %v2973
        %v4067 = vsel %vm4037, %v4034, %v2975
        %v4068 = vsel %vm4037, %v4035, %v2977
        %v4069 = vsel %vm4037, %v4036, %v2979
        %vm4070 = vcmask 195584
        %v4071 = vsel %vm4070, %v4038, %v3045
        %v4072 = vsel %vm4070, %v4039, %v3047
        %v4073 = vsel %vm4070, %v4040, %v3049
        %v4074 = vsel %vm4070, %v4041, %v3051
        %v4075 = vsel %vm4070, %v4042, %v3053
        %v4076 = vsel %vm4070, %v4043, %v3055
        %v4077 = vsel %vm4070, %v4044, %v3057
        %v4078 = vsel %vm4070, %v4045, %v3059
        %v4079 = vsel %vm4070, %v4046, %v3061
        %v4080 = vsel %vm4070, %v4047, %v3063
        %v4081 = vsel %vm4070, %v4048, %v3065
        %v4082 = vsel %vm4070, %v4049, %v3067
        %v4083 = vsel %vm4070, %v4050, %v3069
        %v4084 = vsel %vm4070, %v4051, %v3071
        %v4085 = vsel %vm4070, %v4052, %v3073
        %v4086 = vsel %vm4070, %v4053, %v3075
        %v4087 = vsel %vm4070, %v4054, %v3077
        %v4088 = vsel %vm4070, %v4055, %v3079
        %v4089 = vsel %vm4070, %v4056, %v3081
        %v4090 = vsel %vm4070, %v4057, %v3083
        %v4091 = vsel %vm4070, %v4058, %v3085
        %v4092 = vsel %vm4070, %v4059, %v3087
        %v4093 = vsel %vm4070, %v4060, %v3089
        %v4094 = vsel %vm4070, %v4061, %v3091
        %v4095 = vsel %vm4070, %v4062, %v3093
        %v4096 = vsel %vm4070, %v4063, %v3095
        %v4097 = vsel %vm4070, %v4064, %v3097
        %v4098 = vsel %vm4070, %v4065, %v3099
        %v4099 = vsel %vm4070, %v4066, %v3101
        %v4100 = vsel %vm4070, %v4067, %v3103
        %v4101 = vsel %vm4070, %v4068, %v3105
        %v4102 = vsel %vm4070, %v4069, %v3107
        %vm4103 = vcmask 261120
        %v4104 = vsel %vm4103, %v4071, %v3237
        %v4105 = vsel %vm4103, %v4072, %v3239
        %v4106 = vsel %vm4103, %v4073, %v3241
        %v4107 = vsel %vm4103, %v4074, %v3243
        %v4108 = vsel %vm4103, %v4075, %v3245
        %v4109 = vsel %vm4103, %v4076, %v3247
        %v4110 = vsel %vm4103, %v4077, %v3249
        %v4111 = vsel %vm4103, %v4078, %v3251
        %v4112 = vsel %vm4103, %v4079, %v3253
        %v4113 = vsel %vm4103, %v4080, %v3255
        %v4114 = vsel %vm4103, %v4081, %v3257
        %v4115 = vsel %vm4103, %v4082, %v3259
        %v4116 = vsel %vm4103, %v4083, %v3261
        %v4117 = vsel %vm4103, %v4084, %v3263
        %v4118 = vsel %vm4103, %v4085, %v3265
        %v4119 = vsel %vm4103, %v4086, %v3267
        %v4120 = vsel %vm4103, %v4087, %v3269
        %v4121 = vsel %vm4103, %v4088, %v3271
        %v4122 = vsel %vm4103, %v4089, %v3273
        %v4123 = vsel %vm4103, %v4090, %v3275
        %v4124 = vsel %vm4103, %v4091, %v3277
        %v4125 = vsel %vm4103, %v4092, %v3279
        %v4126 = vsel %vm4103, %v4093, %v3281
        %v4127 = vsel %vm4103, %v4094, %v3283
        %v4128 = vsel %vm4103, %v4095, %v3285
        %v4129 = vsel %vm4103, %v4096, %v3287
        %v4130 = vsel %vm4103, %v4097, %v3289
        %v4131 = vsel %vm4103, %v4098, %v3291
        %v4132 = vsel %vm4103, %v4099, %v3293
        %v4133 = vsel %vm4103, %v4100, %v3295
        %v4134 = vsel %vm4103, %v4101, %v3297
        %v4135 = vsel %vm4103, %v4102, %v3299
        %vm4136 = vcmask 326656
        %v4137 = vsel %vm4136, %v4104, %v3413
        %v4138 = vsel %vm4136, %v4105, %v3415
        %v4139 = vsel %vm4136, %v4106, %v3417
        %v4140 = vsel %vm4136, %v4107, %v3419
        %v4141 = vsel %vm4136, %v4108, %v3421
        %v4142 = vsel %vm4136, %v4109, %v3423
        %v4143 = vsel %vm4136, %v4110, %v3425
        %v4144 = vsel %vm4136, %v4111, %v3427
        %v4145 = vsel %vm4136, %v4112, %v3429
        %v4146 = vsel %vm4136, %v4113, %v3431
        %v4147 = vsel %vm4136, %v4114, %v3433
        %v4148 = vsel %vm4136, %v4115, %v3435
        %v4149 = vsel %vm4136, %v4116, %v3437
        %v4150 = vsel %vm4136, %v4117, %v3439
        %v4151 = vsel %vm4136, %v4118, %v3441
        %v4152 = vsel %vm4136, %v4119, %v3443
        %v4153 = vsel %vm4136, %v4120, %v3445
        %v4154 = vsel %vm4136, %v4121, %v3447
        %v4155 = vsel %vm4136, %v4122, %v3449
        %v4156 = vsel %vm4136, %v4123, %v3451
        %v4157 = vsel %vm4136, %v4124, %v3453
        %v4158 = vsel %vm4136, %v4125, %v3455
        %v4159 = vsel %vm4136, %v4126, %v3457
        %v4160 = vsel %vm4136, %v4127, %v3459
        %v4161 = vsel %vm4136, %v4128, %v3461
        %v4162 = vsel %vm4136, %v4129, %v3463
        %v4163 = vsel %vm4136, %v4130, %v3465
        %v4164 = vsel %vm4136, %v4131, %v3467
        %v4165 = vsel %vm4136, %v4132, %v3469
        %v4166 = vsel %vm4136, %v4133, %v3471
        %v4167 = vsel %vm4136, %v4134, %v3473
        %v4168 = vsel %vm4136, %v4135, %v3475
        %vm4169 = vcmask 392192
        %v4170 = vsel %vm4169, %v4137, %v3541
        %v4171 = vsel %vm4169, %v4138, %v3543
        %v4172 = vsel %vm4169, %v4139, %v3545
        %v4173 = vsel %vm4169, %v4140, %v3547
        %v4174 = vsel %vm4169, %v4141, %v3549
        %v4175 = vsel %vm4169, %v4142, %v3551
        %v4176 = vsel %vm4169, %v4143, %v3553
        %v4177 = vsel %vm4169, %v4144, %v3555
        %v4178 = vsel %vm4169, %v4145, %v3557
        %v4179 = vsel %vm4169, %v4146, %v3559
        %v4180 = vsel %vm4169, %v4147, %v3561
        %v4181 = vsel %vm4169, %v4148, %v3563
        %v4182 = vsel %vm4169, %v4149, %v3565
        %v4183 = vsel %vm4169, %v4150, %v3567
        %v4184 = vsel %vm4169, %v4151, %v3569
        %v4185 = vsel %vm4169, %v4152, %v3571
        %v4186 = vsel %vm4169, %v4153, %v3573
        %v4187 = vsel %vm4169, %v4154, %v3575
        %v4188 = vsel %vm4169, %v4155, %v3577
        %v4189 = vsel %vm4169, %v4156, %v3579
        %v4190 = vsel %vm4169, %v4157, %v3581
        %v4191 = vsel %vm4169, %v4158, %v3583
        %v4192 = vsel %vm4169, %v4159, %v3585
        %v4193 = vsel %vm4169, %v4160, %v3587
        %v4194 = vsel %vm4169, %v4161, %v3589
        %v4195 = vsel %vm4169, %v4162, %v3591
        %v4196 = vsel %vm4169, %v4163, %v3593
        %v4197 = vsel %vm4169, %v4164, %v3595
        %v4198 = vsel %vm4169, %v4165, %v3597
        %v4199 = vsel %vm4169, %v4166, %v3599
        %v4200 = vsel %vm4169, %v4167, %v3601
        %v4201 = vsel %vm4169, %v4168, %v3603
        %vm4202 = vcmask 457728
        %v4203 = vsel %vm4202, %v4170, %v3733
        %v4204 = vsel %vm4202, %v4171, %v3735
        %v4205 = vsel %vm4202, %v4172, %v3737
        %v4206 = vsel %vm4202, %v4173, %v3739
        %v4207 = vsel %vm4202, %v4174, %v3741
        %v4208 = vsel %vm4202, %v4175, %v3743
        %v4209 = vsel %vm4202, %v4176, %v3745
        %v4210 = vsel %vm4202, %v4177, %v3747
        %v4211 = vsel %vm4202, %v4178, %v3749
        %v4212 = vsel %vm4202, %v4179, %v3751
        %v4213 = vsel %vm4202, %v4180, %v3753
        %v4214 = vsel %vm4202, %v4181, %v3755
        %v4215 = vsel %vm4202, %v4182, %v3757
        %v4216 = vsel %vm4202, %v4183, %v3759
        %v4217 = vsel %vm4202, %v4184, %v3761
        %v4218 = vsel %vm4202, %v4185, %v3763
        %v4219 = vsel %vm4202, %v4186, %v3765
        %v4220 = vsel %vm4202, %v4187, %v3767
        %v4221 = vsel %vm4202, %v4188, %v3769
        %v4222 = vsel %vm4202, %v4189, %v3771
        %v4223 = vsel %vm4202, %v4190, %v3773
        %v4224 = vsel %vm4202, %v4191, %v3775
        %v4225 = vsel %vm4202, %v4192, %v3777
        %v4226 = vsel %vm4202, %v4193, %v3779
        %v4227 = vsel %vm4202, %v4194, %v3781
        %v4228 = vsel %vm4202, %v4195, %v3783
        %v4229 = vsel %vm4202, %v4196, %v3785
        %v4230 = vsel %vm4202, %v4197, %v3787
        %v4231 = vsel %vm4202, %v4198, %v3789
        %v4232 = vsel %vm4202, %v4199, %v3791
        %v4233 = vsel %vm4202, %v4200, %v3793
        %v4234 = vsel %vm4202, %v4201, %v3795
        %vm4235 = vcmask 523264
        %v4236 = vsel %vm4235, %v4203, %v3909
        %v4237 = vsel %vm4235, %v4204, %v3911
        %v4238 = vsel %vm4235, %v4205, %v3913
        %v4239 = vsel %vm4235, %v4206, %v3915
        %v4240 = vsel %vm4235, %v4207, %v3917
        %v4241 = vsel %vm4235, %v4208, %v3919
        %v4242 = vsel %vm4235, %v4209, %v3921
        %v4243 = vsel %vm4235, %v4210, %v3923
        %v4244 = vsel %vm4235, %v4211, %v3925
        %v4245 = vsel %vm4235, %v4212, %v3927
        %v4246 = vsel %vm4235, %v4213, %v3929
        %v4247 = vsel %vm4235, %v4214, %v3931
        %v4248 = vsel %vm4235, %v4215, %v3933
        %v4249 = vsel %vm4235, %v4216, %v3935
        %v4250 = vsel %vm4235, %v4217, %v3937
        %v4251 = vsel %vm4235, %v4218, %v3939
        %v4252 = vsel %vm4235, %v4219, %v3941
        %v4253 = vsel %vm4235, %v4220, %v3943
        %v4254 = vsel %vm4235, %v4221, %v3945
        %v4255 = vsel %vm4235, %v4222, %v3947
        %v4256 = vsel %vm4235, %v4223, %v3949
        %v4257 = vsel %vm4235, %v4224, %v3951
        %v4258 = vsel %vm4235, %v4225, %v3953
        %v4259 = vsel %vm4235, %v4226, %v3955
        %v4260 = vsel %vm4235, %v4227, %v3957
        %v4261 = vsel %vm4235, %v4228, %v3959
        %v4262 = vsel %vm4235, %v4229, %v3961
        %v4263 = vsel %vm4235, %v4230, %v3963
        %v4264 = vsel %vm4235, %v4231, %v3965
        %v4265 = vsel %vm4235, %v4232, %v3967
        %v4266 = vsel %vm4235, %v4233, %v3969
        %v4267 = vsel %vm4235, %v4234, %v3971
        %v4268 = vld [vmem:[%s1] sm:$0xff]
        %v4269 = vld [vmem:[%s1 + $0x8] sm:$0xff]
        %v4270 = vld [vmem:[%s1 + $0x10] sm:$0xff]
        %v4271 = vld [vmem:[%s1 + $0x18] sm:$0xff]
        %v4272 = vld [vmem:[%s1 + $0x20] sm:$0xff]
        %v4273 = vld [vmem:[%s1 + $0x28] sm:$0xff]
        %v4274 = vld [vmem:[%s1 + $0x30] sm:$0xff]
        %v4275 = vld [vmem:[%s1 + $0x38] sm:$0xff]
        %v4276 = vld [vmem:[%s1 + $0x40] sm:$0xff]
        %v4277 = vld [vmem:[%s2] sm:$0x1]
        %v4279 = vlaneseq
        %v4280 = vshrl.u32 %v4279, 7
        %v4281 = vsub.s32 0, %v4280
        %v4282 = vrot.slane %v4277, %v4281
        %vm4284 = vcmask 588800
        %v4286 = vsel %vm4284, %v4236, 0
        %v4289 = vsel %vm4284, %v4237, 0
        %v4292 = vsel %vm4284, %v4238, 0
        %v4295 = vsel %vm4284, %v4239, 0
        %v4298 = vsel %vm4284, %v4240, 0
        %v4301 = vsel %vm4284, %v4241, 0
        %v4304 = vsel %vm4284, %v4242, 0
        %v4307 = vsel %vm4284, %v4243, 0
        %v4310 = vsel %vm4284, %v4244, 0
        %v4313 = vsel %vm4284, %v4245, 0
        %v4316 = vsel %vm4284, %v4246, 0
        %v4319 = vsel %vm4284, %v4247, 0
        %v4322 = vsel %vm4284, %v4248, 0
        %v4325 = vsel %vm4284, %v4249, 0
        %v4328 = vsel %vm4284, %v4250, 0
        %v4331 = vsel %vm4284, %v4251, 0
        %v4334 = vsel %vm4284, %v4252, 0
        %v4337 = vsel %vm4284, %v4253, 0
        %v4340 = vsel %vm4284, %v4254, 0
        %v4343 = vsel %vm4284, %v4255, 0
        %v4346 = vsel %vm4284, %v4256, 0
        %v4349 = vsel %vm4284, %v4257, 0
        %v4352 = vsel %vm4284, %v4258, 0
        %v4355 = vsel %vm4284, %v4259, 0
        %v4358 = vsel %vm4284, %v4260, 0
        %v4361 = vsel %vm4284, %v4261, 0
        %v4364 = vsel %vm4284, %v4262, 0
        %v4367 = vsel %vm4284, %v4263, 0
        %v4370 = vsel %vm4284, %v4264, 0
        %v4373 = vsel %vm4284, %v4265, 0
        %v4376 = vsel %vm4284, %v4266, 0
        %v4379 = vsel %vm4284, %v4267, 0
        %4381 = vmatprep.subr.mxu0 0.0
        %4382 = vmatpush1.msra.mxu0 0.0
        %4383 = vmatprep.subr.mxu0 0.0
        %4384 = vmatpush1.msra.mxu0 0.0
        %4385 = vmatprep.subr.mxu0 0.0
        %4386 = vmatpush1.msra.mxu0 0.0
        %4387 = vmatprep.subr.mxu0 0.0
        %4388 = vmatpush1.msra.mxu0 0.0
        %4389 = vmatprep.subr.mxu0 0.0
        %4390 = vmatpush1.msra.mxu0 0.0
        %4391 = vmatprep.subr.mxu0 0.0
        %4392 = vmatpush1.msra.mxu0 0.0
        %4393 = vmatprep.subr.mxu0 0.0
        %4394 = vmatpush1.msra.mxu0 0.0
        %4395 = vmatprep.subr.mxu0 0.0
        %4396 = vmatpush1.msra.mxu0 %v4276
        %4397 = vmatprep.subr.mxu0 0.0
        %4398 = vmatpush1.msra.mxu0 %v4275
        %4399 = vmatprep.subr.mxu0 0.0
        %4400 = vmatpush1.msra.mxu0 %v4274
        %4401 = vmatprep.subr.mxu0 0.0
        %4402 = vmatpush1.msra.mxu0 %v4273
        %4403 = vmatprep.subr.mxu0 0.0
        %4404 = vmatpush1.msra.mxu0 %v4272
        %4405 = vmatprep.subr.mxu0 0.0
        %4406 = vmatpush1.msra.mxu0 %v4271
        %4407 = vmatprep.subr.mxu0 0.0
        %4408 = vmatpush1.msra.mxu0 %v4270
        %4409 = vmatprep.subr.mxu0 0.0
        %4410 = vmatpush1.msra.mxu0 %v4269
        %4411 = vmatprep.subr.mxu0 0.0
        %4412 = vmatpush1.msra.mxu0 %v4268
        %4413 = vmatprep.subr.mxu0 0.0
        %4414 = vmatpush2.msra.mxu0 0.0
        %4415 = vmatprep.subr.mxu0 0.0
        %4416 = vmatpush2.msra.mxu0 0.0
        %4417 = vmatprep.subr.mxu0 0.0
        %4418 = vmatpush2.msra.mxu0 0.0
        %4419 = vmatprep.subr.mxu0 0.0
        %4420 = vmatpush2.msra.mxu0 0.0
        %4421 = vmatprep.subr.mxu0 0.0
        %4422 = vmatpush2.msra.mxu0 0.0
        %4423 = vmatprep.subr.mxu0 0.0
        %4424 = vmatpush2.msra.mxu0 0.0
        %4425 = vmatprep.subr.mxu0 0.0
        %4426 = vmatpush2.msra.mxu0 0.0
        %4427 = vmatprep.subr.mxu0 0.0
        %4428 = vmatpush2.msra.mxu0 0.0
        %4429 = vmatprep.subr.mxu0 0.0
        %4430 = vmatpush2.msra.mxu0 0.0
        %4431 = vmatprep.subr.mxu0 0.0
        %4432 = vmatpush2.msra.mxu0 0.0
        %4433 = vmatprep.subr.mxu0 0.0
        %4434 = vmatpush2.msra.mxu0 0.0
        %4435 = vmatprep.subr.mxu0 0.0
        %4436 = vmatpush2.msra.mxu0 0.0
        %4437 = vmatprep.subr.mxu0 0.0
        %4438 = vmatpush2.msra.mxu0 0.0
        %4439 = vmatprep.subr.mxu0 0.0
        %4440 = vmatpush2.msra.mxu0 0.0
        %4441 = vmatprep.subr.mxu0 0.0
        %4442 = vmatpush2.msra.mxu0 0.0
        %4443 = vmatprep.subr.mxu0 0.0
        %4444 = vmatpush2.msra.mxu0 0.0
        %4445 = vmatprep.mubr.f32.mxu0 0.0
        %4446 = vmatmul.mubr.f32.gmra.mxu0 %v4286
        %v4447 = vpop.f32.mrf.mxu0
        %v4448 = vadd.f32 %v4282, %v4447
        %v4449 = vpop.f32.mrf.mxu0
        %4450 = vmatprep.mubr.f32.mxu0 0.0
        %4451 = vmatmul.mubr.f32.gmra.mxu0 %v4289
        %v4452 = vpop.f32.mrf.mxu0
        %v4453 = vadd.f32 %v4282, %v4452
        %v4454 = vpop.f32.mrf.mxu0
        %4455 = vmatprep.mubr.f32.mxu0 0.0
        %4456 = vmatmul.mubr.f32.gmra.mxu0 %v4292
        %v4457 = vpop.f32.mrf.mxu0
        %v4458 = vadd.f32 %v4282, %v4457
        %v4459 = vpop.f32.mrf.mxu0
        %4460 = vmatprep.mubr.f32.mxu0 0.0
        %4461 = vmatmul.mubr.f32.gmra.mxu0 %v4295
        %v4462 = vpop.f32.mrf.mxu0
        %v4463 = vadd.f32 %v4282, %v4462
        %v4464 = vpop.f32.mrf.mxu0
        %4465 = vmatprep.mubr.f32.mxu0 0.0
        %4466 = vmatmul.mubr.f32.gmra.mxu0 %v4298
        %v4467 = vpop.f32.mrf.mxu0
        %v4468 = vadd.f32 %v4282, %v4467
        %v4469 = vpop.f32.mrf.mxu0
        %4470 = vmatprep.mubr.f32.mxu0 0.0
        %4471 = vmatmul.mubr.f32.gmra.mxu0 %v4301
        %v4472 = vpop.f32.mrf.mxu0
        %v4473 = vadd.f32 %v4282, %v4472
        %v4474 = vpop.f32.mrf.mxu0
        %4475 = vmatprep.mubr.f32.mxu0 0.0
        %4476 = vmatmul.mubr.f32.gmra.mxu0 %v4304
        %v4477 = vpop.f32.mrf.mxu0
        %v4478 = vadd.f32 %v4282, %v4477
        %v4479 = vpop.f32.mrf.mxu0
        %4480 = vmatprep.mubr.f32.mxu0 0.0
        %4481 = vmatmul.mubr.f32.gmra.mxu0 %v4307
        %v4482 = vpop.f32.mrf.mxu0
        %v4483 = vadd.f32 %v4282, %v4482
        %v4484 = vpop.f32.mrf.mxu0
        %4485 = vmatprep.mubr.f32.mxu0 0.0
        %4486 = vmatmul.mubr.f32.gmra.mxu0 %v4310
        %v4487 = vpop.f32.mrf.mxu0
        %v4488 = vadd.f32 %v4282, %v4487
        %v4489 = vpop.f32.mrf.mxu0
        %4490 = vmatprep.mubr.f32.mxu0 0.0
        %4491 = vmatmul.mubr.f32.gmra.mxu0 %v4313
        %v4492 = vpop.f32.mrf.mxu0
        %v4493 = vadd.f32 %v4282, %v4492
        %v4494 = vpop.f32.mrf.mxu0
        %4495 = vmatprep.mubr.f32.mxu0 0.0
        %4496 = vmatmul.mubr.f32.gmra.mxu0 %v4316
        %v4497 = vpop.f32.mrf.mxu0
        %v4498 = vadd.f32 %v4282, %v4497
        %v4499 = vpop.f32.mrf.mxu0
        %4500 = vmatprep.mubr.f32.mxu0 0.0
        %4501 = vmatmul.mubr.f32.gmra.mxu0 %v4319
        %v4502 = vpop.f32.mrf.mxu0
        %v4503 = vadd.f32 %v4282, %v4502
        %v4504 = vpop.f32.mrf.mxu0
        %4505 = vmatprep.mubr.f32.mxu0 0.0
        %4506 = vmatmul.mubr.f32.gmra.mxu0 %v4322
        %v4507 = vpop.f32.mrf.mxu0
        %v4508 = vadd.f32 %v4282, %v4507
        %v4509 = vpop.f32.mrf.mxu0
        %4510 = vmatprep.mubr.f32.mxu0 0.0
        %4511 = vmatmul.mubr.f32.gmra.mxu0 %v4325
        %v4512 = vpop.f32.mrf.mxu0
        %v4513 = vadd.f32 %v4282, %v4512
        %v4514 = vpop.f32.mrf.mxu0
        %4515 = vmatprep.mubr.f32.mxu0 0.0
        %4516 = vmatmul.mubr.f32.gmra.mxu0 %v4328
        %v4517 = vpop.f32.mrf.mxu0
        %v4518 = vadd.f32 %v4282, %v4517
        %v4519 = vpop.f32.mrf.mxu0
        %4520 = vmatprep.mubr.f32.mxu0 0.0
        %4521 = vmatmul.mubr.f32.gmra.mxu0 %v4331
        %v4522 = vpop.f32.mrf.mxu0
        %v4523 = vadd.f32 %v4282, %v4522
        %v4524 = vpop.f32.mrf.mxu0
        %4525 = vmatprep.mubr.f32.mxu0 0.0
        %4526 = vmatmul.mubr.f32.gmra.mxu0 %v4334
        %v4527 = vpop.f32.mrf.mxu0
        %v4528 = vadd.f32 %v4282, %v4527
        %v4529 = vpop.f32.mrf.mxu0
        %4530 = vmatprep.mubr.f32.mxu0 0.0
        %4531 = vmatmul.mubr.f32.gmra.mxu0 %v4337
        %v4532 = vpop.f32.mrf.mxu0
        %v4533 = vadd.f32 %v4282, %v4532
        %v4534 = vpop.f32.mrf.mxu0
        %4535 = vmatprep.mubr.f32.mxu0 0.0
        %4536 = vmatmul.mubr.f32.gmra.mxu0 %v4340
        %v4537 = vpop.f32.mrf.mxu0
        %v4538 = vadd.f32 %v4282, %v4537
        %v4539 = vpop.f32.mrf.mxu0
        %4540 = vmatprep.mubr.f32.mxu0 0.0
        %4541 = vmatmul.mubr.f32.gmra.mxu0 %v4343
        %v4542 = vpop.f32.mrf.mxu0
        %v4543 = vadd.f32 %v4282, %v4542
        %v4544 = vpop.f32.mrf.mxu0
        %4545 = vmatprep.mubr.f32.mxu0 0.0
        %4546 = vmatmul.mubr.f32.gmra.mxu0 %v4346
        %v4547 = vpop.f32.mrf.mxu0
        %v4548 = vadd.f32 %v4282, %v4547
        %v4549 = vpop.f32.mrf.mxu0
        %4550 = vmatprep.mubr.f32.mxu0 0.0
        %4551 = vmatmul.mubr.f32.gmra.mxu0 %v4349
        %v4552 = vpop.f32.mrf.mxu0
        %v4553 = vadd.f32 %v4282, %v4552
        %v4554 = vpop.f32.mrf.mxu0
        %4555 = vmatprep.mubr.f32.mxu0 0.0
        %4556 = vmatmul.mubr.f32.gmra.mxu0 %v4352
        %v4557 = vpop.f32.mrf.mxu0
        %v4558 = vadd.f32 %v4282, %v4557
        %v4559 = vpop.f32.mrf.mxu0
        %4560 = vmatprep.mubr.f32.mxu0 0.0
        %4561 = vmatmul.mubr.f32.gmra.mxu0 %v4355
        %v4562 = vpop.f32.mrf.mxu0
        %v4563 = vadd.f32 %v4282, %v4562
        %v4564 = vpop.f32.mrf.mxu0
        %4565 = vmatprep.mubr.f32.mxu0 0.0
        %4566 = vmatmul.mubr.f32.gmra.mxu0 %v4358
        %v4567 = vpop.f32.mrf.mxu0
        %v4568 = vadd.f32 %v4282, %v4567
        %v4569 = vpop.f32.mrf.mxu0
        %4570 = vmatprep.mubr.f32.mxu0 0.0
        %4571 = vmatmul.mubr.f32.gmra.mxu0 %v4361
        %v4572 = vpop.f32.mrf.mxu0
        %v4573 = vadd.f32 %v4282, %v4572
        %v4574 = vpop.f32.mrf.mxu0
        %4575 = vmatprep.mubr.f32.mxu0 0.0
        %4576 = vmatmul.mubr.f32.gmra.mxu0 %v4364
        %v4577 = vpop.f32.mrf.mxu0
        %v4578 = vadd.f32 %v4282, %v4577
        %v4579 = vpop.f32.mrf.mxu0
        %4580 = vmatprep.mubr.f32.mxu0 0.0
        %4581 = vmatmul.mubr.f32.gmra.mxu0 %v4367
        %v4582 = vpop.f32.mrf.mxu0
        %v4583 = vadd.f32 %v4282, %v4582
        %v4584 = vpop.f32.mrf.mxu0
        %4585 = vmatprep.mubr.f32.mxu0 0.0
        %4586 = vmatmul.mubr.f32.gmra.mxu0 %v4370
        %v4587 = vpop.f32.mrf.mxu0
        %v4588 = vadd.f32 %v4282, %v4587
        %v4589 = vpop.f32.mrf.mxu0
        %4590 = vmatprep.mubr.f32.mxu0 0.0
        %4591 = vmatmul.mubr.f32.gmra.mxu0 %v4373
        %v4592 = vpop.f32.mrf.mxu0
        %v4593 = vadd.f32 %v4282, %v4592
        %v4594 = vpop.f32.mrf.mxu0
        %4595 = vmatprep.mubr.f32.mxu0 0.0
        %4596 = vmatmul.mubr.f32.gmra.mxu0 %v4376
        %v4597 = vpop.f32.mrf.mxu0
        %v4598 = vadd.f32 %v4282, %v4597
        %v4599 = vpop.f32.mrf.mxu0
        %4600 = vmatprep.mubr.f32.mxu0 0.0
        %4601 = vmatmul.mubr.f32.gmra.mxu0 %v4379
        %v4602 = vpop.f32.mrf.mxu0
        %v4603 = vadd.f32 %v4282, %v4602
        %v4604 = vpop.f32.mrf.mxu0
        %4605 = vdwg.mxu0
        %4606 = vst [vmem:[%s177] sm:$0xff] %v4448
        %4607 = vst [vmem:[%s177 + $0x8] sm:$0xff] %v4453
        %4608 = vst [vmem:[%s177 + $0x10] sm:$0xff] %v4458
        %4609 = vst [vmem:[%s177 + $0x18] sm:$0xff] %v4463
        %4610 = vst [vmem:[%s177 + $0x20] sm:$0xff] %v4468
        %4611 = vst [vmem:[%s177 + $0x28] sm:$0xff] %v4473
        %4612 = vst [vmem:[%s177 + $0x30] sm:$0xff] %v4478
        %4613 = vst [vmem:[%s177 + $0x38] sm:$0xff] %v4483
        %4614 = vst [vmem:[%s177 + $0x40] sm:$0xff] %v4488
        %4615 = vst [vmem:[%s177 + $0x48] sm:$0xff] %v4493
        %4616 = vst [vmem:[%s177 + $0x50] sm:$0xff] %v4498
        %4617 = vst [vmem:[%s177 + $0x58] sm:$0xff] %v4503
        %4618 = vst [vmem:[%s177 + $0x60] sm:$0xff] %v4508
        %4619 = vst [vmem:[%s177 + $0x68] sm:$0xff] %v4513
        %4620 = vst [vmem:[%s177 + $0x70] sm:$0xff] %v4518
        %4621 = vst [vmem:[%s177 + $0x78] sm:$0xff] %v4523
        %4622 = vst [vmem:[%s177 + $0x80] sm:$0xff] %v4528
        %4623 = vst [vmem:[%s177 + $0x88] sm:$0xff] %v4533
        %4624 = vst [vmem:[%s177 + $0x90] sm:$0xff] %v4538
        %4625 = vst [vmem:[%s177 + $0x98] sm:$0xff] %v4543
        %4626 = vst [vmem:[%s177 + $0xa0] sm:$0xff] %v4548
        %4627 = vst [vmem:[%s177 + $0xa8] sm:$0xff] %v4553
        %4628 = vst [vmem:[%s177 + $0xb0] sm:$0xff] %v4558
        %4629 = vst [vmem:[%s177 + $0xb8] sm:$0xff] %v4563
        %4630 = vst [vmem:[%s177 + $0xc0] sm:$0xff] %v4568
        %4631 = vst [vmem:[%s177 + $0xc8] sm:$0xff] %v4573
        %4632 = vst [vmem:[%s177 + $0xd0] sm:$0xff] %v4578
        %4633 = vst [vmem:[%s177 + $0xd8] sm:$0xff] %v4583
        %4634 = vst [vmem:[%s177 + $0xe0] sm:$0xff] %v4588
        %4635 = vst [vmem:[%s177 + $0xe8] sm:$0xff] %v4593
        %4636 = vst [vmem:[%s177 + $0xf0] sm:$0xff] %v4598
        %4637 = vst [vmem:[%s177 + $0xf8] sm:$0xff] %v4603
        %s4638 = sand.u32 %s107, 1
        %s4639 = scalar_lea.sflag [#allocation3], %s4638
        %s4640 = sand.u32 %s107, 1
        %s4641 = smul.addr %s4640, 256
        %s4642 = scalar_lea.vmem [#allocation2], %s4641
        // Predicated region
        $region33: #{tpu_custom_call.1} parent=31 // pred_check
          %p4643 = pneg %p117
        $region34: #{tpu_custom_call.1} parent=31 // pred_check_branch
          %4645 = sbr.rel (%p4643) target = $region36
        $region35: #{tpu_custom_call.1} parent=31 // pred_region
          %s4646 = smul.u32 32, %s22
          %s4648 = ssub.s32 4096, 4096
          %4649 = vsyncadd %s4639, %s4648
          %s4650 = smul.addr %s21, 32
          %s4651 = sadd.s32 %s4646, %s4650
          %s4652 = smul.addr %s4651, 128
          %s4653 = scalar_lea.hbm %s3, %s4652
          %s4654 = sshll.u32 %s4642, 4
          %s4655 = int_to_ptr.vmem [resolvable:$true] %s4654
          %4660 = dma.vmem_to_hbm [thread:$0]  %s4655, 4096, %s4653, %s4639, 128, 128, 8
        $region36: #{tpu_custom_call.1} parent=31 // pred_fallthru
          _
      $region32: #{tpu_custom_call.1} parent=5 // pred_fallthru
        _
      %p4661 = scmp.le.s32.totalorder 2, %s12
      // Predicated region
      $region37: #{tpu_custom_call.1} parent=5 // pred_check
        %p4662 = pneg %p4661
      $region38: #{tpu_custom_call.1} parent=5 // pred_check_branch
        %4664 = sbr.rel (%p4662) target = $region40
      $region39: #{tpu_custom_call.1} parent=5 // pred_region
        %s4665 = ssub.s32 %s12, 2
        // Predicated region
        $region41: #{tpu_custom_call.1} parent=39 // pred_check
          %p4666 = pneg %p123
        $region42: #{tpu_custom_call.1} parent=39 // pred_check_branch
          %4668 = sbr.rel (%p4666) target = $region44
        $region43: #{tpu_custom_call.1} parent=39 // pred_region
          %s4669 = sand.u32 %s108, 1
          %s4670 = scalar_lea.sflag [#allocation3], %s4669
          %s4671 = sand.u32 %s108, 1
          %s4672 = smul.addr %s4671, 256
          %s4673 = scalar_lea.vmem [#allocation2], %s4672
          %4674 = dma.done %s4670, 4096
        $region44: #{tpu_custom_call.1} parent=39 // pred_fallthru
          _
      $region40: #{tpu_custom_call.1} parent=5 // pred_fallthru
        _
    $region6: #{tpu_custom_call.1} parent=1 // loop_footer
      %s16 = sadd.s32 1, %s12
    $region7: #{tpu_custom_call.1} parent=1 // loop_footer_branch
      %11 = sbr.rel target = $region3
    $region8: #{tpu_custom_call.1} parent=1 // loop_exit
      _
    %4675 = vsyncpa [#allocation3], 1
    %s4676 = scalar_lea.sflag [#allocation3], 1
    %4677 = vsyncpa %s4676, 1

</llo_original>
